<compile_context>
chip_gen: v5e
topology: v5e:2x2
jax: 0.10.0
libtpu: 0.0.40
codegen_flags: <defaults>
</compile_context>

<pallas_src>
import jax
import jax.numpy as jnp
from jax.experimental import pallas as pl
from jax.experimental.pallas import tpu as pltpu

# ----- model hyperparameters (from DilatedCNN.py) -----
HIDDEN_SIZE = 3
KERNEL_SIZE = 2
N_LAYERS = 9
NUM_INPUTS = 4
OUTPUT_STEPS = 48

SELU_ALPHA = 1.6732632423543772848170429916717
SELU_SCALE = 1.0507009873554804934193349852946
SELU_ALPHA_SCALE = SELU_ALPHA * SELU_SCALE

SUB_ROWS = 16  # rows per in-kernel sub-slab: 2 vregs per f32 (SUB_ROWS, 128) tile

# ----- packed-parameter layout (one flat f32 vector, resident in SMEM) -----
_OFF_W1A = 0                                                    # conv1 tap @ t-1      (H,)
_OFF_W1B = _OFF_W1A + HIDDEN_SIZE                               # conv1 tap @ t        (H,)
_OFF_B1 = _OFF_W1B + HIDDEN_SIZE                                # conv1 bias           (H,)
_OFF_CSKIP = _OFF_B1 + HIDDEN_SIZE                              # w2[o,4i]*ws          (H*NI,)
_OFF_H0B = _OFF_CSKIP + HIDDEN_SIZE * NUM_INPUTS                # b2 + bs*sum_i w2     (H,)
_OFF_W2L = _OFF_H0B + HIDDEN_SIZE                               # SCALE*w2 "layer" col (H*NI*H,)
_OFF_WG0 = _OFF_W2L + HIDDEN_SIZE * NUM_INPUTS * HIDDEN_SIZE    # block tap @ t-d      ((NL-1)*H*H,)
_OFF_WG1 = _OFF_WG0 + (N_LAYERS - 1) * HIDDEN_SIZE * HIDDEN_SIZE
_OFF_BG = _OFF_WG1 + (N_LAYERS - 1) * HIDDEN_SIZE * HIDDEN_SIZE
_OFF_WD = _OFF_BG + (N_LAYERS - 1) * HIDDEN_SIZE
_OFF_BD = _OFF_WD + HIDDEN_SIZE
_N_PARAMS = _OFF_BD + 1        # 232
_PACKED_SIZE = 256             # pad to a power-of-two word count (SMEM friendly)


def _selu(x):
    # SELU with the outer scale pushed into both select branches; exp(min(x,0))
    # keeps the unselected branch finite.
    neg = SELU_ALPHA_SCALE * (jnp.exp(jnp.minimum(x, 0.0)) - 1.0)
    return jnp.where(x > 0.0, SELU_SCALE * x, neg)


def _selu_unscaled(x):
    # SELU / SELU_SCALE — the missing scale is folded into the W2L weights at pack time.
    neg = SELU_ALPHA * (jnp.exp(jnp.minimum(x, 0.0)) - 1.0)
    return jnp.where(x > 0.0, x, neg)


def _round_up(n, m):
    return ((n + m - 1) // m) * m


# --------------------------------------------------------------------------
# Pallas kernel: full DilatedConvNet forward, BB batch rows per grid step,
# processed as an in-kernel loop over 16-row sub-slabs.
# --------------------------------------------------------------------------
def dilated_convnet_kernel(p_ref, x_ref, o_ref):
    """p_ref: f32[_PACKED_SIZE] in SMEM; x_ref: (NUM_INPUTS, BB, L); o_ref: (BB, L)."""
    NI, BB, L = x_ref.shape
    H = HIDDEN_SIZE
    n_sub = BB // SUB_ROWS

    def sub_slab(s, carry):
        r0 = pl.multiple_of(s * SUB_ROWS, SUB_ROWS)

        # Lane iota + causal masks: built once per sub-slab and reused.
        lane = jax.lax.broadcasted_iota(jnp.int32, (SUB_ROWS, L), 1)
        mask1 = lane < 1

        def shift_right(v, d, mask):
            # causal shift: out[:, t] = v[:, t-d] for t >= d, else 0 (the causal pad).
            return jnp.where(mask, 0.0, pltpu.roll(v, shift=d, axis=1))

        # ---- stage 1: per-input conv1 (k=2, d=1) + SELU, fused with the 1x1 conv2.
        #      The 1x1 skip conv and SELU_SCALE are folded into CSKIP/H0B/W2L at
        #      pack time; hcur[o] accumulates conv2 channel o as a (SUB_ROWS, L) slab.
        hcur = [None] * H
        for i in range(NI):
            xi = x_ref[i, pl.ds(r0, SUB_ROWS), :]   # batch on sublanes, time on lanes
            xprev = shift_right(xi, 1, mask1)
            for o in range(H):
                t = p_ref[_OFF_CSKIP + o * NI + i] * xi
                hcur[o] = t if hcur[o] is None else hcur[o] + t
            for h in range(H):
                lay = _selu_unscaled(p_ref[_OFF_W1A + h] * xprev
                                     + p_ref[_OFF_W1B + h] * xi
                                     + p_ref[_OFF_B1 + h])
                for o in range(H):
                    hcur[o] = hcur[o] + p_ref[_OFF_W2L + (o * NI + i) * H + h] * lay
        hcur = [hcur[o] + p_ref[_OFF_H0B + o] for o in range(H)]

        # ---- residual dilated blocks (k=2, dilation 2^j, j = 1 .. N_LAYERS-1) ----
        for j in range(N_LAYERS - 1):
            d = 2 ** (j + 1)
            wg0 = _OFF_WG0 + j * H * H
            wg1 = _OFF_WG1 + j * H * H
            if d < L:
                maskd = lane < d                     # one mask per dilation, reused per channel
                hprev = [shift_right(hc, d, maskd) for hc in hcur]
            else:
                # the "previous" tap lies entirely in the causal zero padding, so
                # only the current-tap weights contribute (matches the reference conv).
                hprev = None
            new_h = []
            for o in range(H):
                y = p_ref[wg1 + o * H] * hcur[0]
                for c in range(1, H):
                    y = y + p_ref[wg1 + o * H + c] * hcur[c]
                if hprev is not None:
                    for c in range(H):
                        y = y + p_ref[wg0 + o * H + c] * hprev[c]
                y = y + p_ref[_OFF_BG + j * H + o]
                new_h.append(hcur[o] + _selu(y))
            hcur = new_h

        # ---- dense 1x1 conv down to 1 channel; lane-dense store of the full length ----
        out = p_ref[_OFF_WD] * hcur[0]
        for c in range(1, H):
            out = out + p_ref[_OFF_WD + c] * hcur[c]
        o_ref[pl.ds(r0, SUB_ROWS), :] = out + p_ref[_OFF_BD]
        return carry

    jax.lax.fori_loop(0, n_sub, sub_slab, 0)


# --------------------------------------------------------------------------
# Wrappers
# --------------------------------------------------------------------------
def dilated_convnet_forward_cbl(x_cbl, packed_params, *, batch_block=None):
    """Core entry point. x_cbl: channel-major (NUM_INPUTS, B, L) float32."""
    x = jnp.asarray(x_cbl, jnp.float32)
    C, B, L = x.shape
    assert C == NUM_INPUTS and L >= OUTPUT_STEPS

    if batch_block is None:
        b_sub = _round_up(B, SUB_ROWS)
        if b_sub >= 2 * SUB_ROWS:
            # >= 2 "parallel" grid steps so both v7x TensorCores get work; cap the
            # block at 256 rows so the double-buffered input block stays small and
            # the grid-step overhead stays amortised over many 16-row sub-slabs.
            batch_block = min(256, _round_up((b_sub + 1) // 2, SUB_ROWS))
        else:
            batch_block = SUB_ROWS
    BB = _round_up(batch_block, SUB_ROWS)
    Bp = _round_up(B, BB)
    if Bp != B:
        x = jnp.pad(x, ((0, 0), (0, Bp - B), (0, 0)))
    packed = jnp.asarray(packed_params, jnp.float32)

    out_full = pl.pallas_call(
        dilated_convnet_kernel,
        out_shape=jax.ShapeDtypeStruct((Bp, L), jnp.float32),
        grid_spec=pltpu.PrefetchScalarGridSpec(
            num_scalar_prefetch=0,
            grid=(Bp // BB,),
            in_specs=[
                # all 232 weight/bias scalars in one SMEM-resident vector
                pl.BlockSpec(memory_space=pltpu.MemorySpace.SMEM),
                pl.BlockSpec((NUM_INPUTS, BB, L), lambda b: (0, b, 0)),
            ],
            out_specs=pl.BlockSpec((BB, L), lambda b: (b, 0)),
        ),
        compiler_params=pltpu.CompilerParams(dimension_semantics=("parallel",)),
    )(packed, x)

    # Slice the last OUTPUT_STEPS here so the in-kernel store stays lane-dense.
    return out_full[:B, L - OUTPUT_STEPS:].reshape(B, 1, OUTPUT_STEPS)


def dilated_convnet_forward(x, packed_params, *, batch_block=None):
    """PyTorch-layout entry point: x is (B, NUM_INPUTS, L).

    The transpose below is a pure-overhead extra HBM round trip of the input;
    callers that can produce channel-major data should call
    dilated_convnet_forward_cbl directly (or fuse the transpose upstream).
    """
    x = jnp.transpose(jnp.asarray(x, jnp.float32), (1, 0, 2))
    return dilated_convnet_forward_cbl(x, packed_params, batch_block=batch_block)


# --------------------------------------------------------------------------
# Deterministic parameter init (same shapes / init std as the PyTorch module)
# --------------------------------------------------------------------------
def init_params(key):
    keys = iter(jax.random.split(key, 32))

    def w(shape, n):  # normal_(0, sqrt(2/n)) with n = kernel_size * out_channels
        return jax.random.normal(next(keys), shape, jnp.float32) * jnp.sqrt(2.0 / n)

    def b(shape):
        return jax.random.normal(next(keys), shape, jnp.float32) * 0.1

    p = {}
    p["w1"] = w((HIDDEN_SIZE, 1, KERNEL_SIZE), KERNEL_SIZE * HIDDEN_SIZE)
    p["b1"] = b((HIDDEN_SIZE,))
    p["ws"] = w((1, 1, 1), 1)
    p["bs"] = b((1,))
    p["w2"] = w((HIDDEN_SIZE, (HIDDEN_SIZE + 1) * NUM_INPUTS, 1), 1 * HIDDEN_SIZE)
    p["b2"] = b((HIDDEN_SIZE,))
    p["wg"] = [w((HIDDEN_SIZE, HIDDEN_SIZE, KERNEL_SIZE), KERNEL_SIZE * HIDDEN_SIZE)
               for _ in range(N_LAYERS - 1)]
    p["bg"] = [b((HIDDEN_SIZE,)) for _ in range(N_LAYERS - 1)]
    p["wd"] = w((1, HIDDEN_SIZE, 1), 1 * 1)
    p["bd"] = b((1,))
    return p


def pack_kernel_params(p):
    """Flatten all weights into one f32[_PACKED_SIZE] vector (layout above),
    folding the 1x1 skip conv and SELU_SCALE into conv2's weights/bias."""
    ws = p["ws"][0, 0, 0]
    bs = p["bs"][0]
    w2 = p["w2"][:, :, 0].reshape(HIDDEN_SIZE, NUM_INPUTS, HIDDEN_SIZE + 1)
    w2_skip = w2[:, :, 0]                      # (H, NI):  column hitting skip_i
    w2_layer = w2[:, :, 1:]                    # (H, NI, H): columns hitting layer_{i,h}
    wg = jnp.stack(p["wg"])                    # (NL-1, H, H, K)
    bg = jnp.stack(p["bg"])                    # (NL-1, H)

    pieces = [
        p["w1"][:, 0, 0],                          # W1A: conv1 tap at t-1
        p["w1"][:, 0, 1],                          # W1B: conv1 tap at t
        p["b1"],
        w2_skip * ws,                              # CSKIP[o,i] = w2[o,4i]*ws
        p["b2"] + bs * jnp.sum(w2_skip, axis=1),   # H0B[o] = b2[o] + bs*sum_i w2[o,4i]
        w2_layer * SELU_SCALE,                     # W2L[o,i,h] with SELU_SCALE folded in
        wg[..., 0],                                # WG0[j,o,c]: tap at t-d
        wg[..., 1],                                # WG1[j,o,c]: tap at t
        bg,
        p["wd"][0, :, 0],
        p["bd"],
    ]
    flat = jnp.concatenate([jnp.asarray(q, jnp.float32).reshape(-1) for q in pieces])
    assert flat.shape[0] == _N_PARAMS
    return jnp.pad(flat, (0, _PACKED_SIZE - _N_PARAMS))


# --------------------------------------------------------------------------
# Pure-JAX reference (lax.conv_general_dilated) for correctness checking
# --------------------------------------------------------------------------
def _conv1d_ref(x, w, b, dilation, pad_left):
    y = jax.lax.conv_general_dilated(
        x, w, window_strides=(1,), padding=[(pad_left, 0)],
        rhs_dilation=(dilation,), dimension_numbers=("NCH", "OIH", "NCH"))
    return y + b.reshape(1, -1, 1)


def reference_forward(x, p):
    pads = (KERNEL_SIZE - 1) * 1
    feats = []
    for i in range(NUM_INPUTS):
        xi = x[:, i:i + 1, :]
        layer = _selu(_conv1d_ref(xi, p["w1"], p["b1"], 1, pads))
        skip = _conv1d_ref(xi, p["ws"], p["bs"], 1, 0)
        feats.append(skip)
        feats.append(layer)
    out = jnp.concatenate(feats, axis=1)
    out = _conv1d_ref(out, p["w2"], p["b2"], 1, 0)
    for j in range(N_LAYERS - 1):
        d = 2 ** (j + 1)
        y = _selu(_conv1d_ref(out, p["wg"][j], p["bg"][j], d, (KERNEL_SIZE - 1) * d))
        out = out + y
    net = _conv1d_ref(out, p["wd"], p["bd"], 1, 0)
    return net[:, :, -OUTPUT_STEPS:]


if __name__ == "__main__":
    key = jax.random.PRNGKey(0)
    kp, kx = jax.random.split(key)
    params = init_params(kp)
    packed = pack_kernel_params(params)

    # B=40 exercises the batch-padding path (40 -> 64), a 2-step "parallel" grid
    # (both v7x TensorCores busy) and a 2-trip sub-slab fori_loop per grid step.
    B, L = 40, 128
    x = jax.random.normal(kx, (B, NUM_INPUTS, L), jnp.float32)

    out = dilated_convnet_forward(x, packed)
    out = jax.block_until_ready(out)
    assert out.shape == (B, 1, OUTPUT_STEPS)

    ref = reference_forward(x, params)
    if not bool(jnp.allclose(out, ref, rtol=1e-3, atol=1e-3)):
        raise AssertionError("Pallas kernel output mismatch vs JAX reference")

    print("KERNEL_OK")
</pallas_src>

<mosaic_0001>
module attributes {stable_mosaic.version = 11 : i64} {
  func.func @dilated_convnet_kernel(%arg0: i32, %arg1: memref<256xf32, #tpu.memory_space<smem>>, %arg2: memref<4x32x128xf32, #tpu.memory_space<vmem>>, %arg3: memref<32x128xf32, #tpu.memory_space<vmem>>) attributes {dimension_semantics = [#tpu.dimension_semantics<parallel>], iteration_bounds = array<i64: 2>, scalar_prefetch = 0 : i64, scratch_operands = 0 : i64, tpu.core_type = #tpu.core_type<tc>, window_params = [{transform_indices = @transform_0, window_bounds = array<i64: 256>}, {transform_indices = @transform_1, window_bounds = array<i64: 4, 32, 128>}, {transform_indices = @transform_2, window_bounds = array<i64: 32, 128>}]} {
    %c0_i32 = arith.constant 0 : i32
    %c2_i32 = arith.constant 2 : i32
    %0 = arith.addi %c0_i32, %c2_i32 : i32
    %c1_i32 = arith.constant 1 : i32
    scf.for %arg4 = %c0_i32 to %0 step %c1_i32  : i32 {
      %c16_i32 = arith.constant 16 : i32
      %1 = arith.muli %arg4, %c16_i32 : i32
      %2 = tpu.assume_multiple %1, 16 : i32
      %3 = tpu.iota {dimensions = array<i32: 1>} : vector<16x128xi32>
      %c1_i32_1 = arith.constant 1 : i32
      %4 = vector.broadcast %c1_i32_1 : i32 to vector<16x128xi32>
      %5 = arith.cmpi slt, %3, %4 : vector<16x128xi32>
      %c0 = arith.constant 0 : index
      %6 = arith.index_cast %2 : i32 to index
      %c0_2 = arith.constant 0 : index
      %7 = vector.load %arg2[%c0, %6, %c0_2] : memref<4x32x128xf32, #tpu.memory_space<vmem>>, vector<1x16x128xf32>
      %8 = vector.shape_cast %7 : vector<1x16x128xf32> to vector<16x128xf32>
      %c1_i32_3 = arith.constant 1 : i32
      %9 = tpu.dynamic_rotate %8 by %c1_i32_3 dim 1 : vector<16x128xf32>, i32 -> vector<16x128xf32>
      %cst = arith.constant 0.000000e+00 : f32
      %10 = vector.broadcast %cst : f32 to vector<16x128xf32>
      %11 = arith.select %5, %10, %9 : vector<16x128xi1>, vector<16x128xf32>
      %c9 = arith.constant 9 : index
      %12 = memref.load %arg1[%c9] : memref<256xf32, #tpu.memory_space<smem>>
      %13 = vector.broadcast %12 : f32 to vector<16x128xf32>
      %14 = arith.mulf %13, %8 : vector<16x128xf32>
      %c13 = arith.constant 13 : index
      %15 = memref.load %arg1[%c13] : memref<256xf32, #tpu.memory_space<smem>>
      %16 = vector.broadcast %15 : f32 to vector<16x128xf32>
      %17 = arith.mulf %16, %8 : vector<16x128xf32>
      %c17 = arith.constant 17 : index
      %18 = memref.load %arg1[%c17] : memref<256xf32, #tpu.memory_space<smem>>
      %19 = vector.broadcast %18 : f32 to vector<16x128xf32>
      %20 = arith.mulf %19, %8 : vector<16x128xf32>
      %c0_4 = arith.constant 0 : index
      %21 = memref.load %arg1[%c0_4] : memref<256xf32, #tpu.memory_space<smem>>
      %22 = vector.broadcast %21 : f32 to vector<16x128xf32>
      %23 = arith.mulf %22, %11 : vector<16x128xf32>
      %c3 = arith.constant 3 : index
      %24 = memref.load %arg1[%c3] : memref<256xf32, #tpu.memory_space<smem>>
      %25 = vector.broadcast %24 : f32 to vector<16x128xf32>
      %26 = arith.mulf %25, %8 : vector<16x128xf32>
      %27 = arith.addf %23, %26 : vector<16x128xf32>
      %c6 = arith.constant 6 : index
      %28 = memref.load %arg1[%c6] : memref<256xf32, #tpu.memory_space<smem>>
      %29 = vector.broadcast %28 : f32 to vector<16x128xf32>
      %30 = arith.addf %27, %29 : vector<16x128xf32>
      %cst_5 = arith.constant 0.000000e+00 : f32
      %31 = vector.broadcast %cst_5 : f32 to vector<16x128xf32>
      %32 = arith.minimumf %30, %31 : vector<16x128xf32>
      %33 = math.exp %32 : vector<16x128xf32>
      %cst_6 = arith.constant 1.000000e+00 : f32
      %34 = vector.broadcast %cst_6 : f32 to vector<16x128xf32>
      %35 = arith.subf %33, %34 : vector<16x128xf32>
      %cst_7 = arith.constant 1.67326319 : f32
      %36 = vector.broadcast %cst_7 : f32 to vector<16x128xf32>
      %37 = arith.mulf %36, %35 : vector<16x128xf32>
      %cst_8 = arith.constant 0.000000e+00 : f32
      %38 = vector.broadcast %cst_8 : f32 to vector<16x128xf32>
      %39 = arith.cmpf ogt, %30, %38 : vector<16x128xf32>
      %40 = arith.select %39, %30, %37 : vector<16x128xi1>, vector<16x128xf32>
      %c24 = arith.constant 24 : index
      %41 = memref.load %arg1[%c24] : memref<256xf32, #tpu.memory_space<smem>>
      %42 = vector.broadcast %41 : f32 to vector<16x128xf32>
      %43 = arith.mulf %42, %40 : vector<16x128xf32>
      %44 = arith.addf %14, %43 : vector<16x128xf32>
      %c36 = arith.constant 36 : index
      %45 = memref.load %arg1[%c36] : memref<256xf32, #tpu.memory_space<smem>>
      %46 = vector.broadcast %45 : f32 to vector<16x128xf32>
      %47 = arith.mulf %46, %40 : vector<16x128xf32>
      %48 = arith.addf %17, %47 : vector<16x128xf32>
      %c48 = arith.constant 48 : index
      %49 = memref.load %arg1[%c48] : memref<256xf32, #tpu.memory_space<smem>>
      %50 = vector.broadcast %49 : f32 to vector<16x128xf32>
      %51 = arith.mulf %50, %40 : vector<16x128xf32>
      %52 = arith.addf %20, %51 : vector<16x128xf32>
      %c1 = arith.constant 1 : index
      %53 = memref.load %arg1[%c1] : memref<256xf32, #tpu.memory_space<smem>>
      %54 = vector.broadcast %53 : f32 to vector<16x128xf32>
      %55 = arith.mulf %54, %11 : vector<16x128xf32>
      %c4 = arith.constant 4 : index
      %56 = memref.load %arg1[%c4] : memref<256xf32, #tpu.memory_space<smem>>
      %57 = vector.broadcast %56 : f32 to vector<16x128xf32>
      %58 = arith.mulf %57, %8 : vector<16x128xf32>
      %59 = arith.addf %55, %58 : vector<16x128xf32>
      %c7 = arith.constant 7 : index
      %60 = memref.load %arg1[%c7] : memref<256xf32, #tpu.memory_space<smem>>
      %61 = vector.broadcast %60 : f32 to vector<16x128xf32>
      %62 = arith.addf %59, %61 : vector<16x128xf32>
      %cst_9 = arith.constant 0.000000e+00 : f32
      %63 = vector.broadcast %cst_9 : f32 to vector<16x128xf32>
      %64 = arith.minimumf %62, %63 : vector<16x128xf32>
      %65 = math.exp %64 : vector<16x128xf32>
      %cst_10 = arith.constant 1.000000e+00 : f32
      %66 = vector.broadcast %cst_10 : f32 to vector<16x128xf32>
      %67 = arith.subf %65, %66 : vector<16x128xf32>
      %cst_11 = arith.constant 1.67326319 : f32
      %68 = vector.broadcast %cst_11 : f32 to vector<16x128xf32>
      %69 = arith.mulf %68, %67 : vector<16x128xf32>
      %cst_12 = arith.constant 0.000000e+00 : f32
      %70 = vector.broadcast %cst_12 : f32 to vector<16x128xf32>
      %71 = arith.cmpf ogt, %62, %70 : vector<16x128xf32>
      %72 = arith.select %71, %62, %69 : vector<16x128xi1>, vector<16x128xf32>
      %c25 = arith.constant 25 : index
      %73 = memref.load %arg1[%c25] : memref<256xf32, #tpu.memory_space<smem>>
      %74 = vector.broadcast %73 : f32 to vector<16x128xf32>
      %75 = arith.mulf %74, %72 : vector<16x128xf32>
      %76 = arith.addf %44, %75 : vector<16x128xf32>
      %c37 = arith.constant 37 : index
      %77 = memref.load %arg1[%c37] : memref<256xf32, #tpu.memory_space<smem>>
      %78 = vector.broadcast %77 : f32 to vector<16x128xf32>
      %79 = arith.mulf %78, %72 : vector<16x128xf32>
      %80 = arith.addf %48, %79 : vector<16x128xf32>
      %c49 = arith.constant 49 : index
      %81 = memref.load %arg1[%c49] : memref<256xf32, #tpu.memory_space<smem>>
      %82 = vector.broadcast %81 : f32 to vector<16x128xf32>
      %83 = arith.mulf %82, %72 : vector<16x128xf32>
      %84 = arith.addf %52, %83 : vector<16x128xf32>
      %c2 = arith.constant 2 : index
      %85 = memref.load %arg1[%c2] : memref<256xf32, #tpu.memory_space<smem>>
      %86 = vector.broadcast %85 : f32 to vector<16x128xf32>
      %87 = arith.mulf %86, %11 : vector<16x128xf32>
      %c5 = arith.constant 5 : index
      %88 = memref.load %arg1[%c5] : memref<256xf32, #tpu.memory_space<smem>>
      %89 = vector.broadcast %88 : f32 to vector<16x128xf32>
      %90 = arith.mulf %89, %8 : vector<16x128xf32>
      %91 = arith.addf %87, %90 : vector<16x128xf32>
      %c8 = arith.constant 8 : index
      %92 = memref.load %arg1[%c8] : memref<256xf32, #tpu.memory_space<smem>>
      %93 = vector.broadcast %92 : f32 to vector<16x128xf32>
      %94 = arith.addf %91, %93 : vector<16x128xf32>
      %cst_13 = arith.constant 0.000000e+00 : f32
      %95 = vector.broadcast %cst_13 : f32 to vector<16x128xf32>
      %96 = arith.minimumf %94, %95 : vector<16x128xf32>
      %97 = math.exp %96 : vector<16x128xf32>
      %cst_14 = arith.constant 1.000000e+00 : f32
      %98 = vector.broadcast %cst_14 : f32 to vector<16x128xf32>
      %99 = arith.subf %97, %98 : vector<16x128xf32>
      %cst_15 = arith.constant 1.67326319 : f32
      %100 = vector.broadcast %cst_15 : f32 to vector<16x128xf32>
      %101 = arith.mulf %100, %99 : vector<16x128xf32>
      %cst_16 = arith.constant 0.000000e+00 : f32
      %102 = vector.broadcast %cst_16 : f32 to vector<16x128xf32>
      %103 = arith.cmpf ogt, %94, %102 : vector<16x128xf32>
      %104 = arith.select %103, %94, %101 : vector<16x128xi1>, vector<16x128xf32>
      %c26 = arith.constant 26 : index
      %105 = memref.load %arg1[%c26] : memref<256xf32, #tpu.memory_space<smem>>
      %106 = vector.broadcast %105 : f32 to vector<16x128xf32>
      %107 = arith.mulf %106, %104 : vector<16x128xf32>
      %108 = arith.addf %76, %107 : vector<16x128xf32>
      %c38 = arith.constant 38 : index
      %109 = memref.load %arg1[%c38] : memref<256xf32, #tpu.memory_space<smem>>
      %110 = vector.broadcast %109 : f32 to vector<16x128xf32>
      %111 = arith.mulf %110, %104 : vector<16x128xf32>
      %112 = arith.addf %80, %111 : vector<16x128xf32>
      %c50 = arith.constant 50 : index
      %113 = memref.load %arg1[%c50] : memref<256xf32, #tpu.memory_space<smem>>
      %114 = vector.broadcast %113 : f32 to vector<16x128xf32>
      %115 = arith.mulf %114, %104 : vector<16x128xf32>
      %116 = arith.addf %84, %115 : vector<16x128xf32>
      %c1_17 = arith.constant 1 : index
      %117 = arith.index_cast %2 : i32 to index
      %c0_18 = arith.constant 0 : index
      %118 = vector.load %arg2[%c1_17, %117, %c0_18] : memref<4x32x128xf32, #tpu.memory_space<vmem>>, vector<1x16x128xf32>
      %119 = vector.shape_cast %118 : vector<1x16x128xf32> to vector<16x128xf32>
      %c1_i32_19 = arith.constant 1 : i32
      %120 = tpu.dynamic_rotate %119 by %c1_i32_19 dim 1 : vector<16x128xf32>, i32 -> vector<16x128xf32>
      %cst_20 = arith.constant 0.000000e+00 : f32
      %121 = vector.broadcast %cst_20 : f32 to vector<16x128xf32>
      %122 = arith.select %5, %121, %120 : vector<16x128xi1>, vector<16x128xf32>
      %c10 = arith.constant 10 : index
      %123 = memref.load %arg1[%c10] : memref<256xf32, #tpu.memory_space<smem>>
      %124 = vector.broadcast %123 : f32 to vector<16x128xf32>
      %125 = arith.mulf %124, %119 : vector<16x128xf32>
      %126 = arith.addf %108, %125 : vector<16x128xf32>
      %c14 = arith.constant 14 : index
      %127 = memref.load %arg1[%c14] : memref<256xf32, #tpu.memory_space<smem>>
      %128 = vector.broadcast %127 : f32 to vector<16x128xf32>
      %129 = arith.mulf %128, %119 : vector<16x128xf32>
      %130 = arith.addf %112, %129 : vector<16x128xf32>
      %c18 = arith.constant 18 : index
      %131 = memref.load %arg1[%c18] : memref<256xf32, #tpu.memory_space<smem>>
      %132 = vector.broadcast %131 : f32 to vector<16x128xf32>
      %133 = arith.mulf %132, %119 : vector<16x128xf32>
      %134 = arith.addf %116, %133 : vector<16x128xf32>
      %c0_21 = arith.constant 0 : index
      %135 = memref.load %arg1[%c0_21] : memref<256xf32, #tpu.memory_space<smem>>
      %136 = vector.broadcast %135 : f32 to vector<16x128xf32>
      %137 = arith.mulf %136, %122 : vector<16x128xf32>
      %c3_22 = arith.constant 3 : index
      %138 = memref.load %arg1[%c3_22] : memref<256xf32, #tpu.memory_space<smem>>
      %139 = vector.broadcast %138 : f32 to vector<16x128xf32>
      %140 = arith.mulf %139, %119 : vector<16x128xf32>
      %141 = arith.addf %137, %140 : vector<16x128xf32>
      %c6_23 = arith.constant 6 : index
      %142 = memref.load %arg1[%c6_23] : memref<256xf32, #tpu.memory_space<smem>>
      %143 = vector.broadcast %142 : f32 to vector<16x128xf32>
      %144 = arith.addf %141, %143 : vector<16x128xf32>
      %cst_24 = arith.constant 0.000000e+00 : f32
      %145 = vector.broadcast %cst_24 : f32 to vector<16x128xf32>
      %146 = arith.minimumf %144, %145 : vector<16x128xf32>
      %147 = math.exp %146 : vector<16x128xf32>
      %cst_25 = arith.constant 1.000000e+00 : f32
      %148 = vector.broadcast %cst_25 : f32 to vector<16x128xf32>
      %149 = arith.subf %147, %148 : vector<16x128xf32>
      %cst_26 = arith.constant 1.67326319 : f32
      %150 = vector.broadcast %cst_26 : f32 to vector<16x128xf32>
      %151 = arith.mulf %150, %149 : vector<16x128xf32>
      %cst_27 = arith.constant 0.000000e+00 : f32
      %152 = vector.broadcast %cst_27 : f32 to vector<16x128xf32>
      %153 = arith.cmpf ogt, %144, %152 : vector<16x128xf32>
      %154 = arith.select %153, %144, %151 : vector<16x128xi1>, vector<16x128xf32>
      %c27 = arith.constant 27 : index
      %155 = memref.load %arg1[%c27] : memref<256xf32, #tpu.memory_space<smem>>
      %156 = vector.broadcast %155 : f32 to vector<16x128xf32>
      %157 = arith.mulf %156, %154 : vector<16x128xf32>
      %158 = arith.addf %126, %157 : vector<16x128xf32>
      %c39 = arith.constant 39 : index
      %159 = memref.load %arg1[%c39] : memref<256xf32, #tpu.memory_space<smem>>
      %160 = vector.broadcast %159 : f32 to vector<16x128xf32>
      %161 = arith.mulf %160, %154 : vector<16x128xf32>
      %162 = arith.addf %130, %161 : vector<16x128xf32>
      %c51 = arith.constant 51 : index
      %163 = memref.load %arg1[%c51] : memref<256xf32, #tpu.memory_space<smem>>
      %164 = vector.broadcast %163 : f32 to vector<16x128xf32>
      %165 = arith.mulf %164, %154 : vector<16x128xf32>
      %166 = arith.addf %134, %165 : vector<16x128xf32>
      %c1_28 = arith.constant 1 : index
      %167 = memref.load %arg1[%c1_28] : memref<256xf32, #tpu.memory_space<smem>>
      %168 = vector.broadcast %167 : f32 to vector<16x128xf32>
      %169 = arith.mulf %168, %122 : vector<16x128xf32>
      %c4_29 = arith.constant 4 : index
      %170 = memref.load %arg1[%c4_29] : memref<256xf32, #tpu.memory_space<smem>>
      %171 = vector.broadcast %170 : f32 to vector<16x128xf32>
      %172 = arith.mulf %171, %119 : vector<16x128xf32>
      %173 = arith.addf %169, %172 : vector<16x128xf32>
      %c7_30 = arith.constant 7 : index
      %174 = memref.load %arg1[%c7_30] : memref<256xf32, #tpu.memory_space<smem>>
      %175 = vector.broadcast %174 : f32 to vector<16x128xf32>
      %176 = arith.addf %173, %175 : vector<16x128xf32>
      %cst_31 = arith.constant 0.000000e+00 : f32
      %177 = vector.broadcast %cst_31 : f32 to vector<16x128xf32>
      %178 = arith.minimumf %176, %177 : vector<16x128xf32>
      %179 = math.exp %178 : vector<16x128xf32>
      %cst_32 = arith.constant 1.000000e+00 : f32
      %180 = vector.broadcast %cst_32 : f32 to vector<16x128xf32>
      %181 = arith.subf %179, %180 : vector<16x128xf32>
      %cst_33 = arith.constant 1.67326319 : f32
      %182 = vector.broadcast %cst_33 : f32 to vector<16x128xf32>
      %183 = arith.mulf %182, %181 : vector<16x128xf32>
      %cst_34 = arith.constant 0.000000e+00 : f32
      %184 = vector.broadcast %cst_34 : f32 to vector<16x128xf32>
      %185 = arith.cmpf ogt, %176, %184 : vector<16x128xf32>
      %186 = arith.select %185, %176, %183 : vector<16x128xi1>, vector<16x128xf32>
      %c28 = arith.constant 28 : index
      %187 = memref.load %arg1[%c28] : memref<256xf32, #tpu.memory_space<smem>>
      %188 = vector.broadcast %187 : f32 to vector<16x128xf32>
      %189 = arith.mulf %188, %186 : vector<16x128xf32>
      %190 = arith.addf %158, %189 : vector<16x128xf32>
      %c40 = arith.constant 40 : index
      %191 = memref.load %arg1[%c40] : memref<256xf32, #tpu.memory_space<smem>>
      %192 = vector.broadcast %191 : f32 to vector<16x128xf32>
      %193 = arith.mulf %192, %186 : vector<16x128xf32>
      %194 = arith.addf %162, %193 : vector<16x128xf32>
      %c52 = arith.constant 52 : index
      %195 = memref.load %arg1[%c52] : memref<256xf32, #tpu.memory_space<smem>>
      %196 = vector.broadcast %195 : f32 to vector<16x128xf32>
      %197 = arith.mulf %196, %186 : vector<16x128xf32>
      %198 = arith.addf %166, %197 : vector<16x128xf32>
      %c2_35 = arith.constant 2 : index
      %199 = memref.load %arg1[%c2_35] : memref<256xf32, #tpu.memory_space<smem>>
      %200 = vector.broadcast %199 : f32 to vector<16x128xf32>
      %201 = arith.mulf %200, %122 : vector<16x128xf32>
      %c5_36 = arith.constant 5 : index
      %202 = memref.load %arg1[%c5_36] : memref<256xf32, #tpu.memory_space<smem>>
      %203 = vector.broadcast %202 : f32 to vector<16x128xf32>
      %204 = arith.mulf %203, %119 : vector<16x128xf32>
      %205 = arith.addf %201, %204 : vector<16x128xf32>
      %c8_37 = arith.constant 8 : index
      %206 = memref.load %arg1[%c8_37] : memref<256xf32, #tpu.memory_space<smem>>
      %207 = vector.broadcast %206 : f32 to vector<16x128xf32>
      %208 = arith.addf %205, %207 : vector<16x128xf32>
      %cst_38 = arith.constant 0.000000e+00 : f32
      %209 = vector.broadcast %cst_38 : f32 to vector<16x128xf32>
      %210 = arith.minimumf %208, %209 : vector<16x128xf32>
      %211 = math.exp %210 : vector<16x128xf32>
      %cst_39 = arith.constant 1.000000e+00 : f32
      %212 = vector.broadcast %cst_39 : f32 to vector<16x128xf32>
      %213 = arith.subf %211, %212 : vector<16x128xf32>
      %cst_40 = arith.constant 1.67326319 : f32
      %214 = vector.broadcast %cst_40 : f32 to vector<16x128xf32>
      %215 = arith.mulf %214, %213 : vector<16x128xf32>
      %cst_41 = arith.constant 0.000000e+00 : f32
      %216 = vector.broadcast %cst_41 : f32 to vector<16x128xf32>
      %217 = arith.cmpf ogt, %208, %216 : vector<16x128xf32>
      %218 = arith.select %217, %208, %215 : vector<16x128xi1>, vector<16x128xf32>
      %c29 = arith.constant 29 : index
      %219 = memref.load %arg1[%c29] : memref<256xf32, #tpu.memory_space<smem>>
      %220 = vector.broadcast %219 : f32 to vector<16x128xf32>
      %221 = arith.mulf %220, %218 : vector<16x128xf32>
      %222 = arith.addf %190, %221 : vector<16x128xf32>
      %c41 = arith.constant 41 : index
      %223 = memref.load %arg1[%c41] : memref<256xf32, #tpu.memory_space<smem>>
      %224 = vector.broadcast %223 : f32 to vector<16x128xf32>
      %225 = arith.mulf %224, %218 : vector<16x128xf32>
      %226 = arith.addf %194, %225 : vector<16x128xf32>
      %c53 = arith.constant 53 : index
      %227 = memref.load %arg1[%c53] : memref<256xf32, #tpu.memory_space<smem>>
      %228 = vector.broadcast %227 : f32 to vector<16x128xf32>
      %229 = arith.mulf %228, %218 : vector<16x128xf32>
      %230 = arith.addf %198, %229 : vector<16x128xf32>
      %c2_42 = arith.constant 2 : index
      %231 = arith.index_cast %2 : i32 to index
      %c0_43 = arith.constant 0 : index
      %232 = vector.load %arg2[%c2_42, %231, %c0_43] : memref<4x32x128xf32, #tpu.memory_space<vmem>>, vector<1x16x128xf32>
      %233 = vector.shape_cast %232 : vector<1x16x128xf32> to vector<16x128xf32>
      %c1_i32_44 = arith.constant 1 : i32
      %234 = tpu.dynamic_rotate %233 by %c1_i32_44 dim 1 : vector<16x128xf32>, i32 -> vector<16x128xf32>
      %cst_45 = arith.constant 0.000000e+00 : f32
      %235 = vector.broadcast %cst_45 : f32 to vector<16x128xf32>
      %236 = arith.select %5, %235, %234 : vector<16x128xi1>, vector<16x128xf32>
      %c11 = arith.constant 11 : index
      %237 = memref.load %arg1[%c11] : memref<256xf32, #tpu.memory_space<smem>>
      %238 = vector.broadcast %237 : f32 to vector<16x128xf32>
      %239 = arith.mulf %238, %233 : vector<16x128xf32>
      %240 = arith.addf %222, %239 : vector<16x128xf32>
      %c15 = arith.constant 15 : index
      %241 = memref.load %arg1[%c15] : memref<256xf32, #tpu.memory_space<smem>>
      %242 = vector.broadcast %241 : f32 to vector<16x128xf32>
      %243 = arith.mulf %242, %233 : vector<16x128xf32>
      %244 = arith.addf %226, %243 : vector<16x128xf32>
      %c19 = arith.constant 19 : index
      %245 = memref.load %arg1[%c19] : memref<256xf32, #tpu.memory_space<smem>>
      %246 = vector.broadcast %245 : f32 to vector<16x128xf32>
      %247 = arith.mulf %246, %233 : vector<16x128xf32>
      %248 = arith.addf %230, %247 : vector<16x128xf32>
      %c0_46 = arith.constant 0 : index
      %249 = memref.load %arg1[%c0_46] : memref<256xf32, #tpu.memory_space<smem>>
      %250 = vector.broadcast %249 : f32 to vector<16x128xf32>
      %251 = arith.mulf %250, %236 : vector<16x128xf32>
      %c3_47 = arith.constant 3 : index
      %252 = memref.load %arg1[%c3_47] : memref<256xf32, #tpu.memory_space<smem>>
      %253 = vector.broadcast %252 : f32 to vector<16x128xf32>
      %254 = arith.mulf %253, %233 : vector<16x128xf32>
      %255 = arith.addf %251, %254 : vector<16x128xf32>
      %c6_48 = arith.constant 6 : index
      %256 = memref.load %arg1[%c6_48] : memref<256xf32, #tpu.memory_space<smem>>
      %257 = vector.broadcast %256 : f32 to vector<16x128xf32>
      %258 = arith.addf %255, %257 : vector<16x128xf32>
      %cst_49 = arith.constant 0.000000e+00 : f32
      %259 = vector.broadcast %cst_49 : f32 to vector<16x128xf32>
      %260 = arith.minimumf %258, %259 : vector<16x128xf32>
      %261 = math.exp %260 : vector<16x128xf32>
      %cst_50 = arith.constant 1.000000e+00 : f32
      %262 = vector.broadcast %cst_50 : f32 to vector<16x128xf32>
      %263 = arith.subf %261, %262 : vector<16x128xf32>
      %cst_51 = arith.constant 1.67326319 : f32
      %264 = vector.broadcast %cst_51 : f32 to vector<16x128xf32>
      %265 = arith.mulf %264, %263 : vector<16x128xf32>
      %cst_52 = arith.constant 0.000000e+00 : f32
      %266 = vector.broadcast %cst_52 : f32 to vector<16x128xf32>
      %267 = arith.cmpf ogt, %258, %266 : vector<16x128xf32>
      %268 = arith.select %267, %258, %265 : vector<16x128xi1>, vector<16x128xf32>
      %c30 = arith.constant 30 : index
      %269 = memref.load %arg1[%c30] : memref<256xf32, #tpu.memory_space<smem>>
      %270 = vector.broadcast %269 : f32 to vector<16x128xf32>
      %271 = arith.mulf %270, %268 : vector<16x128xf32>
      %272 = arith.addf %240, %271 : vector<16x128xf32>
      %c42 = arith.constant 42 : index
      %273 = memref.load %arg1[%c42] : memref<256xf32, #tpu.memory_space<smem>>
      %274 = vector.broadcast %273 : f32 to vector<16x128xf32>
      %275 = arith.mulf %274, %268 : vector<16x128xf32>
      %276 = arith.addf %244, %275 : vector<16x128xf32>
      %c54 = arith.constant 54 : index
      %277 = memref.load %arg1[%c54] : memref<256xf32, #tpu.memory_space<smem>>
      %278 = vector.broadcast %277 : f32 to vector<16x128xf32>
      %279 = arith.mulf %278, %268 : vector<16x128xf32>
      %280 = arith.addf %248, %279 : vector<16x128xf32>
      %c1_53 = arith.constant 1 : index
      %281 = memref.load %arg1[%c1_53] : memref<256xf32, #tpu.memory_space<smem>>
      %282 = vector.broadcast %281 : f32 to vector<16x128xf32>
      %283 = arith.mulf %282, %236 : vector<16x128xf32>
      %c4_54 = arith.constant 4 : index
      %284 = memref.load %arg1[%c4_54] : memref<256xf32, #tpu.memory_space<smem>>
      %285 = vector.broadcast %284 : f32 to vector<16x128xf32>
      %286 = arith.mulf %285, %233 : vector<16x128xf32>
      %287 = arith.addf %283, %286 : vector<16x128xf32>
      %c7_55 = arith.constant 7 : index
      %288 = memref.load %arg1[%c7_55] : memref<256xf32, #tpu.memory_space<smem>>
      %289 = vector.broadcast %288 : f32 to vector<16x128xf32>
      %290 = arith.addf %287, %289 : vector<16x128xf32>
      %cst_56 = arith.constant 0.000000e+00 : f32
      %291 = vector.broadcast %cst_56 : f32 to vector<16x128xf32>
      %292 = arith.minimumf %290, %291 : vector<16x128xf32>
      %293 = math.exp %292 : vector<16x128xf32>
      %cst_57 = arith.constant 1.000000e+00 : f32
      %294 = vector.broadcast %cst_57 : f32 to vector<16x128xf32>
      %295 = arith.subf %293, %294 : vector<16x128xf32>
      %cst_58 = arith.constant 1.67326319 : f32
      %296 = vector.broadcast %cst_58 : f32 to vector<16x128xf32>
      %297 = arith.mulf %296, %295 : vector<16x128xf32>
      %cst_59 = arith.constant 0.000000e+00 : f32
      %298 = vector.broadcast %cst_59 : f32 to vector<16x128xf32>
      %299 = arith.cmpf ogt, %290, %298 : vector<16x128xf32>
      %300 = arith.select %299, %290, %297 : vector<16x128xi1>, vector<16x128xf32>
      %c31 = arith.constant 31 : index
      %301 = memref.load %arg1[%c31] : memref<256xf32, #tpu.memory_space<smem>>
      %302 = vector.broadcast %301 : f32 to vector<16x128xf32>
      %303 = arith.mulf %302, %300 : vector<16x128xf32>
      %304 = arith.addf %272, %303 : vector<16x128xf32>
      %c43 = arith.constant 43 : index
      %305 = memref.load %arg1[%c43] : memref<256xf32, #tpu.memory_space<smem>>
      %306 = vector.broadcast %305 : f32 to vector<16x128xf32>
      %307 = arith.mulf %306, %300 : vector<16x128xf32>
      %308 = arith.addf %276, %307 : vector<16x128xf32>
      %c55 = arith.constant 55 : index
      %309 = memref.load %arg1[%c55] : memref<256xf32, #tpu.memory_space<smem>>
      %310 = vector.broadcast %309 : f32 to vector<16x128xf32>
      %311 = arith.mulf %310, %300 : vector<16x128xf32>
      %312 = arith.addf %280, %311 : vector<16x128xf32>
      %c2_60 = arith.constant 2 : index
      %313 = memref.load %arg1[%c2_60] : memref<256xf32, #tpu.memory_space<smem>>
      %314 = vector.broadcast %313 : f32 to vector<16x128xf32>
      %315 = arith.mulf %314, %236 : vector<16x128xf32>
      %c5_61 = arith.constant 5 : index
      %316 = memref.load %arg1[%c5_61] : memref<256xf32, #tpu.memory_space<smem>>
      %317 = vector.broadcast %316 : f32 to vector<16x128xf32>
      %318 = arith.mulf %317, %233 : vector<16x128xf32>
      %319 = arith.addf %315, %318 : vector<16x128xf32>
      %c8_62 = arith.constant 8 : index
      %320 = memref.load %arg1[%c8_62] : memref<256xf32, #tpu.memory_space<smem>>
      %321 = vector.broadcast %320 : f32 to vector<16x128xf32>
      %322 = arith.addf %319, %321 : vector<16x128xf32>
      %cst_63 = arith.constant 0.000000e+00 : f32
      %323 = vector.broadcast %cst_63 : f32 to vector<16x128xf32>
      %324 = arith.minimumf %322, %323 : vector<16x128xf32>
      %325 = math.exp %324 : vector<16x128xf32>
      %cst_64 = arith.constant 1.000000e+00 : f32
      %326 = vector.broadcast %cst_64 : f32 to vector<16x128xf32>
      %327 = arith.subf %325, %326 : vector<16x128xf32>
      %cst_65 = arith.constant 1.67326319 : f32
      %328 = vector.broadcast %cst_65 : f32 to vector<16x128xf32>
      %329 = arith.mulf %328, %327 : vector<16x128xf32>
      %cst_66 = arith.constant 0.000000e+00 : f32
      %330 = vector.broadcast %cst_66 : f32 to vector<16x128xf32>
      %331 = arith.cmpf ogt, %322, %330 : vector<16x128xf32>
      %332 = arith.select %331, %322, %329 : vector<16x128xi1>, vector<16x128xf32>
      %c32 = arith.constant 32 : index
      %333 = memref.load %arg1[%c32] : memref<256xf32, #tpu.memory_space<smem>>
      %334 = vector.broadcast %333 : f32 to vector<16x128xf32>
      %335 = arith.mulf %334, %332 : vector<16x128xf32>
      %336 = arith.addf %304, %335 : vector<16x128xf32>
      %c44 = arith.constant 44 : index
      %337 = memref.load %arg1[%c44] : memref<256xf32, #tpu.memory_space<smem>>
      %338 = vector.broadcast %337 : f32 to vector<16x128xf32>
      %339 = arith.mulf %338, %332 : vector<16x128xf32>
      %340 = arith.addf %308, %339 : vector<16x128xf32>
      %c56 = arith.constant 56 : index
      %341 = memref.load %arg1[%c56] : memref<256xf32, #tpu.memory_space<smem>>
      %342 = vector.broadcast %341 : f32 to vector<16x128xf32>
      %343 = arith.mulf %342, %332 : vector<16x128xf32>
      %344 = arith.addf %312, %343 : vector<16x128xf32>
      %c3_67 = arith.constant 3 : index
      %345 = arith.index_cast %2 : i32 to index
      %c0_68 = arith.constant 0 : index
      %346 = vector.load %arg2[%c3_67, %345, %c0_68] : memref<4x32x128xf32, #tpu.memory_space<vmem>>, vector<1x16x128xf32>
      %347 = vector.shape_cast %346 : vector<1x16x128xf32> to vector<16x128xf32>
      %c1_i32_69 = arith.constant 1 : i32
      %348 = tpu.dynamic_rotate %347 by %c1_i32_69 dim 1 : vector<16x128xf32>, i32 -> vector<16x128xf32>
      %cst_70 = arith.constant 0.000000e+00 : f32
      %349 = vector.broadcast %cst_70 : f32 to vector<16x128xf32>
      %350 = arith.select %5, %349, %348 : vector<16x128xi1>, vector<16x128xf32>
      %c12 = arith.constant 12 : index
      %351 = memref.load %arg1[%c12] : memref<256xf32, #tpu.memory_space<smem>>
      %352 = vector.broadcast %351 : f32 to vector<16x128xf32>
      %353 = arith.mulf %352, %347 : vector<16x128xf32>
      %354 = arith.addf %336, %353 : vector<16x128xf32>
      %c16 = arith.constant 16 : index
      %355 = memref.load %arg1[%c16] : memref<256xf32, #tpu.memory_space<smem>>
      %356 = vector.broadcast %355 : f32 to vector<16x128xf32>
      %357 = arith.mulf %356, %347 : vector<16x128xf32>
      %358 = arith.addf %340, %357 : vector<16x128xf32>
      %c20 = arith.constant 20 : index
      %359 = memref.load %arg1[%c20] : memref<256xf32, #tpu.memory_space<smem>>
      %360 = vector.broadcast %359 : f32 to vector<16x128xf32>
      %361 = arith.mulf %360, %347 : vector<16x128xf32>
      %362 = arith.addf %344, %361 : vector<16x128xf32>
      %c0_71 = arith.constant 0 : index
      %363 = memref.load %arg1[%c0_71] : memref<256xf32, #tpu.memory_space<smem>>
      %364 = vector.broadcast %363 : f32 to vector<16x128xf32>
      %365 = arith.mulf %364, %350 : vector<16x128xf32>
      %c3_72 = arith.constant 3 : index
      %366 = memref.load %arg1[%c3_72] : memref<256xf32, #tpu.memory_space<smem>>
      %367 = vector.broadcast %366 : f32 to vector<16x128xf32>
      %368 = arith.mulf %367, %347 : vector<16x128xf32>
      %369 = arith.addf %365, %368 : vector<16x128xf32>
      %c6_73 = arith.constant 6 : index
      %370 = memref.load %arg1[%c6_73] : memref<256xf32, #tpu.memory_space<smem>>
      %371 = vector.broadcast %370 : f32 to vector<16x128xf32>
      %372 = arith.addf %369, %371 : vector<16x128xf32>
      %cst_74 = arith.constant 0.000000e+00 : f32
      %373 = vector.broadcast %cst_74 : f32 to vector<16x128xf32>
      %374 = arith.minimumf %372, %373 : vector<16x128xf32>
      %375 = math.exp %374 : vector<16x128xf32>
      %cst_75 = arith.constant 1.000000e+00 : f32
      %376 = vector.broadcast %cst_75 : f32 to vector<16x128xf32>
      %377 = arith.subf %375, %376 : vector<16x128xf32>
      %cst_76 = arith.constant 1.67326319 : f32
      %378 = vector.broadcast %cst_76 : f32 to vector<16x128xf32>
      %379 = arith.mulf %378, %377 : vector<16x128xf32>
      %cst_77 = arith.constant 0.000000e+00 : f32
      %380 = vector.broadcast %cst_77 : f32 to vector<16x128xf32>
      %381 = arith.cmpf ogt, %372, %380 : vector<16x128xf32>
      %382 = arith.select %381, %372, %379 : vector<16x128xi1>, vector<16x128xf32>
      %c33 = arith.constant 33 : index
      %383 = memref.load %arg1[%c33] : memref<256xf32, #tpu.memory_space<smem>>
      %384 = vector.broadcast %383 : f32 to vector<16x128xf32>
      %385 = arith.mulf %384, %382 : vector<16x128xf32>
      %386 = arith.addf %354, %385 : vector<16x128xf32>
      %c45 = arith.constant 45 : index
      %387 = memref.load %arg1[%c45] : memref<256xf32, #tpu.memory_space<smem>>
      %388 = vector.broadcast %387 : f32 to vector<16x128xf32>
      %389 = arith.mulf %388, %382 : vector<16x128xf32>
      %390 = arith.addf %358, %389 : vector<16x128xf32>
      %c57 = arith.constant 57 : index
      %391 = memref.load %arg1[%c57] : memref<256xf32, #tpu.memory_space<smem>>
      %392 = vector.broadcast %391 : f32 to vector<16x128xf32>
      %393 = arith.mulf %392, %382 : vector<16x128xf32>
      %394 = arith.addf %362, %393 : vector<16x128xf32>
      %c1_78 = arith.constant 1 : index
      %395 = memref.load %arg1[%c1_78] : memref<256xf32, #tpu.memory_space<smem>>
      %396 = vector.broadcast %395 : f32 to vector<16x128xf32>
      %397 = arith.mulf %396, %350 : vector<16x128xf32>
      %c4_79 = arith.constant 4 : index
      %398 = memref.load %arg1[%c4_79] : memref<256xf32, #tpu.memory_space<smem>>
      %399 = vector.broadcast %398 : f32 to vector<16x128xf32>
      %400 = arith.mulf %399, %347 : vector<16x128xf32>
      %401 = arith.addf %397, %400 : vector<16x128xf32>
      %c7_80 = arith.constant 7 : index
      %402 = memref.load %arg1[%c7_80] : memref<256xf32, #tpu.memory_space<smem>>
      %403 = vector.broadcast %402 : f32 to vector<16x128xf32>
      %404 = arith.addf %401, %403 : vector<16x128xf32>
      %cst_81 = arith.constant 0.000000e+00 : f32
      %405 = vector.broadcast %cst_81 : f32 to vector<16x128xf32>
      %406 = arith.minimumf %404, %405 : vector<16x128xf32>
      %407 = math.exp %406 : vector<16x128xf32>
      %cst_82 = arith.constant 1.000000e+00 : f32
      %408 = vector.broadcast %cst_82 : f32 to vector<16x128xf32>
      %409 = arith.subf %407, %408 : vector<16x128xf32>
      %cst_83 = arith.constant 1.67326319 : f32
      %410 = vector.broadcast %cst_83 : f32 to vector<16x128xf32>
      %411 = arith.mulf %410, %409 : vector<16x128xf32>
      %cst_84 = arith.constant 0.000000e+00 : f32
      %412 = vector.broadcast %cst_84 : f32 to vector<16x128xf32>
      %413 = arith.cmpf ogt, %404, %412 : vector<16x128xf32>
      %414 = arith.select %413, %404, %411 : vector<16x128xi1>, vector<16x128xf32>
      %c34 = arith.constant 34 : index
      %415 = memref.load %arg1[%c34] : memref<256xf32, #tpu.memory_space<smem>>
      %416 = vector.broadcast %415 : f32 to vector<16x128xf32>
      %417 = arith.mulf %416, %414 : vector<16x128xf32>
      %418 = arith.addf %386, %417 : vector<16x128xf32>
      %c46 = arith.constant 46 : index
      %419 = memref.load %arg1[%c46] : memref<256xf32, #tpu.memory_space<smem>>
      %420 = vector.broadcast %419 : f32 to vector<16x128xf32>
      %421 = arith.mulf %420, %414 : vector<16x128xf32>
      %422 = arith.addf %390, %421 : vector<16x128xf32>
      %c58 = arith.constant 58 : index
      %423 = memref.load %arg1[%c58] : memref<256xf32, #tpu.memory_space<smem>>
      %424 = vector.broadcast %423 : f32 to vector<16x128xf32>
      %425 = arith.mulf %424, %414 : vector<16x128xf32>
      %426 = arith.addf %394, %425 : vector<16x128xf32>
      %c2_85 = arith.constant 2 : index
      %427 = memref.load %arg1[%c2_85] : memref<256xf32, #tpu.memory_space<smem>>
      %428 = vector.broadcast %427 : f32 to vector<16x128xf32>
      %429 = arith.mulf %428, %350 : vector<16x128xf32>
      %c5_86 = arith.constant 5 : index
      %430 = memref.load %arg1[%c5_86] : memref<256xf32, #tpu.memory_space<smem>>
      %431 = vector.broadcast %430 : f32 to vector<16x128xf32>
      %432 = arith.mulf %431, %347 : vector<16x128xf32>
      %433 = arith.addf %429, %432 : vector<16x128xf32>
      %c8_87 = arith.constant 8 : index
      %434 = memref.load %arg1[%c8_87] : memref<256xf32, #tpu.memory_space<smem>>
      %435 = vector.broadcast %434 : f32 to vector<16x128xf32>
      %436 = arith.addf %433, %435 : vector<16x128xf32>
      %cst_88 = arith.constant 0.000000e+00 : f32
      %437 = vector.broadcast %cst_88 : f32 to vector<16x128xf32>
      %438 = arith.minimumf %436, %437 : vector<16x128xf32>
      %439 = math.exp %438 : vector<16x128xf32>
      %cst_89 = arith.constant 1.000000e+00 : f32
      %440 = vector.broadcast %cst_89 : f32 to vector<16x128xf32>
      %441 = arith.subf %439, %440 : vector<16x128xf32>
      %cst_90 = arith.constant 1.67326319 : f32
      %442 = vector.broadcast %cst_90 : f32 to vector<16x128xf32>
      %443 = arith.mulf %442, %441 : vector<16x128xf32>
      %cst_91 = arith.constant 0.000000e+00 : f32
      %444 = vector.broadcast %cst_91 : f32 to vector<16x128xf32>
      %445 = arith.cmpf ogt, %436, %444 : vector<16x128xf32>
      %446 = arith.select %445, %436, %443 : vector<16x128xi1>, vector<16x128xf32>
      %c35 = arith.constant 35 : index
      %447 = memref.load %arg1[%c35] : memref<256xf32, #tpu.memory_space<smem>>
      %448 = vector.broadcast %447 : f32 to vector<16x128xf32>
      %449 = arith.mulf %448, %446 : vector<16x128xf32>
      %450 = arith.addf %418, %449 : vector<16x128xf32>
      %c47 = arith.constant 47 : index
      %451 = memref.load %arg1[%c47] : memref<256xf32, #tpu.memory_space<smem>>
      %452 = vector.broadcast %451 : f32 to vector<16x128xf32>
      %453 = arith.mulf %452, %446 : vector<16x128xf32>
      %454 = arith.addf %422, %453 : vector<16x128xf32>
      %c59 = arith.constant 59 : index
      %455 = memref.load %arg1[%c59] : memref<256xf32, #tpu.memory_space<smem>>
      %456 = vector.broadcast %455 : f32 to vector<16x128xf32>
      %457 = arith.mulf %456, %446 : vector<16x128xf32>
      %458 = arith.addf %426, %457 : vector<16x128xf32>
      %c21 = arith.constant 21 : index
      %459 = memref.load %arg1[%c21] : memref<256xf32, #tpu.memory_space<smem>>
      %460 = vector.broadcast %459 : f32 to vector<16x128xf32>
      %461 = arith.addf %450, %460 : vector<16x128xf32>
      %c22 = arith.constant 22 : index
      %462 = memref.load %arg1[%c22] : memref<256xf32, #tpu.memory_space<smem>>
      %463 = vector.broadcast %462 : f32 to vector<16x128xf32>
      %464 = arith.addf %454, %463 : vector<16x128xf32>
      %c23 = arith.constant 23 : index
      %465 = memref.load %arg1[%c23] : memref<256xf32, #tpu.memory_space<smem>>
      %466 = vector.broadcast %465 : f32 to vector<16x128xf32>
      %467 = arith.addf %458, %466 : vector<16x128xf32>
      %c2_i32_92 = arith.constant 2 : i32
      %468 = vector.broadcast %c2_i32_92 : i32 to vector<16x128xi32>
      %469 = arith.cmpi slt, %3, %468 : vector<16x128xi32>
      %c2_i32_93 = arith.constant 2 : i32
      %470 = tpu.dynamic_rotate %461 by %c2_i32_93 dim 1 : vector<16x128xf32>, i32 -> vector<16x128xf32>
      %cst_94 = arith.constant 0.000000e+00 : f32
      %471 = vector.broadcast %cst_94 : f32 to vector<16x128xf32>
      %472 = arith.select %469, %471, %470 : vector<16x128xi1>, vector<16x128xf32>
      %c2_i32_95 = arith.constant 2 : i32
      %473 = tpu.dynamic_rotate %464 by %c2_i32_95 dim 1 : vector<16x128xf32>, i32 -> vector<16x128xf32>
      %cst_96 = arith.constant 0.000000e+00 : f32
      %474 = vector.broadcast %cst_96 : f32 to vector<16x128xf32>
      %475 = arith.select %469, %474, %473 : vector<16x128xi1>, vector<16x128xf32>
      %c2_i32_97 = arith.constant 2 : i32
      %476 = tpu.dynamic_rotate %467 by %c2_i32_97 dim 1 : vector<16x128xf32>, i32 -> vector<16x128xf32>
      %cst_98 = arith.constant 0.000000e+00 : f32
      %477 = vector.broadcast %cst_98 : f32 to vector<16x128xf32>
      %478 = arith.select %469, %477, %476 : vector<16x128xi1>, vector<16x128xf32>
      %c132 = arith.constant 132 : index
      %479 = memref.load %arg1[%c132] : memref<256xf32, #tpu.memory_space<smem>>
      %480 = vector.broadcast %479 : f32 to vector<16x128xf32>
      %481 = arith.mulf %480, %461 : vector<16x128xf32>
      %c133 = arith.constant 133 : index
      %482 = memref.load %arg1[%c133] : memref<256xf32, #tpu.memory_space<smem>>
      %483 = vector.broadcast %482 : f32 to vector<16x128xf32>
      %484 = arith.mulf %483, %464 : vector<16x128xf32>
      %485 = arith.addf %481, %484 : vector<16x128xf32>
      %c134 = arith.constant 134 : index
      %486 = memref.load %arg1[%c134] : memref<256xf32, #tpu.memory_space<smem>>
      %487 = vector.broadcast %486 : f32 to vector<16x128xf32>
      %488 = arith.mulf %487, %467 : vector<16x128xf32>
      %489 = arith.addf %485, %488 : vector<16x128xf32>
      %c60 = arith.constant 60 : index
      %490 = memref.load %arg1[%c60] : memref<256xf32, #tpu.memory_space<smem>>
      %491 = vector.broadcast %490 : f32 to vector<16x128xf32>
      %492 = arith.mulf %491, %472 : vector<16x128xf32>
      %493 = arith.addf %489, %492 : vector<16x128xf32>
      %c61 = arith.constant 61 : index
      %494 = memref.load %arg1[%c61] : memref<256xf32, #tpu.memory_space<smem>>
      %495 = vector.broadcast %494 : f32 to vector<16x128xf32>
      %496 = arith.mulf %495, %475 : vector<16x128xf32>
      %497 = arith.addf %493, %496 : vector<16x128xf32>
      %c62 = arith.constant 62 : index
      %498 = memref.load %arg1[%c62] : memref<256xf32, #tpu.memory_space<smem>>
      %499 = vector.broadcast %498 : f32 to vector<16x128xf32>
      %500 = arith.mulf %499, %478 : vector<16x128xf32>
      %501 = arith.addf %497, %500 : vector<16x128xf32>
      %c204 = arith.constant 204 : index
      %502 = memref.load %arg1[%c204] : memref<256xf32, #tpu.memory_space<smem>>
      %503 = vector.broadcast %502 : f32 to vector<16x128xf32>
      %504 = arith.addf %501, %503 : vector<16x128xf32>
      %cst_99 = arith.constant 0.000000e+00 : f32
      %505 = vector.broadcast %cst_99 : f32 to vector<16x128xf32>
      %506 = arith.minimumf %504, %505 : vector<16x128xf32>
      %507 = math.exp %506 : vector<16x128xf32>
      %cst_100 = arith.constant 1.000000e+00 : f32
      %508 = vector.broadcast %cst_100 : f32 to vector<16x128xf32>
      %509 = arith.subf %507, %508 : vector<16x128xf32>
      %cst_101 = arith.constant 1.75809932 : f32
      %510 = vector.broadcast %cst_101 : f32 to vector<16x128xf32>
      %511 = arith.mulf %510, %509 : vector<16x128xf32>
      %cst_102 = arith.constant 0.000000e+00 : f32
      %512 = vector.broadcast %cst_102 : f32 to vector<16x128xf32>
      %513 = arith.cmpf ogt, %504, %512 : vector<16x128xf32>
      %cst_103 = arith.constant 1.05070102 : f32
      %514 = vector.broadcast %cst_103 : f32 to vector<16x128xf32>
      %515 = arith.mulf %514, %504 : vector<16x128xf32>
      %516 = arith.select %513, %515, %511 : vector<16x128xi1>, vector<16x128xf32>
      %517 = arith.addf %461, %516 : vector<16x128xf32>
      %c135 = arith.constant 135 : index
      %518 = memref.load %arg1[%c135] : memref<256xf32, #tpu.memory_space<smem>>
      %519 = vector.broadcast %518 : f32 to vector<16x128xf32>
      %520 = arith.mulf %519, %461 : vector<16x128xf32>
      %c136 = arith.constant 136 : index
      %521 = memref.load %arg1[%c136] : memref<256xf32, #tpu.memory_space<smem>>
      %522 = vector.broadcast %521 : f32 to vector<16x128xf32>
      %523 = arith.mulf %522, %464 : vector<16x128xf32>
      %524 = arith.addf %520, %523 : vector<16x128xf32>
      %c137 = arith.constant 137 : index
      %525 = memref.load %arg1[%c137] : memref<256xf32, #tpu.memory_space<smem>>
      %526 = vector.broadcast %525 : f32 to vector<16x128xf32>
      %527 = arith.mulf %526, %467 : vector<16x128xf32>
      %528 = arith.addf %524, %527 : vector<16x128xf32>
      %c63 = arith.constant 63 : index
      %529 = memref.load %arg1[%c63] : memref<256xf32, #tpu.memory_space<smem>>
      %530 = vector.broadcast %529 : f32 to vector<16x128xf32>
      %531 = arith.mulf %530, %472 : vector<16x128xf32>
      %532 = arith.addf %528, %531 : vector<16x128xf32>
      %c64 = arith.constant 64 : index
      %533 = memref.load %arg1[%c64] : memref<256xf32, #tpu.memory_space<smem>>
      %534 = vector.broadcast %533 : f32 to vector<16x128xf32>
      %535 = arith.mulf %534, %475 : vector<16x128xf32>
      %536 = arith.addf %532, %535 : vector<16x128xf32>
      %c65 = arith.constant 65 : index
      %537 = memref.load %arg1[%c65] : memref<256xf32, #tpu.memory_space<smem>>
      %538 = vector.broadcast %537 : f32 to vector<16x128xf32>
      %539 = arith.mulf %538, %478 : vector<16x128xf32>
      %540 = arith.addf %536, %539 : vector<16x128xf32>
      %c205 = arith.constant 205 : index
      %541 = memref.load %arg1[%c205] : memref<256xf32, #tpu.memory_space<smem>>
      %542 = vector.broadcast %541 : f32 to vector<16x128xf32>
      %543 = arith.addf %540, %542 : vector<16x128xf32>
      %cst_104 = arith.constant 0.000000e+00 : f32
      %544 = vector.broadcast %cst_104 : f32 to vector<16x128xf32>
      %545 = arith.minimumf %543, %544 : vector<16x128xf32>
      %546 = math.exp %545 : vector<16x128xf32>
      %cst_105 = arith.constant 1.000000e+00 : f32
      %547 = vector.broadcast %cst_105 : f32 to vector<16x128xf32>
      %548 = arith.subf %546, %547 : vector<16x128xf32>
      %cst_106 = arith.constant 1.75809932 : f32
      %549 = vector.broadcast %cst_106 : f32 to vector<16x128xf32>
      %550 = arith.mulf %549, %548 : vector<16x128xf32>
      %cst_107 = arith.constant 0.000000e+00 : f32
      %551 = vector.broadcast %cst_107 : f32 to vector<16x128xf32>
      %552 = arith.cmpf ogt, %543, %551 : vector<16x128xf32>
      %cst_108 = arith.constant 1.05070102 : f32
      %553 = vector.broadcast %cst_108 : f32 to vector<16x128xf32>
      %554 = arith.mulf %553, %543 : vector<16x128xf32>
      %555 = arith.select %552, %554, %550 : vector<16x128xi1>, vector<16x128xf32>
      %556 = arith.addf %464, %555 : vector<16x128xf32>
      %c138 = arith.constant 138 : index
      %557 = memref.load %arg1[%c138] : memref<256xf32, #tpu.memory_space<smem>>
      %558 = vector.broadcast %557 : f32 to vector<16x128xf32>
      %559 = arith.mulf %558, %461 : vector<16x128xf32>
      %c139 = arith.constant 139 : index
      %560 = memref.load %arg1[%c139] : memref<256xf32, #tpu.memory_space<smem>>
      %561 = vector.broadcast %560 : f32 to vector<16x128xf32>
      %562 = arith.mulf %561, %464 : vector<16x128xf32>
      %563 = arith.addf %559, %562 : vector<16x128xf32>
      %c140 = arith.constant 140 : index
      %564 = memref.load %arg1[%c140] : memref<256xf32, #tpu.memory_space<smem>>
      %565 = vector.broadcast %564 : f32 to vector<16x128xf32>
      %566 = arith.mulf %565, %467 : vector<16x128xf32>
      %567 = arith.addf %563, %566 : vector<16x128xf32>
      %c66 = arith.constant 66 : index
      %568 = memref.load %arg1[%c66] : memref<256xf32, #tpu.memory_space<smem>>
      %569 = vector.broadcast %568 : f32 to vector<16x128xf32>
      %570 = arith.mulf %569, %472 : vector<16x128xf32>
      %571 = arith.addf %567, %570 : vector<16x128xf32>
      %c67 = arith.constant 67 : index
      %572 = memref.load %arg1[%c67] : memref<256xf32, #tpu.memory_space<smem>>
      %573 = vector.broadcast %572 : f32 to vector<16x128xf32>
      %574 = arith.mulf %573, %475 : vector<16x128xf32>
      %575 = arith.addf %571, %574 : vector<16x128xf32>
      %c68 = arith.constant 68 : index
      %576 = memref.load %arg1[%c68] : memref<256xf32, #tpu.memory_space<smem>>
      %577 = vector.broadcast %576 : f32 to vector<16x128xf32>
      %578 = arith.mulf %577, %478 : vector<16x128xf32>
      %579 = arith.addf %575, %578 : vector<16x128xf32>
      %c206 = arith.constant 206 : index
      %580 = memref.load %arg1[%c206] : memref<256xf32, #tpu.memory_space<smem>>
      %581 = vector.broadcast %580 : f32 to vector<16x128xf32>
      %582 = arith.addf %579, %581 : vector<16x128xf32>
      %cst_109 = arith.constant 0.000000e+00 : f32
      %583 = vector.broadcast %cst_109 : f32 to vector<16x128xf32>
      %584 = arith.minimumf %582, %583 : vector<16x128xf32>
      %585 = math.exp %584 : vector<16x128xf32>
      %cst_110 = arith.constant 1.000000e+00 : f32
      %586 = vector.broadcast %cst_110 : f32 to vector<16x128xf32>
      %587 = arith.subf %585, %586 : vector<16x128xf32>
      %cst_111 = arith.constant 1.75809932 : f32
      %588 = vector.broadcast %cst_111 : f32 to vector<16x128xf32>
      %589 = arith.mulf %588, %587 : vector<16x128xf32>
      %cst_112 = arith.constant 0.000000e+00 : f32
      %590 = vector.broadcast %cst_112 : f32 to vector<16x128xf32>
      %591 = arith.cmpf ogt, %582, %590 : vector<16x128xf32>
      %cst_113 = arith.constant 1.05070102 : f32
      %592 = vector.broadcast %cst_113 : f32 to vector<16x128xf32>
      %593 = arith.mulf %592, %582 : vector<16x128xf32>
      %594 = arith.select %591, %593, %589 : vector<16x128xi1>, vector<16x128xf32>
      %595 = arith.addf %467, %594 : vector<16x128xf32>
      %c4_i32 = arith.constant 4 : i32
      %596 = vector.broadcast %c4_i32 : i32 to vector<16x128xi32>
      %597 = arith.cmpi slt, %3, %596 : vector<16x128xi32>
      %c4_i32_114 = arith.constant 4 : i32
      %598 = tpu.dynamic_rotate %517 by %c4_i32_114 dim 1 : vector<16x128xf32>, i32 -> vector<16x128xf32>
      %cst_115 = arith.constant 0.000000e+00 : f32
      %599 = vector.broadcast %cst_115 : f32 to vector<16x128xf32>
      %600 = arith.select %597, %599, %598 : vector<16x128xi1>, vector<16x128xf32>
      %c4_i32_116 = arith.constant 4 : i32
      %601 = tpu.dynamic_rotate %556 by %c4_i32_116 dim 1 : vector<16x128xf32>, i32 -> vector<16x128xf32>
      %cst_117 = arith.constant 0.000000e+00 : f32
      %602 = vector.broadcast %cst_117 : f32 to vector<16x128xf32>
      %603 = arith.select %597, %602, %601 : vector<16x128xi1>, vector<16x128xf32>
      %c4_i32_118 = arith.constant 4 : i32
      %604 = tpu.dynamic_rotate %595 by %c4_i32_118 dim 1 : vector<16x128xf32>, i32 -> vector<16x128xf32>
      %cst_119 = arith.constant 0.000000e+00 : f32
      %605 = vector.broadcast %cst_119 : f32 to vector<16x128xf32>
      %606 = arith.select %597, %605, %604 : vector<16x128xi1>, vector<16x128xf32>
      %c141 = arith.constant 141 : index
      %607 = memref.load %arg1[%c141] : memref<256xf32, #tpu.memory_space<smem>>
      %608 = vector.broadcast %607 : f32 to vector<16x128xf32>
      %609 = arith.mulf %608, %517 : vector<16x128xf32>
      %c142 = arith.constant 142 : index
      %610 = memref.load %arg1[%c142] : memref<256xf32, #tpu.memory_space<smem>>
      %611 = vector.broadcast %610 : f32 to vector<16x128xf32>
      %612 = arith.mulf %611, %556 : vector<16x128xf32>
      %613 = arith.addf %609, %612 : vector<16x128xf32>
      %c143 = arith.constant 143 : index
      %614 = memref.load %arg1[%c143] : memref<256xf32, #tpu.memory_space<smem>>
      %615 = vector.broadcast %614 : f32 to vector<16x128xf32>
      %616 = arith.mulf %615, %595 : vector<16x128xf32>
      %617 = arith.addf %613, %616 : vector<16x128xf32>
      %c69 = arith.constant 69 : index
      %618 = memref.load %arg1[%c69] : memref<256xf32, #tpu.memory_space<smem>>
      %619 = vector.broadcast %618 : f32 to vector<16x128xf32>
      %620 = arith.mulf %619, %600 : vector<16x128xf32>
      %621 = arith.addf %617, %620 : vector<16x128xf32>
      %c70 = arith.constant 70 : index
      %622 = memref.load %arg1[%c70] : memref<256xf32, #tpu.memory_space<smem>>
      %623 = vector.broadcast %622 : f32 to vector<16x128xf32>
      %624 = arith.mulf %623, %603 : vector<16x128xf32>
      %625 = arith.addf %621, %624 : vector<16x128xf32>
      %c71 = arith.constant 71 : index
      %626 = memref.load %arg1[%c71] : memref<256xf32, #tpu.memory_space<smem>>
      %627 = vector.broadcast %626 : f32 to vector<16x128xf32>
      %628 = arith.mulf %627, %606 : vector<16x128xf32>
      %629 = arith.addf %625, %628 : vector<16x128xf32>
      %c207 = arith.constant 207 : index
      %630 = memref.load %arg1[%c207] : memref<256xf32, #tpu.memory_space<smem>>
      %631 = vector.broadcast %630 : f32 to vector<16x128xf32>
      %632 = arith.addf %629, %631 : vector<16x128xf32>
      %cst_120 = arith.constant 0.000000e+00 : f32
      %633 = vector.broadcast %cst_120 : f32 to vector<16x128xf32>
      %634 = arith.minimumf %632, %633 : vector<16x128xf32>
      %635 = math.exp %634 : vector<16x128xf32>
      %cst_121 = arith.constant 1.000000e+00 : f32
      %636 = vector.broadcast %cst_121 : f32 to vector<16x128xf32>
      %637 = arith.subf %635, %636 : vector<16x128xf32>
      %cst_122 = arith.constant 1.75809932 : f32
      %638 = vector.broadcast %cst_122 : f32 to vector<16x128xf32>
      %639 = arith.mulf %638, %637 : vector<16x128xf32>
      %cst_123 = arith.constant 0.000000e+00 : f32
      %640 = vector.broadcast %cst_123 : f32 to vector<16x128xf32>
      %641 = arith.cmpf ogt, %632, %640 : vector<16x128xf32>
      %cst_124 = arith.constant 1.05070102 : f32
      %642 = vector.broadcast %cst_124 : f32 to vector<16x128xf32>
      %643 = arith.mulf %642, %632 : vector<16x128xf32>
      %644 = arith.select %641, %643, %639 : vector<16x128xi1>, vector<16x128xf32>
      %645 = arith.addf %517, %644 : vector<16x128xf32>
      %c144 = arith.constant 144 : index
      %646 = memref.load %arg1[%c144] : memref<256xf32, #tpu.memory_space<smem>>
      %647 = vector.broadcast %646 : f32 to vector<16x128xf32>
      %648 = arith.mulf %647, %517 : vector<16x128xf32>
      %c145 = arith.constant 145 : index
      %649 = memref.load %arg1[%c145] : memref<256xf32, #tpu.memory_space<smem>>
      %650 = vector.broadcast %649 : f32 to vector<16x128xf32>
      %651 = arith.mulf %650, %556 : vector<16x128xf32>
      %652 = arith.addf %648, %651 : vector<16x128xf32>
      %c146 = arith.constant 146 : index
      %653 = memref.load %arg1[%c146] : memref<256xf32, #tpu.memory_space<smem>>
      %654 = vector.broadcast %653 : f32 to vector<16x128xf32>
      %655 = arith.mulf %654, %595 : vector<16x128xf32>
      %656 = arith.addf %652, %655 : vector<16x128xf32>
      %c72 = arith.constant 72 : index
      %657 = memref.load %arg1[%c72] : memref<256xf32, #tpu.memory_space<smem>>
      %658 = vector.broadcast %657 : f32 to vector<16x128xf32>
      %659 = arith.mulf %658, %600 : vector<16x128xf32>
      %660 = arith.addf %656, %659 : vector<16x128xf32>
      %c73 = arith.constant 73 : index
      %661 = memref.load %arg1[%c73] : memref<256xf32, #tpu.memory_space<smem>>
      %662 = vector.broadcast %661 : f32 to vector<16x128xf32>
      %663 = arith.mulf %662, %603 : vector<16x128xf32>
      %664 = arith.addf %660, %663 : vector<16x128xf32>
      %c74 = arith.constant 74 : index
      %665 = memref.load %arg1[%c74] : memref<256xf32, #tpu.memory_space<smem>>
      %666 = vector.broadcast %665 : f32 to vector<16x128xf32>
      %667 = arith.mulf %666, %606 : vector<16x128xf32>
      %668 = arith.addf %664, %667 : vector<16x128xf32>
      %c208 = arith.constant 208 : index
      %669 = memref.load %arg1[%c208] : memref<256xf32, #tpu.memory_space<smem>>
      %670 = vector.broadcast %669 : f32 to vector<16x128xf32>
      %671 = arith.addf %668, %670 : vector<16x128xf32>
      %cst_125 = arith.constant 0.000000e+00 : f32
      %672 = vector.broadcast %cst_125 : f32 to vector<16x128xf32>
      %673 = arith.minimumf %671, %672 : vector<16x128xf32>
      %674 = math.exp %673 : vector<16x128xf32>
      %cst_126 = arith.constant 1.000000e+00 : f32
      %675 = vector.broadcast %cst_126 : f32 to vector<16x128xf32>
      %676 = arith.subf %674, %675 : vector<16x128xf32>
      %cst_127 = arith.constant 1.75809932 : f32
      %677 = vector.broadcast %cst_127 : f32 to vector<16x128xf32>
      %678 = arith.mulf %677, %676 : vector<16x128xf32>
      %cst_128 = arith.constant 0.000000e+00 : f32
      %679 = vector.broadcast %cst_128 : f32 to vector<16x128xf32>
      %680 = arith.cmpf ogt, %671, %679 : vector<16x128xf32>
      %cst_129 = arith.constant 1.05070102 : f32
      %681 = vector.broadcast %cst_129 : f32 to vector<16x128xf32>
      %682 = arith.mulf %681, %671 : vector<16x128xf32>
      %683 = arith.select %680, %682, %678 : vector<16x128xi1>, vector<16x128xf32>
      %684 = arith.addf %556, %683 : vector<16x128xf32>
      %c147 = arith.constant 147 : index
      %685 = memref.load %arg1[%c147] : memref<256xf32, #tpu.memory_space<smem>>
      %686 = vector.broadcast %685 : f32 to vector<16x128xf32>
      %687 = arith.mulf %686, %517 : vector<16x128xf32>
      %c148 = arith.constant 148 : index
      %688 = memref.load %arg1[%c148] : memref<256xf32, #tpu.memory_space<smem>>
      %689 = vector.broadcast %688 : f32 to vector<16x128xf32>
      %690 = arith.mulf %689, %556 : vector<16x128xf32>
      %691 = arith.addf %687, %690 : vector<16x128xf32>
      %c149 = arith.constant 149 : index
      %692 = memref.load %arg1[%c149] : memref<256xf32, #tpu.memory_space<smem>>
      %693 = vector.broadcast %692 : f32 to vector<16x128xf32>
      %694 = arith.mulf %693, %595 : vector<16x128xf32>
      %695 = arith.addf %691, %694 : vector<16x128xf32>
      %c75 = arith.constant 75 : index
      %696 = memref.load %arg1[%c75] : memref<256xf32, #tpu.memory_space<smem>>
      %697 = vector.broadcast %696 : f32 to vector<16x128xf32>
      %698 = arith.mulf %697, %600 : vector<16x128xf32>
      %699 = arith.addf %695, %698 : vector<16x128xf32>
      %c76 = arith.constant 76 : index
      %700 = memref.load %arg1[%c76] : memref<256xf32, #tpu.memory_space<smem>>
      %701 = vector.broadcast %700 : f32 to vector<16x128xf32>
      %702 = arith.mulf %701, %603 : vector<16x128xf32>
      %703 = arith.addf %699, %702 : vector<16x128xf32>
      %c77 = arith.constant 77 : index
      %704 = memref.load %arg1[%c77] : memref<256xf32, #tpu.memory_space<smem>>
      %705 = vector.broadcast %704 : f32 to vector<16x128xf32>
      %706 = arith.mulf %705, %606 : vector<16x128xf32>
      %707 = arith.addf %703, %706 : vector<16x128xf32>
      %c209 = arith.constant 209 : index
      %708 = memref.load %arg1[%c209] : memref<256xf32, #tpu.memory_space<smem>>
      %709 = vector.broadcast %708 : f32 to vector<16x128xf32>
      %710 = arith.addf %707, %709 : vector<16x128xf32>
      %cst_130 = arith.constant 0.000000e+00 : f32
      %711 = vector.broadcast %cst_130 : f32 to vector<16x128xf32>
      %712 = arith.minimumf %710, %711 : vector<16x128xf32>
      %713 = math.exp %712 : vector<16x128xf32>
      %cst_131 = arith.constant 1.000000e+00 : f32
      %714 = vector.broadcast %cst_131 : f32 to vector<16x128xf32>
      %715 = arith.subf %713, %714 : vector<16x128xf32>
      %cst_132 = arith.constant 1.75809932 : f32
      %716 = vector.broadcast %cst_132 : f32 to vector<16x128xf32>
      %717 = arith.mulf %716, %715 : vector<16x128xf32>
      %cst_133 = arith.constant 0.000000e+00 : f32
      %718 = vector.broadcast %cst_133 : f32 to vector<16x128xf32>
      %719 = arith.cmpf ogt, %710, %718 : vector<16x128xf32>
      %cst_134 = arith.constant 1.05070102 : f32
      %720 = vector.broadcast %cst_134 : f32 to vector<16x128xf32>
      %721 = arith.mulf %720, %710 : vector<16x128xf32>
      %722 = arith.select %719, %721, %717 : vector<16x128xi1>, vector<16x128xf32>
      %723 = arith.addf %595, %722 : vector<16x128xf32>
      %c8_i32 = arith.constant 8 : i32
      %724 = vector.broadcast %c8_i32 : i32 to vector<16x128xi32>
      %725 = arith.cmpi slt, %3, %724 : vector<16x128xi32>
      %c8_i32_135 = arith.constant 8 : i32
      %726 = tpu.dynamic_rotate %645 by %c8_i32_135 dim 1 : vector<16x128xf32>, i32 -> vector<16x128xf32>
      %cst_136 = arith.constant 0.000000e+00 : f32
      %727 = vector.broadcast %cst_136 : f32 to vector<16x128xf32>
      %728 = arith.select %725, %727, %726 : vector<16x128xi1>, vector<16x128xf32>
      %c8_i32_137 = arith.constant 8 : i32
      %729 = tpu.dynamic_rotate %684 by %c8_i32_137 dim 1 : vector<16x128xf32>, i32 -> vector<16x128xf32>
      %cst_138 = arith.constant 0.000000e+00 : f32
      %730 = vector.broadcast %cst_138 : f32 to vector<16x128xf32>
      %731 = arith.select %725, %730, %729 : vector<16x128xi1>, vector<16x128xf32>
      %c8_i32_139 = arith.constant 8 : i32
      %732 = tpu.dynamic_rotate %723 by %c8_i32_139 dim 1 : vector<16x128xf32>, i32 -> vector<16x128xf32>
      %cst_140 = arith.constant 0.000000e+00 : f32
      %733 = vector.broadcast %cst_140 : f32 to vector<16x128xf32>
      %734 = arith.select %725, %733, %732 : vector<16x128xi1>, vector<16x128xf32>
      %c150 = arith.constant 150 : index
      %735 = memref.load %arg1[%c150] : memref<256xf32, #tpu.memory_space<smem>>
      %736 = vector.broadcast %735 : f32 to vector<16x128xf32>
      %737 = arith.mulf %736, %645 : vector<16x128xf32>
      %c151 = arith.constant 151 : index
      %738 = memref.load %arg1[%c151] : memref<256xf32, #tpu.memory_space<smem>>
      %739 = vector.broadcast %738 : f32 to vector<16x128xf32>
      %740 = arith.mulf %739, %684 : vector<16x128xf32>
      %741 = arith.addf %737, %740 : vector<16x128xf32>
      %c152 = arith.constant 152 : index
      %742 = memref.load %arg1[%c152] : memref<256xf32, #tpu.memory_space<smem>>
      %743 = vector.broadcast %742 : f32 to vector<16x128xf32>
      %744 = arith.mulf %743, %723 : vector<16x128xf32>
      %745 = arith.addf %741, %744 : vector<16x128xf32>
      %c78 = arith.constant 78 : index
      %746 = memref.load %arg1[%c78] : memref<256xf32, #tpu.memory_space<smem>>
      %747 = vector.broadcast %746 : f32 to vector<16x128xf32>
      %748 = arith.mulf %747, %728 : vector<16x128xf32>
      %749 = arith.addf %745, %748 : vector<16x128xf32>
      %c79 = arith.constant 79 : index
      %750 = memref.load %arg1[%c79] : memref<256xf32, #tpu.memory_space<smem>>
      %751 = vector.broadcast %750 : f32 to vector<16x128xf32>
      %752 = arith.mulf %751, %731 : vector<16x128xf32>
      %753 = arith.addf %749, %752 : vector<16x128xf32>
      %c80 = arith.constant 80 : index
      %754 = memref.load %arg1[%c80] : memref<256xf32, #tpu.memory_space<smem>>
      %755 = vector.broadcast %754 : f32 to vector<16x128xf32>
      %756 = arith.mulf %755, %734 : vector<16x128xf32>
      %757 = arith.addf %753, %756 : vector<16x128xf32>
      %c210 = arith.constant 210 : index
      %758 = memref.load %arg1[%c210] : memref<256xf32, #tpu.memory_space<smem>>
      %759 = vector.broadcast %758 : f32 to vector<16x128xf32>
      %760 = arith.addf %757, %759 : vector<16x128xf32>
      %cst_141 = arith.constant 0.000000e+00 : f32
      %761 = vector.broadcast %cst_141 : f32 to vector<16x128xf32>
      %762 = arith.minimumf %760, %761 : vector<16x128xf32>
      %763 = math.exp %762 : vector<16x128xf32>
      %cst_142 = arith.constant 1.000000e+00 : f32
      %764 = vector.broadcast %cst_142 : f32 to vector<16x128xf32>
      %765 = arith.subf %763, %764 : vector<16x128xf32>
      %cst_143 = arith.constant 1.75809932 : f32
      %766 = vector.broadcast %cst_143 : f32 to vector<16x128xf32>
      %767 = arith.mulf %766, %765 : vector<16x128xf32>
      %cst_144 = arith.constant 0.000000e+00 : f32
      %768 = vector.broadcast %cst_144 : f32 to vector<16x128xf32>
      %769 = arith.cmpf ogt, %760, %768 : vector<16x128xf32>
      %cst_145 = arith.constant 1.05070102 : f32
      %770 = vector.broadcast %cst_145 : f32 to vector<16x128xf32>
      %771 = arith.mulf %770, %760 : vector<16x128xf32>
      %772 = arith.select %769, %771, %767 : vector<16x128xi1>, vector<16x128xf32>
      %773 = arith.addf %645, %772 : vector<16x128xf32>
      %c153 = arith.constant 153 : index
      %774 = memref.load %arg1[%c153] : memref<256xf32, #tpu.memory_space<smem>>
      %775 = vector.broadcast %774 : f32 to vector<16x128xf32>
      %776 = arith.mulf %775, %645 : vector<16x128xf32>
      %c154 = arith.constant 154 : index
      %777 = memref.load %arg1[%c154] : memref<256xf32, #tpu.memory_space<smem>>
      %778 = vector.broadcast %777 : f32 to vector<16x128xf32>
      %779 = arith.mulf %778, %684 : vector<16x128xf32>
      %780 = arith.addf %776, %779 : vector<16x128xf32>
      %c155 = arith.constant 155 : index
      %781 = memref.load %arg1[%c155] : memref<256xf32, #tpu.memory_space<smem>>
      %782 = vector.broadcast %781 : f32 to vector<16x128xf32>
      %783 = arith.mulf %782, %723 : vector<16x128xf32>
      %784 = arith.addf %780, %783 : vector<16x128xf32>
      %c81 = arith.constant 81 : index
      %785 = memref.load %arg1[%c81] : memref<256xf32, #tpu.memory_space<smem>>
      %786 = vector.broadcast %785 : f32 to vector<16x128xf32>
      %787 = arith.mulf %786, %728 : vector<16x128xf32>
      %788 = arith.addf %784, %787 : vector<16x128xf32>
      %c82 = arith.constant 82 : index
      %789 = memref.load %arg1[%c82] : memref<256xf32, #tpu.memory_space<smem>>
      %790 = vector.broadcast %789 : f32 to vector<16x128xf32>
      %791 = arith.mulf %790, %731 : vector<16x128xf32>
      %792 = arith.addf %788, %791 : vector<16x128xf32>
      %c83 = arith.constant 83 : index
      %793 = memref.load %arg1[%c83] : memref<256xf32, #tpu.memory_space<smem>>
      %794 = vector.broadcast %793 : f32 to vector<16x128xf32>
      %795 = arith.mulf %794, %734 : vector<16x128xf32>
      %796 = arith.addf %792, %795 : vector<16x128xf32>
      %c211 = arith.constant 211 : index
      %797 = memref.load %arg1[%c211] : memref<256xf32, #tpu.memory_space<smem>>
      %798 = vector.broadcast %797 : f32 to vector<16x128xf32>
      %799 = arith.addf %796, %798 : vector<16x128xf32>
      %cst_146 = arith.constant 0.000000e+00 : f32
      %800 = vector.broadcast %cst_146 : f32 to vector<16x128xf32>
      %801 = arith.minimumf %799, %800 : vector<16x128xf32>
      %802 = math.exp %801 : vector<16x128xf32>
      %cst_147 = arith.constant 1.000000e+00 : f32
      %803 = vector.broadcast %cst_147 : f32 to vector<16x128xf32>
      %804 = arith.subf %802, %803 : vector<16x128xf32>
      %cst_148 = arith.constant 1.75809932 : f32
      %805 = vector.broadcast %cst_148 : f32 to vector<16x128xf32>
      %806 = arith.mulf %805, %804 : vector<16x128xf32>
      %cst_149 = arith.constant 0.000000e+00 : f32
      %807 = vector.broadcast %cst_149 : f32 to vector<16x128xf32>
      %808 = arith.cmpf ogt, %799, %807 : vector<16x128xf32>
      %cst_150 = arith.constant 1.05070102 : f32
      %809 = vector.broadcast %cst_150 : f32 to vector<16x128xf32>
      %810 = arith.mulf %809, %799 : vector<16x128xf32>
      %811 = arith.select %808, %810, %806 : vector<16x128xi1>, vector<16x128xf32>
      %812 = arith.addf %684, %811 : vector<16x128xf32>
      %c156 = arith.constant 156 : index
      %813 = memref.load %arg1[%c156] : memref<256xf32, #tpu.memory_space<smem>>
      %814 = vector.broadcast %813 : f32 to vector<16x128xf32>
      %815 = arith.mulf %814, %645 : vector<16x128xf32>
      %c157 = arith.constant 157 : index
      %816 = memref.load %arg1[%c157] : memref<256xf32, #tpu.memory_space<smem>>
      %817 = vector.broadcast %816 : f32 to vector<16x128xf32>
      %818 = arith.mulf %817, %684 : vector<16x128xf32>
      %819 = arith.addf %815, %818 : vector<16x128xf32>
      %c158 = arith.constant 158 : index
      %820 = memref.load %arg1[%c158] : memref<256xf32, #tpu.memory_space<smem>>
      %821 = vector.broadcast %820 : f32 to vector<16x128xf32>
      %822 = arith.mulf %821, %723 : vector<16x128xf32>
      %823 = arith.addf %819, %822 : vector<16x128xf32>
      %c84 = arith.constant 84 : index
      %824 = memref.load %arg1[%c84] : memref<256xf32, #tpu.memory_space<smem>>
      %825 = vector.broadcast %824 : f32 to vector<16x128xf32>
      %826 = arith.mulf %825, %728 : vector<16x128xf32>
      %827 = arith.addf %823, %826 : vector<16x128xf32>
      %c85 = arith.constant 85 : index
      %828 = memref.load %arg1[%c85] : memref<256xf32, #tpu.memory_space<smem>>
      %829 = vector.broadcast %828 : f32 to vector<16x128xf32>
      %830 = arith.mulf %829, %731 : vector<16x128xf32>
      %831 = arith.addf %827, %830 : vector<16x128xf32>
      %c86 = arith.constant 86 : index
      %832 = memref.load %arg1[%c86] : memref<256xf32, #tpu.memory_space<smem>>
      %833 = vector.broadcast %832 : f32 to vector<16x128xf32>
      %834 = arith.mulf %833, %734 : vector<16x128xf32>
      %835 = arith.addf %831, %834 : vector<16x128xf32>
      %c212 = arith.constant 212 : index
      %836 = memref.load %arg1[%c212] : memref<256xf32, #tpu.memory_space<smem>>
      %837 = vector.broadcast %836 : f32 to vector<16x128xf32>
      %838 = arith.addf %835, %837 : vector<16x128xf32>
      %cst_151 = arith.constant 0.000000e+00 : f32
      %839 = vector.broadcast %cst_151 : f32 to vector<16x128xf32>
      %840 = arith.minimumf %838, %839 : vector<16x128xf32>
      %841 = math.exp %840 : vector<16x128xf32>
      %cst_152 = arith.constant 1.000000e+00 : f32
      %842 = vector.broadcast %cst_152 : f32 to vector<16x128xf32>
      %843 = arith.subf %841, %842 : vector<16x128xf32>
      %cst_153 = arith.constant 1.75809932 : f32
      %844 = vector.broadcast %cst_153 : f32 to vector<16x128xf32>
      %845 = arith.mulf %844, %843 : vector<16x128xf32>
      %cst_154 = arith.constant 0.000000e+00 : f32
      %846 = vector.broadcast %cst_154 : f32 to vector<16x128xf32>
      %847 = arith.cmpf ogt, %838, %846 : vector<16x128xf32>
      %cst_155 = arith.constant 1.05070102 : f32
      %848 = vector.broadcast %cst_155 : f32 to vector<16x128xf32>
      %849 = arith.mulf %848, %838 : vector<16x128xf32>
      %850 = arith.select %847, %849, %845 : vector<16x128xi1>, vector<16x128xf32>
      %851 = arith.addf %723, %850 : vector<16x128xf32>
      %c16_i32_156 = arith.constant 16 : i32
      %852 = vector.broadcast %c16_i32_156 : i32 to vector<16x128xi32>
      %853 = arith.cmpi slt, %3, %852 : vector<16x128xi32>
      %c16_i32_157 = arith.constant 16 : i32
      %854 = tpu.dynamic_rotate %773 by %c16_i32_157 dim 1 : vector<16x128xf32>, i32 -> vector<16x128xf32>
      %cst_158 = arith.constant 0.000000e+00 : f32
      %855 = vector.broadcast %cst_158 : f32 to vector<16x128xf32>
      %856 = arith.select %853, %855, %854 : vector<16x128xi1>, vector<16x128xf32>
      %c16_i32_159 = arith.constant 16 : i32
      %857 = tpu.dynamic_rotate %812 by %c16_i32_159 dim 1 : vector<16x128xf32>, i32 -> vector<16x128xf32>
      %cst_160 = arith.constant 0.000000e+00 : f32
      %858 = vector.broadcast %cst_160 : f32 to vector<16x128xf32>
      %859 = arith.select %853, %858, %857 : vector<16x128xi1>, vector<16x128xf32>
      %c16_i32_161 = arith.constant 16 : i32
      %860 = tpu.dynamic_rotate %851 by %c16_i32_161 dim 1 : vector<16x128xf32>, i32 -> vector<16x128xf32>
      %cst_162 = arith.constant 0.000000e+00 : f32
      %861 = vector.broadcast %cst_162 : f32 to vector<16x128xf32>
      %862 = arith.select %853, %861, %860 : vector<16x128xi1>, vector<16x128xf32>
      %c159 = arith.constant 159 : index
      %863 = memref.load %arg1[%c159] : memref<256xf32, #tpu.memory_space<smem>>
      %864 = vector.broadcast %863 : f32 to vector<16x128xf32>
      %865 = arith.mulf %864, %773 : vector<16x128xf32>
      %c160 = arith.constant 160 : index
      %866 = memref.load %arg1[%c160] : memref<256xf32, #tpu.memory_space<smem>>
      %867 = vector.broadcast %866 : f32 to vector<16x128xf32>
      %868 = arith.mulf %867, %812 : vector<16x128xf32>
      %869 = arith.addf %865, %868 : vector<16x128xf32>
      %c161 = arith.constant 161 : index
      %870 = memref.load %arg1[%c161] : memref<256xf32, #tpu.memory_space<smem>>
      %871 = vector.broadcast %870 : f32 to vector<16x128xf32>
      %872 = arith.mulf %871, %851 : vector<16x128xf32>
      %873 = arith.addf %869, %872 : vector<16x128xf32>
      %c87 = arith.constant 87 : index
      %874 = memref.load %arg1[%c87] : memref<256xf32, #tpu.memory_space<smem>>
      %875 = vector.broadcast %874 : f32 to vector<16x128xf32>
      %876 = arith.mulf %875, %856 : vector<16x128xf32>
      %877 = arith.addf %873, %876 : vector<16x128xf32>
      %c88 = arith.constant 88 : index
      %878 = memref.load %arg1[%c88] : memref<256xf32, #tpu.memory_space<smem>>
      %879 = vector.broadcast %878 : f32 to vector<16x128xf32>
      %880 = arith.mulf %879, %859 : vector<16x128xf32>
      %881 = arith.addf %877, %880 : vector<16x128xf32>
      %c89 = arith.constant 89 : index
      %882 = memref.load %arg1[%c89] : memref<256xf32, #tpu.memory_space<smem>>
      %883 = vector.broadcast %882 : f32 to vector<16x128xf32>
      %884 = arith.mulf %883, %862 : vector<16x128xf32>
      %885 = arith.addf %881, %884 : vector<16x128xf32>
      %c213 = arith.constant 213 : index
      %886 = memref.load %arg1[%c213] : memref<256xf32, #tpu.memory_space<smem>>
      %887 = vector.broadcast %886 : f32 to vector<16x128xf32>
      %888 = arith.addf %885, %887 : vector<16x128xf32>
      %cst_163 = arith.constant 0.000000e+00 : f32
      %889 = vector.broadcast %cst_163 : f32 to vector<16x128xf32>
      %890 = arith.minimumf %888, %889 : vector<16x128xf32>
      %891 = math.exp %890 : vector<16x128xf32>
      %cst_164 = arith.constant 1.000000e+00 : f32
      %892 = vector.broadcast %cst_164 : f32 to vector<16x128xf32>
      %893 = arith.subf %891, %892 : vector<16x128xf32>
      %cst_165 = arith.constant 1.75809932 : f32
      %894 = vector.broadcast %cst_165 : f32 to vector<16x128xf32>
      %895 = arith.mulf %894, %893 : vector<16x128xf32>
      %cst_166 = arith.constant 0.000000e+00 : f32
      %896 = vector.broadcast %cst_166 : f32 to vector<16x128xf32>
      %897 = arith.cmpf ogt, %888, %896 : vector<16x128xf32>
      %cst_167 = arith.constant 1.05070102 : f32
      %898 = vector.broadcast %cst_167 : f32 to vector<16x128xf32>
      %899 = arith.mulf %898, %888 : vector<16x128xf32>
      %900 = arith.select %897, %899, %895 : vector<16x128xi1>, vector<16x128xf32>
      %901 = arith.addf %773, %900 : vector<16x128xf32>
      %c162 = arith.constant 162 : index
      %902 = memref.load %arg1[%c162] : memref<256xf32, #tpu.memory_space<smem>>
      %903 = vector.broadcast %902 : f32 to vector<16x128xf32>
      %904 = arith.mulf %903, %773 : vector<16x128xf32>
      %c163 = arith.constant 163 : index
      %905 = memref.load %arg1[%c163] : memref<256xf32, #tpu.memory_space<smem>>
      %906 = vector.broadcast %905 : f32 to vector<16x128xf32>
      %907 = arith.mulf %906, %812 : vector<16x128xf32>
      %908 = arith.addf %904, %907 : vector<16x128xf32>
      %c164 = arith.constant 164 : index
      %909 = memref.load %arg1[%c164] : memref<256xf32, #tpu.memory_space<smem>>
      %910 = vector.broadcast %909 : f32 to vector<16x128xf32>
      %911 = arith.mulf %910, %851 : vector<16x128xf32>
      %912 = arith.addf %908, %911 : vector<16x128xf32>
      %c90 = arith.constant 90 : index
      %913 = memref.load %arg1[%c90] : memref<256xf32, #tpu.memory_space<smem>>
      %914 = vector.broadcast %913 : f32 to vector<16x128xf32>
      %915 = arith.mulf %914, %856 : vector<16x128xf32>
      %916 = arith.addf %912, %915 : vector<16x128xf32>
      %c91 = arith.constant 91 : index
      %917 = memref.load %arg1[%c91] : memref<256xf32, #tpu.memory_space<smem>>
      %918 = vector.broadcast %917 : f32 to vector<16x128xf32>
      %919 = arith.mulf %918, %859 : vector<16x128xf32>
      %920 = arith.addf %916, %919 : vector<16x128xf32>
      %c92 = arith.constant 92 : index
      %921 = memref.load %arg1[%c92] : memref<256xf32, #tpu.memory_space<smem>>
      %922 = vector.broadcast %921 : f32 to vector<16x128xf32>
      %923 = arith.mulf %922, %862 : vector<16x128xf32>
      %924 = arith.addf %920, %923 : vector<16x128xf32>
      %c214 = arith.constant 214 : index
      %925 = memref.load %arg1[%c214] : memref<256xf32, #tpu.memory_space<smem>>
      %926 = vector.broadcast %925 : f32 to vector<16x128xf32>
      %927 = arith.addf %924, %926 : vector<16x128xf32>
      %cst_168 = arith.constant 0.000000e+00 : f32
      %928 = vector.broadcast %cst_168 : f32 to vector<16x128xf32>
      %929 = arith.minimumf %927, %928 : vector<16x128xf32>
      %930 = math.exp %929 : vector<16x128xf32>
      %cst_169 = arith.constant 1.000000e+00 : f32
      %931 = vector.broadcast %cst_169 : f32 to vector<16x128xf32>
      %932 = arith.subf %930, %931 : vector<16x128xf32>
      %cst_170 = arith.constant 1.75809932 : f32
      %933 = vector.broadcast %cst_170 : f32 to vector<16x128xf32>
      %934 = arith.mulf %933, %932 : vector<16x128xf32>
      %cst_171 = arith.constant 0.000000e+00 : f32
      %935 = vector.broadcast %cst_171 : f32 to vector<16x128xf32>
      %936 = arith.cmpf ogt, %927, %935 : vector<16x128xf32>
      %cst_172 = arith.constant 1.05070102 : f32
      %937 = vector.broadcast %cst_172 : f32 to vector<16x128xf32>
      %938 = arith.mulf %937, %927 : vector<16x128xf32>
      %939 = arith.select %936, %938, %934 : vector<16x128xi1>, vector<16x128xf32>
      %940 = arith.addf %812, %939 : vector<16x128xf32>
      %c165 = arith.constant 165 : index
      %941 = memref.load %arg1[%c165] : memref<256xf32, #tpu.memory_space<smem>>
      %942 = vector.broadcast %941 : f32 to vector<16x128xf32>
      %943 = arith.mulf %942, %773 : vector<16x128xf32>
      %c166 = arith.constant 166 : index
      %944 = memref.load %arg1[%c166] : memref<256xf32, #tpu.memory_space<smem>>
      %945 = vector.broadcast %944 : f32 to vector<16x128xf32>
      %946 = arith.mulf %945, %812 : vector<16x128xf32>
      %947 = arith.addf %943, %946 : vector<16x128xf32>
      %c167 = arith.constant 167 : index
      %948 = memref.load %arg1[%c167] : memref<256xf32, #tpu.memory_space<smem>>
      %949 = vector.broadcast %948 : f32 to vector<16x128xf32>
      %950 = arith.mulf %949, %851 : vector<16x128xf32>
      %951 = arith.addf %947, %950 : vector<16x128xf32>
      %c93 = arith.constant 93 : index
      %952 = memref.load %arg1[%c93] : memref<256xf32, #tpu.memory_space<smem>>
      %953 = vector.broadcast %952 : f32 to vector<16x128xf32>
      %954 = arith.mulf %953, %856 : vector<16x128xf32>
      %955 = arith.addf %951, %954 : vector<16x128xf32>
      %c94 = arith.constant 94 : index
      %956 = memref.load %arg1[%c94] : memref<256xf32, #tpu.memory_space<smem>>
      %957 = vector.broadcast %956 : f32 to vector<16x128xf32>
      %958 = arith.mulf %957, %859 : vector<16x128xf32>
      %959 = arith.addf %955, %958 : vector<16x128xf32>
      %c95 = arith.constant 95 : index
      %960 = memref.load %arg1[%c95] : memref<256xf32, #tpu.memory_space<smem>>
      %961 = vector.broadcast %960 : f32 to vector<16x128xf32>
      %962 = arith.mulf %961, %862 : vector<16x128xf32>
      %963 = arith.addf %959, %962 : vector<16x128xf32>
      %c215 = arith.constant 215 : index
      %964 = memref.load %arg1[%c215] : memref<256xf32, #tpu.memory_space<smem>>
      %965 = vector.broadcast %964 : f32 to vector<16x128xf32>
      %966 = arith.addf %963, %965 : vector<16x128xf32>
      %cst_173 = arith.constant 0.000000e+00 : f32
      %967 = vector.broadcast %cst_173 : f32 to vector<16x128xf32>
      %968 = arith.minimumf %966, %967 : vector<16x128xf32>
      %969 = math.exp %968 : vector<16x128xf32>
      %cst_174 = arith.constant 1.000000e+00 : f32
      %970 = vector.broadcast %cst_174 : f32 to vector<16x128xf32>
      %971 = arith.subf %969, %970 : vector<16x128xf32>
      %cst_175 = arith.constant 1.75809932 : f32
      %972 = vector.broadcast %cst_175 : f32 to vector<16x128xf32>
      %973 = arith.mulf %972, %971 : vector<16x128xf32>
      %cst_176 = arith.constant 0.000000e+00 : f32
      %974 = vector.broadcast %cst_176 : f32 to vector<16x128xf32>
      %975 = arith.cmpf ogt, %966, %974 : vector<16x128xf32>
      %cst_177 = arith.constant 1.05070102 : f32
      %976 = vector.broadcast %cst_177 : f32 to vector<16x128xf32>
      %977 = arith.mulf %976, %966 : vector<16x128xf32>
      %978 = arith.select %975, %977, %973 : vector<16x128xi1>, vector<16x128xf32>
      %979 = arith.addf %851, %978 : vector<16x128xf32>
      %c32_i32 = arith.constant 32 : i32
      %980 = vector.broadcast %c32_i32 : i32 to vector<16x128xi32>
      %981 = arith.cmpi slt, %3, %980 : vector<16x128xi32>
      %c32_i32_178 = arith.constant 32 : i32
      %982 = tpu.dynamic_rotate %901 by %c32_i32_178 dim 1 : vector<16x128xf32>, i32 -> vector<16x128xf32>
      %cst_179 = arith.constant 0.000000e+00 : f32
      %983 = vector.broadcast %cst_179 : f32 to vector<16x128xf32>
      %984 = arith.select %981, %983, %982 : vector<16x128xi1>, vector<16x128xf32>
      %c32_i32_180 = arith.constant 32 : i32
      %985 = tpu.dynamic_rotate %940 by %c32_i32_180 dim 1 : vector<16x128xf32>, i32 -> vector<16x128xf32>
      %cst_181 = arith.constant 0.000000e+00 : f32
      %986 = vector.broadcast %cst_181 : f32 to vector<16x128xf32>
      %987 = arith.select %981, %986, %985 : vector<16x128xi1>, vector<16x128xf32>
      %c32_i32_182 = arith.constant 32 : i32
      %988 = tpu.dynamic_rotate %979 by %c32_i32_182 dim 1 : vector<16x128xf32>, i32 -> vector<16x128xf32>
      %cst_183 = arith.constant 0.000000e+00 : f32
      %989 = vector.broadcast %cst_183 : f32 to vector<16x128xf32>
      %990 = arith.select %981, %989, %988 : vector<16x128xi1>, vector<16x128xf32>
      %c168 = arith.constant 168 : index
      %991 = memref.load %arg1[%c168] : memref<256xf32, #tpu.memory_space<smem>>
      %992 = vector.broadcast %991 : f32 to vector<16x128xf32>
      %993 = arith.mulf %992, %901 : vector<16x128xf32>
      %c169 = arith.constant 169 : index
      %994 = memref.load %arg1[%c169] : memref<256xf32, #tpu.memory_space<smem>>
      %995 = vector.broadcast %994 : f32 to vector<16x128xf32>
      %996 = arith.mulf %995, %940 : vector<16x128xf32>
      %997 = arith.addf %993, %996 : vector<16x128xf32>
      %c170 = arith.constant 170 : index
      %998 = memref.load %arg1[%c170] : memref<256xf32, #tpu.memory_space<smem>>
      %999 = vector.broadcast %998 : f32 to vector<16x128xf32>
      %1000 = arith.mulf %999, %979 : vector<16x128xf32>
      %1001 = arith.addf %997, %1000 : vector<16x128xf32>
      %c96 = arith.constant 96 : index
      %1002 = memref.load %arg1[%c96] : memref<256xf32, #tpu.memory_space<smem>>
      %1003 = vector.broadcast %1002 : f32 to vector<16x128xf32>
      %1004 = arith.mulf %1003, %984 : vector<16x128xf32>
      %1005 = arith.addf %1001, %1004 : vector<16x128xf32>
      %c97 = arith.constant 97 : index
      %1006 = memref.load %arg1[%c97] : memref<256xf32, #tpu.memory_space<smem>>
      %1007 = vector.broadcast %1006 : f32 to vector<16x128xf32>
      %1008 = arith.mulf %1007, %987 : vector<16x128xf32>
      %1009 = arith.addf %1005, %1008 : vector<16x128xf32>
      %c98 = arith.constant 98 : index
      %1010 = memref.load %arg1[%c98] : memref<256xf32, #tpu.memory_space<smem>>
      %1011 = vector.broadcast %1010 : f32 to vector<16x128xf32>
      %1012 = arith.mulf %1011, %990 : vector<16x128xf32>
      %1013 = arith.addf %1009, %1012 : vector<16x128xf32>
      %c216 = arith.constant 216 : index
      %1014 = memref.load %arg1[%c216] : memref<256xf32, #tpu.memory_space<smem>>
      %1015 = vector.broadcast %1014 : f32 to vector<16x128xf32>
      %1016 = arith.addf %1013, %1015 : vector<16x128xf32>
      %cst_184 = arith.constant 0.000000e+00 : f32
      %1017 = vector.broadcast %cst_184 : f32 to vector<16x128xf32>
      %1018 = arith.minimumf %1016, %1017 : vector<16x128xf32>
      %1019 = math.exp %1018 : vector<16x128xf32>
      %cst_185 = arith.constant 1.000000e+00 : f32
      %1020 = vector.broadcast %cst_185 : f32 to vector<16x128xf32>
      %1021 = arith.subf %1019, %1020 : vector<16x128xf32>
      %cst_186 = arith.constant 1.75809932 : f32
      %1022 = vector.broadcast %cst_186 : f32 to vector<16x128xf32>
      %1023 = arith.mulf %1022, %1021 : vector<16x128xf32>
      %cst_187 = arith.constant 0.000000e+00 : f32
      %1024 = vector.broadcast %cst_187 : f32 to vector<16x128xf32>
      %1025 = arith.cmpf ogt, %1016, %1024 : vector<16x128xf32>
      %cst_188 = arith.constant 1.05070102 : f32
      %1026 = vector.broadcast %cst_188 : f32 to vector<16x128xf32>
      %1027 = arith.mulf %1026, %1016 : vector<16x128xf32>
      %1028 = arith.select %1025, %1027, %1023 : vector<16x128xi1>, vector<16x128xf32>
      %1029 = arith.addf %901, %1028 : vector<16x128xf32>
      %c171 = arith.constant 171 : index
      %1030 = memref.load %arg1[%c171] : memref<256xf32, #tpu.memory_space<smem>>
      %1031 = vector.broadcast %1030 : f32 to vector<16x128xf32>
      %1032 = arith.mulf %1031, %901 : vector<16x128xf32>
      %c172 = arith.constant 172 : index
      %1033 = memref.load %arg1[%c172] : memref<256xf32, #tpu.memory_space<smem>>
      %1034 = vector.broadcast %1033 : f32 to vector<16x128xf32>
      %1035 = arith.mulf %1034, %940 : vector<16x128xf32>
      %1036 = arith.addf %1032, %1035 : vector<16x128xf32>
      %c173 = arith.constant 173 : index
      %1037 = memref.load %arg1[%c173] : memref<256xf32, #tpu.memory_space<smem>>
      %1038 = vector.broadcast %1037 : f32 to vector<16x128xf32>
      %1039 = arith.mulf %1038, %979 : vector<16x128xf32>
      %1040 = arith.addf %1036, %1039 : vector<16x128xf32>
      %c99 = arith.constant 99 : index
      %1041 = memref.load %arg1[%c99] : memref<256xf32, #tpu.memory_space<smem>>
      %1042 = vector.broadcast %1041 : f32 to vector<16x128xf32>
      %1043 = arith.mulf %1042, %984 : vector<16x128xf32>
      %1044 = arith.addf %1040, %1043 : vector<16x128xf32>
      %c100 = arith.constant 100 : index
      %1045 = memref.load %arg1[%c100] : memref<256xf32, #tpu.memory_space<smem>>
      %1046 = vector.broadcast %1045 : f32 to vector<16x128xf32>
      %1047 = arith.mulf %1046, %987 : vector<16x128xf32>
      %1048 = arith.addf %1044, %1047 : vector<16x128xf32>
      %c101 = arith.constant 101 : index
      %1049 = memref.load %arg1[%c101] : memref<256xf32, #tpu.memory_space<smem>>
      %1050 = vector.broadcast %1049 : f32 to vector<16x128xf32>
      %1051 = arith.mulf %1050, %990 : vector<16x128xf32>
      %1052 = arith.addf %1048, %1051 : vector<16x128xf32>
      %c217 = arith.constant 217 : index
      %1053 = memref.load %arg1[%c217] : memref<256xf32, #tpu.memory_space<smem>>
      %1054 = vector.broadcast %1053 : f32 to vector<16x128xf32>
      %1055 = arith.addf %1052, %1054 : vector<16x128xf32>
      %cst_189 = arith.constant 0.000000e+00 : f32
      %1056 = vector.broadcast %cst_189 : f32 to vector<16x128xf32>
      %1057 = arith.minimumf %1055, %1056 : vector<16x128xf32>
      %1058 = math.exp %1057 : vector<16x128xf32>
      %cst_190 = arith.constant 1.000000e+00 : f32
      %1059 = vector.broadcast %cst_190 : f32 to vector<16x128xf32>
      %1060 = arith.subf %1058, %1059 : vector<16x128xf32>
      %cst_191 = arith.constant 1.75809932 : f32
      %1061 = vector.broadcast %cst_191 : f32 to vector<16x128xf32>
      %1062 = arith.mulf %1061, %1060 : vector<16x128xf32>
      %cst_192 = arith.constant 0.000000e+00 : f32
      %1063 = vector.broadcast %cst_192 : f32 to vector<16x128xf32>
      %1064 = arith.cmpf ogt, %1055, %1063 : vector<16x128xf32>
      %cst_193 = arith.constant 1.05070102 : f32
      %1065 = vector.broadcast %cst_193 : f32 to vector<16x128xf32>
      %1066 = arith.mulf %1065, %1055 : vector<16x128xf32>
      %1067 = arith.select %1064, %1066, %1062 : vector<16x128xi1>, vector<16x128xf32>
      %1068 = arith.addf %940, %1067 : vector<16x128xf32>
      %c174 = arith.constant 174 : index
      %1069 = memref.load %arg1[%c174] : memref<256xf32, #tpu.memory_space<smem>>
      %1070 = vector.broadcast %1069 : f32 to vector<16x128xf32>
      %1071 = arith.mulf %1070, %901 : vector<16x128xf32>
      %c175 = arith.constant 175 : index
      %1072 = memref.load %arg1[%c175] : memref<256xf32, #tpu.memory_space<smem>>
      %1073 = vector.broadcast %1072 : f32 to vector<16x128xf32>
      %1074 = arith.mulf %1073, %940 : vector<16x128xf32>
      %1075 = arith.addf %1071, %1074 : vector<16x128xf32>
      %c176 = arith.constant 176 : index
      %1076 = memref.load %arg1[%c176] : memref<256xf32, #tpu.memory_space<smem>>
      %1077 = vector.broadcast %1076 : f32 to vector<16x128xf32>
      %1078 = arith.mulf %1077, %979 : vector<16x128xf32>
      %1079 = arith.addf %1075, %1078 : vector<16x128xf32>
      %c102 = arith.constant 102 : index
      %1080 = memref.load %arg1[%c102] : memref<256xf32, #tpu.memory_space<smem>>
      %1081 = vector.broadcast %1080 : f32 to vector<16x128xf32>
      %1082 = arith.mulf %1081, %984 : vector<16x128xf32>
      %1083 = arith.addf %1079, %1082 : vector<16x128xf32>
      %c103 = arith.constant 103 : index
      %1084 = memref.load %arg1[%c103] : memref<256xf32, #tpu.memory_space<smem>>
      %1085 = vector.broadcast %1084 : f32 to vector<16x128xf32>
      %1086 = arith.mulf %1085, %987 : vector<16x128xf32>
      %1087 = arith.addf %1083, %1086 : vector<16x128xf32>
      %c104 = arith.constant 104 : index
      %1088 = memref.load %arg1[%c104] : memref<256xf32, #tpu.memory_space<smem>>
      %1089 = vector.broadcast %1088 : f32 to vector<16x128xf32>
      %1090 = arith.mulf %1089, %990 : vector<16x128xf32>
      %1091 = arith.addf %1087, %1090 : vector<16x128xf32>
      %c218 = arith.constant 218 : index
      %1092 = memref.load %arg1[%c218] : memref<256xf32, #tpu.memory_space<smem>>
      %1093 = vector.broadcast %1092 : f32 to vector<16x128xf32>
      %1094 = arith.addf %1091, %1093 : vector<16x128xf32>
      %cst_194 = arith.constant 0.000000e+00 : f32
      %1095 = vector.broadcast %cst_194 : f32 to vector<16x128xf32>
      %1096 = arith.minimumf %1094, %1095 : vector<16x128xf32>
      %1097 = math.exp %1096 : vector<16x128xf32>
      %cst_195 = arith.constant 1.000000e+00 : f32
      %1098 = vector.broadcast %cst_195 : f32 to vector<16x128xf32>
      %1099 = arith.subf %1097, %1098 : vector<16x128xf32>
      %cst_196 = arith.constant 1.75809932 : f32
      %1100 = vector.broadcast %cst_196 : f32 to vector<16x128xf32>
      %1101 = arith.mulf %1100, %1099 : vector<16x128xf32>
      %cst_197 = arith.constant 0.000000e+00 : f32
      %1102 = vector.broadcast %cst_197 : f32 to vector<16x128xf32>
      %1103 = arith.cmpf ogt, %1094, %1102 : vector<16x128xf32>
      %cst_198 = arith.constant 1.05070102 : f32
      %1104 = vector.broadcast %cst_198 : f32 to vector<16x128xf32>
      %1105 = arith.mulf %1104, %1094 : vector<16x128xf32>
      %1106 = arith.select %1103, %1105, %1101 : vector<16x128xi1>, vector<16x128xf32>
      %1107 = arith.addf %979, %1106 : vector<16x128xf32>
      %c64_i32 = arith.constant 64 : i32
      %1108 = vector.broadcast %c64_i32 : i32 to vector<16x128xi32>
      %1109 = arith.cmpi slt, %3, %1108 : vector<16x128xi32>
      %c64_i32_199 = arith.constant 64 : i32
      %1110 = tpu.dynamic_rotate %1029 by %c64_i32_199 dim 1 : vector<16x128xf32>, i32 -> vector<16x128xf32>
      %cst_200 = arith.constant 0.000000e+00 : f32
      %1111 = vector.broadcast %cst_200 : f32 to vector<16x128xf32>
      %1112 = arith.select %1109, %1111, %1110 : vector<16x128xi1>, vector<16x128xf32>
      %c64_i32_201 = arith.constant 64 : i32
      %1113 = tpu.dynamic_rotate %1068 by %c64_i32_201 dim 1 : vector<16x128xf32>, i32 -> vector<16x128xf32>
      %cst_202 = arith.constant 0.000000e+00 : f32
      %1114 = vector.broadcast %cst_202 : f32 to vector<16x128xf32>
      %1115 = arith.select %1109, %1114, %1113 : vector<16x128xi1>, vector<16x128xf32>
      %c64_i32_203 = arith.constant 64 : i32
      %1116 = tpu.dynamic_rotate %1107 by %c64_i32_203 dim 1 : vector<16x128xf32>, i32 -> vector<16x128xf32>
      %cst_204 = arith.constant 0.000000e+00 : f32
      %1117 = vector.broadcast %cst_204 : f32 to vector<16x128xf32>
      %1118 = arith.select %1109, %1117, %1116 : vector<16x128xi1>, vector<16x128xf32>
      %c177 = arith.constant 177 : index
      %1119 = memref.load %arg1[%c177] : memref<256xf32, #tpu.memory_space<smem>>
      %1120 = vector.broadcast %1119 : f32 to vector<16x128xf32>
      %1121 = arith.mulf %1120, %1029 : vector<16x128xf32>
      %c178 = arith.constant 178 : index
      %1122 = memref.load %arg1[%c178] : memref<256xf32, #tpu.memory_space<smem>>
      %1123 = vector.broadcast %1122 : f32 to vector<16x128xf32>
      %1124 = arith.mulf %1123, %1068 : vector<16x128xf32>
      %1125 = arith.addf %1121, %1124 : vector<16x128xf32>
      %c179 = arith.constant 179 : index
      %1126 = memref.load %arg1[%c179] : memref<256xf32, #tpu.memory_space<smem>>
      %1127 = vector.broadcast %1126 : f32 to vector<16x128xf32>
      %1128 = arith.mulf %1127, %1107 : vector<16x128xf32>
      %1129 = arith.addf %1125, %1128 : vector<16x128xf32>
      %c105 = arith.constant 105 : index
      %1130 = memref.load %arg1[%c105] : memref<256xf32, #tpu.memory_space<smem>>
      %1131 = vector.broadcast %1130 : f32 to vector<16x128xf32>
      %1132 = arith.mulf %1131, %1112 : vector<16x128xf32>
      %1133 = arith.addf %1129, %1132 : vector<16x128xf32>
      %c106 = arith.constant 106 : index
      %1134 = memref.load %arg1[%c106] : memref<256xf32, #tpu.memory_space<smem>>
      %1135 = vector.broadcast %1134 : f32 to vector<16x128xf32>
      %1136 = arith.mulf %1135, %1115 : vector<16x128xf32>
      %1137 = arith.addf %1133, %1136 : vector<16x128xf32>
      %c107 = arith.constant 107 : index
      %1138 = memref.load %arg1[%c107] : memref<256xf32, #tpu.memory_space<smem>>
      %1139 = vector.broadcast %1138 : f32 to vector<16x128xf32>
      %1140 = arith.mulf %1139, %1118 : vector<16x128xf32>
      %1141 = arith.addf %1137, %1140 : vector<16x128xf32>
      %c219 = arith.constant 219 : index
      %1142 = memref.load %arg1[%c219] : memref<256xf32, #tpu.memory_space<smem>>
      %1143 = vector.broadcast %1142 : f32 to vector<16x128xf32>
      %1144 = arith.addf %1141, %1143 : vector<16x128xf32>
      %cst_205 = arith.constant 0.000000e+00 : f32
      %1145 = vector.broadcast %cst_205 : f32 to vector<16x128xf32>
      %1146 = arith.minimumf %1144, %1145 : vector<16x128xf32>
      %1147 = math.exp %1146 : vector<16x128xf32>
      %cst_206 = arith.constant 1.000000e+00 : f32
      %1148 = vector.broadcast %cst_206 : f32 to vector<16x128xf32>
      %1149 = arith.subf %1147, %1148 : vector<16x128xf32>
      %cst_207 = arith.constant 1.75809932 : f32
      %1150 = vector.broadcast %cst_207 : f32 to vector<16x128xf32>
      %1151 = arith.mulf %1150, %1149 : vector<16x128xf32>
      %cst_208 = arith.constant 0.000000e+00 : f32
      %1152 = vector.broadcast %cst_208 : f32 to vector<16x128xf32>
      %1153 = arith.cmpf ogt, %1144, %1152 : vector<16x128xf32>
      %cst_209 = arith.constant 1.05070102 : f32
      %1154 = vector.broadcast %cst_209 : f32 to vector<16x128xf32>
      %1155 = arith.mulf %1154, %1144 : vector<16x128xf32>
      %1156 = arith.select %1153, %1155, %1151 : vector<16x128xi1>, vector<16x128xf32>
      %1157 = arith.addf %1029, %1156 : vector<16x128xf32>
      %c180 = arith.constant 180 : index
      %1158 = memref.load %arg1[%c180] : memref<256xf32, #tpu.memory_space<smem>>
      %1159 = vector.broadcast %1158 : f32 to vector<16x128xf32>
      %1160 = arith.mulf %1159, %1029 : vector<16x128xf32>
      %c181 = arith.constant 181 : index
      %1161 = memref.load %arg1[%c181] : memref<256xf32, #tpu.memory_space<smem>>
      %1162 = vector.broadcast %1161 : f32 to vector<16x128xf32>
      %1163 = arith.mulf %1162, %1068 : vector<16x128xf32>
      %1164 = arith.addf %1160, %1163 : vector<16x128xf32>
      %c182 = arith.constant 182 : index
      %1165 = memref.load %arg1[%c182] : memref<256xf32, #tpu.memory_space<smem>>
      %1166 = vector.broadcast %1165 : f32 to vector<16x128xf32>
      %1167 = arith.mulf %1166, %1107 : vector<16x128xf32>
      %1168 = arith.addf %1164, %1167 : vector<16x128xf32>
      %c108 = arith.constant 108 : index
      %1169 = memref.load %arg1[%c108] : memref<256xf32, #tpu.memory_space<smem>>
      %1170 = vector.broadcast %1169 : f32 to vector<16x128xf32>
      %1171 = arith.mulf %1170, %1112 : vector<16x128xf32>
      %1172 = arith.addf %1168, %1171 : vector<16x128xf32>
      %c109 = arith.constant 109 : index
      %1173 = memref.load %arg1[%c109] : memref<256xf32, #tpu.memory_space<smem>>
      %1174 = vector.broadcast %1173 : f32 to vector<16x128xf32>
      %1175 = arith.mulf %1174, %1115 : vector<16x128xf32>
      %1176 = arith.addf %1172, %1175 : vector<16x128xf32>
      %c110 = arith.constant 110 : index
      %1177 = memref.load %arg1[%c110] : memref<256xf32, #tpu.memory_space<smem>>
      %1178 = vector.broadcast %1177 : f32 to vector<16x128xf32>
      %1179 = arith.mulf %1178, %1118 : vector<16x128xf32>
      %1180 = arith.addf %1176, %1179 : vector<16x128xf32>
      %c220 = arith.constant 220 : index
      %1181 = memref.load %arg1[%c220] : memref<256xf32, #tpu.memory_space<smem>>
      %1182 = vector.broadcast %1181 : f32 to vector<16x128xf32>
      %1183 = arith.addf %1180, %1182 : vector<16x128xf32>
      %cst_210 = arith.constant 0.000000e+00 : f32
      %1184 = vector.broadcast %cst_210 : f32 to vector<16x128xf32>
      %1185 = arith.minimumf %1183, %1184 : vector<16x128xf32>
      %1186 = math.exp %1185 : vector<16x128xf32>
      %cst_211 = arith.constant 1.000000e+00 : f32
      %1187 = vector.broadcast %cst_211 : f32 to vector<16x128xf32>
      %1188 = arith.subf %1186, %1187 : vector<16x128xf32>
      %cst_212 = arith.constant 1.75809932 : f32
      %1189 = vector.broadcast %cst_212 : f32 to vector<16x128xf32>
      %1190 = arith.mulf %1189, %1188 : vector<16x128xf32>
      %cst_213 = arith.constant 0.000000e+00 : f32
      %1191 = vector.broadcast %cst_213 : f32 to vector<16x128xf32>
      %1192 = arith.cmpf ogt, %1183, %1191 : vector<16x128xf32>
      %cst_214 = arith.constant 1.05070102 : f32
      %1193 = vector.broadcast %cst_214 : f32 to vector<16x128xf32>
      %1194 = arith.mulf %1193, %1183 : vector<16x128xf32>
      %1195 = arith.select %1192, %1194, %1190 : vector<16x128xi1>, vector<16x128xf32>
      %1196 = arith.addf %1068, %1195 : vector<16x128xf32>
      %c183 = arith.constant 183 : index
      %1197 = memref.load %arg1[%c183] : memref<256xf32, #tpu.memory_space<smem>>
      %1198 = vector.broadcast %1197 : f32 to vector<16x128xf32>
      %1199 = arith.mulf %1198, %1029 : vector<16x128xf32>
      %c184 = arith.constant 184 : index
      %1200 = memref.load %arg1[%c184] : memref<256xf32, #tpu.memory_space<smem>>
      %1201 = vector.broadcast %1200 : f32 to vector<16x128xf32>
      %1202 = arith.mulf %1201, %1068 : vector<16x128xf32>
      %1203 = arith.addf %1199, %1202 : vector<16x128xf32>
      %c185 = arith.constant 185 : index
      %1204 = memref.load %arg1[%c185] : memref<256xf32, #tpu.memory_space<smem>>
      %1205 = vector.broadcast %1204 : f32 to vector<16x128xf32>
      %1206 = arith.mulf %1205, %1107 : vector<16x128xf32>
      %1207 = arith.addf %1203, %1206 : vector<16x128xf32>
      %c111 = arith.constant 111 : index
      %1208 = memref.load %arg1[%c111] : memref<256xf32, #tpu.memory_space<smem>>
      %1209 = vector.broadcast %1208 : f32 to vector<16x128xf32>
      %1210 = arith.mulf %1209, %1112 : vector<16x128xf32>
      %1211 = arith.addf %1207, %1210 : vector<16x128xf32>
      %c112 = arith.constant 112 : index
      %1212 = memref.load %arg1[%c112] : memref<256xf32, #tpu.memory_space<smem>>
      %1213 = vector.broadcast %1212 : f32 to vector<16x128xf32>
      %1214 = arith.mulf %1213, %1115 : vector<16x128xf32>
      %1215 = arith.addf %1211, %1214 : vector<16x128xf32>
      %c113 = arith.constant 113 : index
      %1216 = memref.load %arg1[%c113] : memref<256xf32, #tpu.memory_space<smem>>
      %1217 = vector.broadcast %1216 : f32 to vector<16x128xf32>
      %1218 = arith.mulf %1217, %1118 : vector<16x128xf32>
      %1219 = arith.addf %1215, %1218 : vector<16x128xf32>
      %c221 = arith.constant 221 : index
      %1220 = memref.load %arg1[%c221] : memref<256xf32, #tpu.memory_space<smem>>
      %1221 = vector.broadcast %1220 : f32 to vector<16x128xf32>
      %1222 = arith.addf %1219, %1221 : vector<16x128xf32>
      %cst_215 = arith.constant 0.000000e+00 : f32
      %1223 = vector.broadcast %cst_215 : f32 to vector<16x128xf32>
      %1224 = arith.minimumf %1222, %1223 : vector<16x128xf32>
      %1225 = math.exp %1224 : vector<16x128xf32>
      %cst_216 = arith.constant 1.000000e+00 : f32
      %1226 = vector.broadcast %cst_216 : f32 to vector<16x128xf32>
      %1227 = arith.subf %1225, %1226 : vector<16x128xf32>
      %cst_217 = arith.constant 1.75809932 : f32
      %1228 = vector.broadcast %cst_217 : f32 to vector<16x128xf32>
      %1229 = arith.mulf %1228, %1227 : vector<16x128xf32>
      %cst_218 = arith.constant 0.000000e+00 : f32
      %1230 = vector.broadcast %cst_218 : f32 to vector<16x128xf32>
      %1231 = arith.cmpf ogt, %1222, %1230 : vector<16x128xf32>
      %cst_219 = arith.constant 1.05070102 : f32
      %1232 = vector.broadcast %cst_219 : f32 to vector<16x128xf32>
      %1233 = arith.mulf %1232, %1222 : vector<16x128xf32>
      %1234 = arith.select %1231, %1233, %1229 : vector<16x128xi1>, vector<16x128xf32>
      %1235 = arith.addf %1107, %1234 : vector<16x128xf32>
      %c186 = arith.constant 186 : index
      %1236 = memref.load %arg1[%c186] : memref<256xf32, #tpu.memory_space<smem>>
      %1237 = vector.broadcast %1236 : f32 to vector<16x128xf32>
      %1238 = arith.mulf %1237, %1157 : vector<16x128xf32>
      %c187 = arith.constant 187 : index
      %1239 = memref.load %arg1[%c187] : memref<256xf32, #tpu.memory_space<smem>>
      %1240 = vector.broadcast %1239 : f32 to vector<16x128xf32>
      %1241 = arith.mulf %1240, %1196 : vector<16x128xf32>
      %1242 = arith.addf %1238, %1241 : vector<16x128xf32>
      %c188 = arith.constant 188 : index
      %1243 = memref.load %arg1[%c188] : memref<256xf32, #tpu.memory_space<smem>>
      %1244 = vector.broadcast %1243 : f32 to vector<16x128xf32>
      %1245 = arith.mulf %1244, %1235 : vector<16x128xf32>
      %1246 = arith.addf %1242, %1245 : vector<16x128xf32>
      %c222 = arith.constant 222 : index
      %1247 = memref.load %arg1[%c222] : memref<256xf32, #tpu.memory_space<smem>>
      %1248 = vector.broadcast %1247 : f32 to vector<16x128xf32>
      %1249 = arith.addf %1246, %1248 : vector<16x128xf32>
      %cst_220 = arith.constant 0.000000e+00 : f32
      %1250 = vector.broadcast %cst_220 : f32 to vector<16x128xf32>
      %1251 = arith.minimumf %1249, %1250 : vector<16x128xf32>
      %1252 = math.exp %1251 : vector<16x128xf32>
      %cst_221 = arith.constant 1.000000e+00 : f32
      %1253 = vector.broadcast %cst_221 : f32 to vector<16x128xf32>
      %1254 = arith.subf %1252, %1253 : vector<16x128xf32>
      %cst_222 = arith.constant 1.75809932 : f32
      %1255 = vector.broadcast %cst_222 : f32 to vector<16x128xf32>
      %1256 = arith.mulf %1255, %1254 : vector<16x128xf32>
      %cst_223 = arith.constant 0.000000e+00 : f32
      %1257 = vector.broadcast %cst_223 : f32 to vector<16x128xf32>
      %1258 = arith.cmpf ogt, %1249, %1257 : vector<16x128xf32>
      %cst_224 = arith.constant 1.05070102 : f32
      %1259 = vector.broadcast %cst_224 : f32 to vector<16x128xf32>
      %1260 = arith.mulf %1259, %1249 : vector<16x128xf32>
      %1261 = arith.select %1258, %1260, %1256 : vector<16x128xi1>, vector<16x128xf32>
      %1262 = arith.addf %1157, %1261 : vector<16x128xf32>
      %c189 = arith.constant 189 : index
      %1263 = memref.load %arg1[%c189] : memref<256xf32, #tpu.memory_space<smem>>
      %1264 = vector.broadcast %1263 : f32 to vector<16x128xf32>
      %1265 = arith.mulf %1264, %1157 : vector<16x128xf32>
      %c190 = arith.constant 190 : index
      %1266 = memref.load %arg1[%c190] : memref<256xf32, #tpu.memory_space<smem>>
      %1267 = vector.broadcast %1266 : f32 to vector<16x128xf32>
      %1268 = arith.mulf %1267, %1196 : vector<16x128xf32>
      %1269 = arith.addf %1265, %1268 : vector<16x128xf32>
      %c191 = arith.constant 191 : index
      %1270 = memref.load %arg1[%c191] : memref<256xf32, #tpu.memory_space<smem>>
      %1271 = vector.broadcast %1270 : f32 to vector<16x128xf32>
      %1272 = arith.mulf %1271, %1235 : vector<16x128xf32>
      %1273 = arith.addf %1269, %1272 : vector<16x128xf32>
      %c223 = arith.constant 223 : index
      %1274 = memref.load %arg1[%c223] : memref<256xf32, #tpu.memory_space<smem>>
      %1275 = vector.broadcast %1274 : f32 to vector<16x128xf32>
      %1276 = arith.addf %1273, %1275 : vector<16x128xf32>
      %cst_225 = arith.constant 0.000000e+00 : f32
      %1277 = vector.broadcast %cst_225 : f32 to vector<16x128xf32>
      %1278 = arith.minimumf %1276, %1277 : vector<16x128xf32>
      %1279 = math.exp %1278 : vector<16x128xf32>
      %cst_226 = arith.constant 1.000000e+00 : f32
      %1280 = vector.broadcast %cst_226 : f32 to vector<16x128xf32>
      %1281 = arith.subf %1279, %1280 : vector<16x128xf32>
      %cst_227 = arith.constant 1.75809932 : f32
      %1282 = vector.broadcast %cst_227 : f32 to vector<16x128xf32>
      %1283 = arith.mulf %1282, %1281 : vector<16x128xf32>
      %cst_228 = arith.constant 0.000000e+00 : f32
      %1284 = vector.broadcast %cst_228 : f32 to vector<16x128xf32>
      %1285 = arith.cmpf ogt, %1276, %1284 : vector<16x128xf32>
      %cst_229 = arith.constant 1.05070102 : f32
      %1286 = vector.broadcast %cst_229 : f32 to vector<16x128xf32>
      %1287 = arith.mulf %1286, %1276 : vector<16x128xf32>
      %1288 = arith.select %1285, %1287, %1283 : vector<16x128xi1>, vector<16x128xf32>
      %1289 = arith.addf %1196, %1288 : vector<16x128xf32>
      %c192 = arith.constant 192 : index
      %1290 = memref.load %arg1[%c192] : memref<256xf32, #tpu.memory_space<smem>>
      %1291 = vector.broadcast %1290 : f32 to vector<16x128xf32>
      %1292 = arith.mulf %1291, %1157 : vector<16x128xf32>
      %c193 = arith.constant 193 : index
      %1293 = memref.load %arg1[%c193] : memref<256xf32, #tpu.memory_space<smem>>
      %1294 = vector.broadcast %1293 : f32 to vector<16x128xf32>
      %1295 = arith.mulf %1294, %1196 : vector<16x128xf32>
      %1296 = arith.addf %1292, %1295 : vector<16x128xf32>
      %c194 = arith.constant 194 : index
      %1297 = memref.load %arg1[%c194] : memref<256xf32, #tpu.memory_space<smem>>
      %1298 = vector.broadcast %1297 : f32 to vector<16x128xf32>
      %1299 = arith.mulf %1298, %1235 : vector<16x128xf32>
      %1300 = arith.addf %1296, %1299 : vector<16x128xf32>
      %c224 = arith.constant 224 : index
      %1301 = memref.load %arg1[%c224] : memref<256xf32, #tpu.memory_space<smem>>
      %1302 = vector.broadcast %1301 : f32 to vector<16x128xf32>
      %1303 = arith.addf %1300, %1302 : vector<16x128xf32>
      %cst_230 = arith.constant 0.000000e+00 : f32
      %1304 = vector.broadcast %cst_230 : f32 to vector<16x128xf32>
      %1305 = arith.minimumf %1303, %1304 : vector<16x128xf32>
      %1306 = math.exp %1305 : vector<16x128xf32>
      %cst_231 = arith.constant 1.000000e+00 : f32
      %1307 = vector.broadcast %cst_231 : f32 to vector<16x128xf32>
      %1308 = arith.subf %1306, %1307 : vector<16x128xf32>
      %cst_232 = arith.constant 1.75809932 : f32
      %1309 = vector.broadcast %cst_232 : f32 to vector<16x128xf32>
      %1310 = arith.mulf %1309, %1308 : vector<16x128xf32>
      %cst_233 = arith.constant 0.000000e+00 : f32
      %1311 = vector.broadcast %cst_233 : f32 to vector<16x128xf32>
      %1312 = arith.cmpf ogt, %1303, %1311 : vector<16x128xf32>
      %cst_234 = arith.constant 1.05070102 : f32
      %1313 = vector.broadcast %cst_234 : f32 to vector<16x128xf32>
      %1314 = arith.mulf %1313, %1303 : vector<16x128xf32>
      %1315 = arith.select %1312, %1314, %1310 : vector<16x128xi1>, vector<16x128xf32>
      %1316 = arith.addf %1235, %1315 : vector<16x128xf32>
      %c195 = arith.constant 195 : index
      %1317 = memref.load %arg1[%c195] : memref<256xf32, #tpu.memory_space<smem>>
      %1318 = vector.broadcast %1317 : f32 to vector<16x128xf32>
      %1319 = arith.mulf %1318, %1262 : vector<16x128xf32>
      %c196 = arith.constant 196 : index
      %1320 = memref.load %arg1[%c196] : memref<256xf32, #tpu.memory_space<smem>>
      %1321 = vector.broadcast %1320 : f32 to vector<16x128xf32>
      %1322 = arith.mulf %1321, %1289 : vector<16x128xf32>
      %1323 = arith.addf %1319, %1322 : vector<16x128xf32>
      %c197 = arith.constant 197 : index
      %1324 = memref.load %arg1[%c197] : memref<256xf32, #tpu.memory_space<smem>>
      %1325 = vector.broadcast %1324 : f32 to vector<16x128xf32>
      %1326 = arith.mulf %1325, %1316 : vector<16x128xf32>
      %1327 = arith.addf %1323, %1326 : vector<16x128xf32>
      %c225 = arith.constant 225 : index
      %1328 = memref.load %arg1[%c225] : memref<256xf32, #tpu.memory_space<smem>>
      %1329 = vector.broadcast %1328 : f32 to vector<16x128xf32>
      %1330 = arith.addf %1327, %1329 : vector<16x128xf32>
      %cst_235 = arith.constant 0.000000e+00 : f32
      %1331 = vector.broadcast %cst_235 : f32 to vector<16x128xf32>
      %1332 = arith.minimumf %1330, %1331 : vector<16x128xf32>
      %1333 = math.exp %1332 : vector<16x128xf32>
      %cst_236 = arith.constant 1.000000e+00 : f32
      %1334 = vector.broadcast %cst_236 : f32 to vector<16x128xf32>
      %1335 = arith.subf %1333, %1334 : vector<16x128xf32>
      %cst_237 = arith.constant 1.75809932 : f32
      %1336 = vector.broadcast %cst_237 : f32 to vector<16x128xf32>
      %1337 = arith.mulf %1336, %1335 : vector<16x128xf32>
      %cst_238 = arith.constant 0.000000e+00 : f32
      %1338 = vector.broadcast %cst_238 : f32 to vector<16x128xf32>
      %1339 = arith.cmpf ogt, %1330, %1338 : vector<16x128xf32>
      %cst_239 = arith.constant 1.05070102 : f32
      %1340 = vector.broadcast %cst_239 : f32 to vector<16x128xf32>
      %1341 = arith.mulf %1340, %1330 : vector<16x128xf32>
      %1342 = arith.select %1339, %1341, %1337 : vector<16x128xi1>, vector<16x128xf32>
      %1343 = arith.addf %1262, %1342 : vector<16x128xf32>
      %c198 = arith.constant 198 : index
      %1344 = memref.load %arg1[%c198] : memref<256xf32, #tpu.memory_space<smem>>
      %1345 = vector.broadcast %1344 : f32 to vector<16x128xf32>
      %1346 = arith.mulf %1345, %1262 : vector<16x128xf32>
      %c199 = arith.constant 199 : index
      %1347 = memref.load %arg1[%c199] : memref<256xf32, #tpu.memory_space<smem>>
      %1348 = vector.broadcast %1347 : f32 to vector<16x128xf32>
      %1349 = arith.mulf %1348, %1289 : vector<16x128xf32>
      %1350 = arith.addf %1346, %1349 : vector<16x128xf32>
      %c200 = arith.constant 200 : index
      %1351 = memref.load %arg1[%c200] : memref<256xf32, #tpu.memory_space<smem>>
      %1352 = vector.broadcast %1351 : f32 to vector<16x128xf32>
      %1353 = arith.mulf %1352, %1316 : vector<16x128xf32>
      %1354 = arith.addf %1350, %1353 : vector<16x128xf32>
      %c226 = arith.constant 226 : index
      %1355 = memref.load %arg1[%c226] : memref<256xf32, #tpu.memory_space<smem>>
      %1356 = vector.broadcast %1355 : f32 to vector<16x128xf32>
      %1357 = arith.addf %1354, %1356 : vector<16x128xf32>
      %cst_240 = arith.constant 0.000000e+00 : f32
      %1358 = vector.broadcast %cst_240 : f32 to vector<16x128xf32>
      %1359 = arith.minimumf %1357, %1358 : vector<16x128xf32>
      %1360 = math.exp %1359 : vector<16x128xf32>
      %cst_241 = arith.constant 1.000000e+00 : f32
      %1361 = vector.broadcast %cst_241 : f32 to vector<16x128xf32>
      %1362 = arith.subf %1360, %1361 : vector<16x128xf32>
      %cst_242 = arith.constant 1.75809932 : f32
      %1363 = vector.broadcast %cst_242 : f32 to vector<16x128xf32>
      %1364 = arith.mulf %1363, %1362 : vector<16x128xf32>
      %cst_243 = arith.constant 0.000000e+00 : f32
      %1365 = vector.broadcast %cst_243 : f32 to vector<16x128xf32>
      %1366 = arith.cmpf ogt, %1357, %1365 : vector<16x128xf32>
      %cst_244 = arith.constant 1.05070102 : f32
      %1367 = vector.broadcast %cst_244 : f32 to vector<16x128xf32>
      %1368 = arith.mulf %1367, %1357 : vector<16x128xf32>
      %1369 = arith.select %1366, %1368, %1364 : vector<16x128xi1>, vector<16x128xf32>
      %1370 = arith.addf %1289, %1369 : vector<16x128xf32>
      %c201 = arith.constant 201 : index
      %1371 = memref.load %arg1[%c201] : memref<256xf32, #tpu.memory_space<smem>>
      %1372 = vector.broadcast %1371 : f32 to vector<16x128xf32>
      %1373 = arith.mulf %1372, %1262 : vector<16x128xf32>
      %c202 = arith.constant 202 : index
      %1374 = memref.load %arg1[%c202] : memref<256xf32, #tpu.memory_space<smem>>
      %1375 = vector.broadcast %1374 : f32 to vector<16x128xf32>
      %1376 = arith.mulf %1375, %1289 : vector<16x128xf32>
      %1377 = arith.addf %1373, %1376 : vector<16x128xf32>
      %c203 = arith.constant 203 : index
      %1378 = memref.load %arg1[%c203] : memref<256xf32, #tpu.memory_space<smem>>
      %1379 = vector.broadcast %1378 : f32 to vector<16x128xf32>
      %1380 = arith.mulf %1379, %1316 : vector<16x128xf32>
      %1381 = arith.addf %1377, %1380 : vector<16x128xf32>
      %c227 = arith.constant 227 : index
      %1382 = memref.load %arg1[%c227] : memref<256xf32, #tpu.memory_space<smem>>
      %1383 = vector.broadcast %1382 : f32 to vector<16x128xf32>
      %1384 = arith.addf %1381, %1383 : vector<16x128xf32>
      %cst_245 = arith.constant 0.000000e+00 : f32
      %1385 = vector.broadcast %cst_245 : f32 to vector<16x128xf32>
      %1386 = arith.minimumf %1384, %1385 : vector<16x128xf32>
      %1387 = math.exp %1386 : vector<16x128xf32>
      %cst_246 = arith.constant 1.000000e+00 : f32
      %1388 = vector.broadcast %cst_246 : f32 to vector<16x128xf32>
      %1389 = arith.subf %1387, %1388 : vector<16x128xf32>
      %cst_247 = arith.constant 1.75809932 : f32
      %1390 = vector.broadcast %cst_247 : f32 to vector<16x128xf32>
      %1391 = arith.mulf %1390, %1389 : vector<16x128xf32>
      %cst_248 = arith.constant 0.000000e+00 : f32
      %1392 = vector.broadcast %cst_248 : f32 to vector<16x128xf32>
      %1393 = arith.cmpf ogt, %1384, %1392 : vector<16x128xf32>
      %cst_249 = arith.constant 1.05070102 : f32
      %1394 = vector.broadcast %cst_249 : f32 to vector<16x128xf32>
      %1395 = arith.mulf %1394, %1384 : vector<16x128xf32>
      %1396 = arith.select %1393, %1395, %1391 : vector<16x128xi1>, vector<16x128xf32>
      %1397 = arith.addf %1316, %1396 : vector<16x128xf32>
      %c228 = arith.constant 228 : index
      %1398 = memref.load %arg1[%c228] : memref<256xf32, #tpu.memory_space<smem>>
      %1399 = vector.broadcast %1398 : f32 to vector<16x128xf32>
      %1400 = arith.mulf %1399, %1343 : vector<16x128xf32>
      %c229 = arith.constant 229 : index
      %1401 = memref.load %arg1[%c229] : memref<256xf32, #tpu.memory_space<smem>>
      %1402 = vector.broadcast %1401 : f32 to vector<16x128xf32>
      %1403 = arith.mulf %1402, %1370 : vector<16x128xf32>
      %1404 = arith.addf %1400, %1403 : vector<16x128xf32>
      %c230 = arith.constant 230 : index
      %1405 = memref.load %arg1[%c230] : memref<256xf32, #tpu.memory_space<smem>>
      %1406 = vector.broadcast %1405 : f32 to vector<16x128xf32>
      %1407 = arith.mulf %1406, %1397 : vector<16x128xf32>
      %1408 = arith.addf %1404, %1407 : vector<16x128xf32>
      %c231 = arith.constant 231 : index
      %1409 = memref.load %arg1[%c231] : memref<256xf32, #tpu.memory_space<smem>>
      %1410 = vector.broadcast %1409 : f32 to vector<16x128xf32>
      %1411 = arith.addf %1408, %1410 : vector<16x128xf32>
      %1412 = arith.index_cast %2 : i32 to index
      %c0_250 = arith.constant 0 : index
      %1413 = vector.load %arg3[%1412, %c0_250] : memref<32x128xf32, #tpu.memory_space<vmem>>, vector<16x128xf32>
      tpu.vector_store %arg3[%1412, %c0_250], %1411 {strides = array<i32>} : memref<32x128xf32, #tpu.memory_space<vmem>>, vector<16x128xf32>,
    }
    %c2_i32_0 = arith.constant 2 : i32
    return
  }
  func.func @transform_0(%arg0: i32) -> i32 {
    %c0_i32 = arith.constant 0 : i32
    %c0_i32_0 = arith.constant 0 : i32
    return %c0_i32 : i32
  }
  func.func @transform_1(%arg0: i32) -> (i32, i32, i32) {
    %c0_i32 = arith.constant 0 : i32
    %c0_i32_0 = arith.constant 0 : i32
    %c0_i32_1 = arith.constant 0 : i32
    return %c0_i32, %arg0, %c0_i32_0 : i32, i32, i32
  }
  func.func @transform_2(%arg0: i32) -> (i32, i32) {
    %c0_i32 = arith.constant 0 : i32
    %c0_i32_0 = arith.constant 0 : i32
    return %arg0, %c0_i32 : i32, i32
  }
}

</mosaic_0001>

<llo_original>
// kernel: tpu_custom_call.1
$region0: #{tpu_custom_call.1}
  #allocation0 [shape = 'u32[]', space=smem, size = 0x4, offset = 0x4, fixed_abs, tag = 'smem constant byte address 0x4 - core index']
  #allocation1 [shape = 'u32[72,128]{1,0:T(1,128)}', space=vmem, size = 0x9000, scoped, tag = 'internal scratch']
  #allocation8 [shape = 's32[]', space=sflag, size = 0x4, offset = 0, fixed_abs, tag = 'sflag constant byte address 0x0 - dummy sync flag']
  %s0 = inlined_call_operand.hbm [shape: f32[256], index: 0, kind: input, shape index: {}]
  %s1 = inlined_call_operand.hbm [shape: f32[4,64,128], index: 1, kind: input, shape index: {}]
  %s2 = inlined_call_operand.hbm [shape: f32[64,128], index: 2, kind: output, shape index: {}]
  %s3 = sld [smem:[#allocation0]]
  $region56: #{tpu_custom_call.1} parent=0
    _
  %s5 = ssub.s32 1, %s3
  %s6 = scalar_select 0, %s5, %s3
  $region1: #{tpu_custom_call.1} parent=0
    #allocation2 [shape = 'u8[1024]{0}', space=smem, size = 0x400, scoped, tag = 'input window, operand 0, single buffered']
    #allocation3 [shape = 's32[2]{0}', space=sflag, size = 0x8, scoped, tag = 'scoped memory for tpu_custom_call.1']
    #allocation4 [shape = 's32[2]{0}', space=sflag, size = 0x8, scoped, tag = 'scoped memory for tpu_custom_call.1']
    #allocation5 [shape = 's32[2]{0}', space=sflag, size = 0x8, scoped, tag = 'scoped memory for tpu_custom_call.1']
    #allocation6 [shape = 'u8[131072]{0}', space=vmem, size = 0x20000, scoped, tag = 'input window, operand 1']
    #allocation7 [shape = 'u8[32768]{0}', space=vmem, size = 0x8000, scoped, tag = 'output window, operand 0']
    %7 = vsyncpa [#allocation5], 0
    %8 = vsyncpa [#allocation3], 0
    %s9 = scalar_lea.sflag [#allocation3], 1
    %10 = vsyncpa %s9, 0
    %11 = vsyncpa [#allocation4], 0
    %s12 = scalar_lea.sflag [#allocation4], 1
    %13 = vsyncpa %s12, 0
    loop: start=0, step=1, limit=4
    $region2: #{tpu_custom_call.1} parent=1 // loop_pre_header
      _
    $region3: #{tpu_custom_call.1} parent=1 // loop_header
      %s15 = sphi 0, %s19
      %p16 = scmp.ge.s32.totalorder %s15, 4
      %s23 = sphi 0, %s23
      %s25 = sphi 0, %s23
      %s26 = sphi 0, %s25
      %s40 = sphi 0, %s26
      %s46 = sphi 0, %s48
      %s49 = sphi 0, %s46
      %s50 = sphi 0, %s49
      %s66 = sphi 0, %s50
      %s72 = sphi 0, %s74
      %s75 = sphi 0, %s72
      %s76 = sphi 0, %s75
      %s92 = sphi 0, %s76
    $region4: #{tpu_custom_call.1} parent=1 // loop_header_branch
      %18 = sbr.rel (%p16) target = $region8
    $region5: #{tpu_custom_call.1} parent=1 // loop_body
      %s20 = ssub.s32 %s15, 1
      %s21 = ssub.s32 %s15, 2
      %s22 = sadd.s32 %s15, 1
      %s24 = sadd.s32 %s23, 1
      %p27 = scmp.eq.s32.totalorder %s15, 1
      %p28 = scmp.ne.s32.totalorder %s23, %s25
      %p29 = scmp.eq.s32.totalorder %s15, 0
      %p30 = por %p28, %p29
      %p31 = scmp.ne.s32.totalorder %s23, %s25
      %p32 = scmp.eq.s32.totalorder %s20, 1
      %p33 = por %p31, %p32
      %p34 = scmp.ne.s32.totalorder %s25, %s26
      %p35 = scmp.eq.s32.totalorder %s20, 0
      %p36 = por %p34, %p35
      %p37 = scmp.ne.s32.totalorder %s25, %s26
      %p38 = scmp.eq.s32.totalorder %s21, 1
      %p39 = por %p37, %p38
      %p41 = scmp.ne.s32.totalorder %s26, %s40
      %p42 = scmp.eq.s32.totalorder %s21, 0
      %p43 = por %p41, %p42
      %s44 = ssub.s32 %s15, %s22
      %p45 = scmp.eq.s32.totalorder %s44, 0
      %s47 = sadd.s32 %s46, 1
      %s48 = scalar_select %p45, %s46, %s47
      %p51 = pneg %p45
      %p52 = scmp.eq.s32.totalorder %s15, 1
      %p53 = por %p51, %p52
      %p54 = scmp.ne.s32.totalorder %s46, %s49
      %p55 = scmp.eq.s32.totalorder %s15, 0
      %p56 = por %p54, %p55
      %p57 = scmp.ne.s32.totalorder %s46, %s49
      %p58 = scmp.eq.s32.totalorder %s20, 1
      %p59 = por %p57, %p58
      %p60 = scmp.ne.s32.totalorder %s49, %s50
      %p61 = scmp.eq.s32.totalorder %s20, 0
      %p62 = por %p60, %p61
      %p63 = scmp.ne.s32.totalorder %s49, %s50
      %p64 = scmp.eq.s32.totalorder %s21, 1
      %p65 = por %p63, %p64
      %p67 = scmp.ne.s32.totalorder %s50, %s66
      %p68 = scmp.eq.s32.totalorder %s21, 0
      %p69 = por %p67, %p68
      %s70 = ssub.s32 %s15, %s22
      %p71 = scmp.eq.s32.totalorder %s70, 0
      %s73 = sadd.s32 %s72, 1
      %s74 = scalar_select %p71, %s72, %s73
      %p77 = pneg %p71
      %p78 = scmp.eq.s32.totalorder %s15, 1
      %p79 = por %p77, %p78
      %p80 = scmp.ne.s32.totalorder %s72, %s75
      %p81 = scmp.eq.s32.totalorder %s15, 0
      %p82 = por %p80, %p81
      %p83 = scmp.ne.s32.totalorder %s72, %s75
      %p84 = scmp.eq.s32.totalorder %s20, 1
      %p85 = por %p83, %p84
      %p86 = scmp.ne.s32.totalorder %s75, %s76
      %p87 = scmp.eq.s32.totalorder %s20, 0
      %p88 = por %p86, %p87
      %p89 = scmp.ne.s32.totalorder %s75, %s76
      %p90 = scmp.eq.s32.totalorder %s21, 1
      %p91 = por %p89, %p90
      %p93 = scmp.ne.s32.totalorder %s76, %s92
      %p94 = scmp.eq.s32.totalorder %s21, 0
      %p95 = por %p93, %p94
      %p96 = scmp.le.s32.totalorder 1, %s15
      %p97 = scmp.lt.s32.totalorder %s15, 3
      %p98 = pnand %p96, %p97
      %p99 = pneg %p98
      // Predicated region
      $region9: #{tpu_custom_call.1} parent=5 // pred_check
        _
      $region10: #{tpu_custom_call.1} parent=5 // pred_check_branch
        %101 = sbr.rel (%p98) target = $region12
      $region11: #{tpu_custom_call.1} parent=5 // pred_region
        %s102 = ssub.s32 %s15, 1
        // Predicated region
        $region13: #{tpu_custom_call.1} parent=11 // pred_check
          %p103 = pneg %p36
        $region14: #{tpu_custom_call.1} parent=11 // pred_check_branch
          %105 = sbr.rel (%p103) target = $region16
        $region15: #{tpu_custom_call.1} parent=11 // pred_region
          %107 = vsyncadd [#allocation5], 0
          %s109 = sshll.u32 %s0, 4
          %s110 = int_to_ptr.hbm [resolvable:$true] %s109
          %112 = dma.hbm_to_smem %s110, 32, [#allocation2], [#allocation5]
        $region16: #{tpu_custom_call.1} parent=11 // pred_fallthru
          _
      $region12: #{tpu_custom_call.1} parent=5 // pred_fallthru
        _
      %p113 = scmp.lt.s32.totalorder %s15, 2
      // Predicated region
      $region17: #{tpu_custom_call.1} parent=5 // pred_check
        %p114 = pneg %p113
      $region18: #{tpu_custom_call.1} parent=5 // pred_check_branch
        %116 = sbr.rel (%p114) target = $region20
      $region19: #{tpu_custom_call.1} parent=5 // pred_region
        // Predicated region
        $region21: #{tpu_custom_call.1} parent=19 // pred_check
          %p117 = pneg %p56
        $region22: #{tpu_custom_call.1} parent=19 // pred_check_branch
          %119 = sbr.rel (%p117) target = $region24
        $region23: #{tpu_custom_call.1} parent=19 // pred_region
          #allocation9 [shape = 'u32[6]{0}', space=smem, size = 0x18, scoped, tag = 'DMA stride descriptor']
          %s120 = sand.u32 %s46, 1
          %s121 = scalar_lea.sflag [#allocation3], %s120
          %s122 = sand.u32 %s46, 1
          %s123 = smul.addr %s122, 128
          %s124 = scalar_lea.vmem [#allocation6], %s123
          %s125 = smul.u32 4, %s15
          %127 = vsyncadd %s121, 0
          %s128 = smul.addr %s125, 8
          %s129 = scalar_lea.hbm %s1, %s128
          %s131 = sshll.u32 1, 14
          %s132 = sxor.u32 4294967295, %s131
          %s134 = sld [smem:[#allocation0]]
          %s135 = sadd.s32 2, %s134
          %s137 = sshll.u32 7, 26
          %s138 = sxor.u32 4294967295, %s137
          %s139 = sand.u32 0, %s138
          %s140 = sshll.u32 %s135, 26
          %s141 = sor.u32 %s139, %s140
          %s142 = sshll.u32 %s129, 4
          %s143 = int_to_ptr.hbm [resolvable:$true] %s142
          %s144 = sshll.u32 %s124, 4
          %s145 = int_to_ptr.vmem [resolvable:$true] %s144
          %151 = sst [smem:[#allocation9]] 1024
          %s152 = scalar_lea.smem [#allocation9], 1
          %153 = sst [smem:[%s152]] 512
          %s154 = scalar_lea.smem [#allocation9], 2
          %155 = sst [smem:[%s154]] 4
          %s156 = scalar_lea.smem [#allocation9], 3
          %157 = sst [smem:[%s156]] 128
          %s158 = scalar_lea.smem [#allocation9], 4
          %159 = sst [smem:[%s158]] 128
          %s160 = scalar_lea.smem [#allocation9], 5
          %161 = sst [smem:[%s160]] 8
          %163 = dma.general %s143, 2048, %s145, %s121, [#allocation8], [#allocation9], %s141, 0
        $region24: #{tpu_custom_call.1} parent=19 // pred_fallthru
          _
      $region20: #{tpu_custom_call.1} parent=5 // pred_fallthru
        _
      %p164 = scmp.le.s32.totalorder 1, %s15
      %p165 = scmp.lt.s32.totalorder %s15, 3
      %p166 = pnand %p164, %p165
      %p167 = pneg %p166
      // Predicated region
      $region25: #{tpu_custom_call.1} parent=5 // pred_check
        _
      $region26: #{tpu_custom_call.1} parent=5 // pred_check_branch
        %169 = sbr.rel (%p166) target = $region28
      $region27: #{tpu_custom_call.1} parent=5 // pred_region
        %s170 = ssub.s32 %s15, 1
        // Predicated region
        $region29: #{tpu_custom_call.1} parent=27 // pred_check
          %p171 = pneg %p36
        $region30: #{tpu_custom_call.1} parent=27 // pred_check_branch
          %173 = sbr.rel (%p171) target = $region32
        $region31: #{tpu_custom_call.1} parent=27 // pred_region
          %175 = dma.done [#allocation5], 32
        $region32: #{tpu_custom_call.1} parent=27 // pred_fallthru
          _
        %s176 = sand.u32 %s49, 1
        %s177 = scalar_lea.sflag [#allocation3], %s176
        %s178 = sand.u32 %s49, 1
        %s179 = smul.addr %s178, 128
        %s180 = scalar_lea.vmem [#allocation6], %s179
        // Predicated region
        $region33: #{tpu_custom_call.1} parent=27 // pred_check
          %p181 = pneg %p62
        $region34: #{tpu_custom_call.1} parent=27 // pred_check_branch
          %183 = sbr.rel (%p181) target = $region36
        $region35: #{tpu_custom_call.1} parent=27 // pred_region
          %185 = dma.done %s177, 2048
        $region36: #{tpu_custom_call.1} parent=27 // pred_fallthru
          _
        %186 = sfence
        %p187 = pneg %p36
        %p188 = pneg %p33
        %s189 = sand.u32 %s49, 1
        %s190 = scalar_lea.sflag [#allocation3], %s189
        %s191 = sand.u32 %s49, 1
        %s192 = smul.addr %s191, 128
        %s193 = scalar_lea.vmem [#allocation6], %s192
        %p194 = pneg %p62
        %p195 = pneg %p59
        %p196 = pneg %p88
        %p197 = pneg %p85
        %s198 = sand.u32 %s75, 1
        %s199 = scalar_lea.sflag [#allocation4], %s198
        %s200 = sand.u32 %s75, 1
        %s201 = smul.addr %s200, 32
        %s202 = scalar_lea.vmem [#allocation7], %s201
        %s203 = smul.u32 4, %s20
        %s204 = smul.u32 4, %s20
        loop: start=0, step=1, limit=2
        $region37: #{tpu_custom_call.1} parent=27 // loop_pre_header
          _
        $region38: #{tpu_custom_call.1} parent=27 // loop_header
          %s206 = sphi 0, %s210
          %p207 = scmp.ge.s32.totalorder %s206, 2
        $region39: #{tpu_custom_call.1} parent=27 // loop_header_branch
          %209 = sbr.rel (%p207) target = $region43
        $region40: #{tpu_custom_call.1} parent=27 // loop_body
          %s211 = smul.u32 %s206, 16
          %v212 = vlaneseq
          %v213 = vand.u32 %v212, 127
          %vm214 = vcmp.lt.s32.totalorder %v213, 1
          %s215 = scalar_lea.vmem %s180, %s211 [#allocation6]
          %v216 = vld [vmem:[%s215] sm:$0xff]
          %v217 = vld [vmem:[%s215 + $0x8] sm:$0xff]
          %218 = vrot.lane.b32.xlu0 %v216, 1
          %v219 = vpop.permute.xlu0 %218
          %220 = vrot.lane.b32.xlu0 %v217, 1
          %v221 = vpop.permute.xlu0 %220
          %v222 = vsel %vm214, 0.0, %v219
          %v223 = vsel %vm214, 0.0, %v221
          %s224 = sld [smem:[#allocation2 + $0x9]]
          %v225 = vstv %s224
          %v226 = vmul.f32 %v225, %v216
          %v227 = vmul.f32 %v225, %v217
          %s228 = sld [smem:[#allocation2 + $0xd]]
          %v229 = vstv %s228
          %v230 = vmul.f32 %v229, %v216
          %v231 = vmul.f32 %v229, %v217
          %s232 = sld [smem:[#allocation2 + $0x11]]
          %v233 = vstv %s232
          %v234 = vmul.f32 %v233, %v216
          %v235 = vmul.f32 %v233, %v217
          %s236 = sld [smem:[#allocation2]]
          %v237 = vstv %s236
          %v238 = vmul.f32 %v237, %v222
          %v239 = vmul.f32 %v237, %v223
          %s240 = sld [smem:[#allocation2 + $0x3]]
          %v241 = vstv %s240
          %v242 = vmul.f32 %v241, %v216
          %v243 = vmul.f32 %v241, %v217
          %v244 = vadd.f32 %v238, %v242
          %v245 = vadd.f32 %v239, %v243
          %s246 = sld [smem:[#allocation2 + $0x6]]
          %v247 = vstv %s246
          %v248 = vadd.f32 %v244, %v247
          %v249 = vadd.f32 %v245, %v247
          %v250 = vmin.f32 %v248, 0.0
          %v251 = vmin.f32 %v249, 0.0
          %v252 = vmul.f32 %v250, 1.442695
          %v253 = vpow.pop %v252
          %v254 = vmul.f32 %v251, 1.442695
          %v255 = vpow.pop %v254
          %v256 = vsub.f32 %v253, 1.0
          %v257 = vsub.f32 %v255, 1.0
          %v258 = vmul.f32 %v256, 1.6732632
          %v259 = vmul.f32 %v257, 1.6732632
          %vm260 = vcmp.gt.f32.partialorder %v248, 0.0
          %vm261 = vcmp.gt.f32.partialorder %v249, 0.0
          %v262 = vsel %vm260, %v248, %v258
          %v263 = vsel %vm261, %v249, %v259
          %s264 = sld [smem:[#allocation2 + $0x18]]
          %v265 = vstv %s264
          %v266 = vmul.f32 %v265, %v262
          %v267 = vmul.f32 %v265, %v263
          %v268 = vadd.f32 %v226, %v266
          %v269 = vadd.f32 %v227, %v267
          %s270 = sld [smem:[#allocation2 + $0x24]]
          %v271 = vstv %s270
          %v272 = vmul.f32 %v271, %v262
          %v273 = vmul.f32 %v271, %v263
          %v274 = vadd.f32 %v230, %v272
          %v275 = vadd.f32 %v231, %v273
          %s276 = sld [smem:[#allocation2 + $0x30]]
          %v277 = vstv %s276
          %v278 = vmul.f32 %v277, %v262
          %v279 = vmul.f32 %v277, %v263
          %v280 = vadd.f32 %v234, %v278
          %v281 = vadd.f32 %v235, %v279
          %s282 = sld [smem:[#allocation2 + $0x1]]
          %v283 = vstv %s282
          %v284 = vmul.f32 %v283, %v222
          %v285 = vmul.f32 %v283, %v223
          %s286 = sld [smem:[#allocation2 + $0x4]]
          %v287 = vstv %s286
          %v288 = vmul.f32 %v287, %v216
          %v289 = vmul.f32 %v287, %v217
          %v290 = vadd.f32 %v284, %v288
          %v291 = vadd.f32 %v285, %v289
          %s292 = sld [smem:[#allocation2 + $0x7]]
          %v293 = vstv %s292
          %v294 = vadd.f32 %v290, %v293
          %v295 = vadd.f32 %v291, %v293
          %v296 = vmin.f32 %v294, 0.0
          %v297 = vmin.f32 %v295, 0.0
          %v298 = vmul.f32 %v296, 1.442695
          %v299 = vpow.pop %v298
          %v300 = vmul.f32 %v297, 1.442695
          %v301 = vpow.pop %v300
          %v302 = vsub.f32 %v299, 1.0
          %v303 = vsub.f32 %v301, 1.0
          %v304 = vmul.f32 %v302, 1.6732632
          %v305 = vmul.f32 %v303, 1.6732632
          %vm306 = vcmp.gt.f32.partialorder %v294, 0.0
          %vm307 = vcmp.gt.f32.partialorder %v295, 0.0
          %v308 = vsel %vm306, %v294, %v304
          %v309 = vsel %vm307, %v295, %v305
          %s310 = sld [smem:[#allocation2 + $0x19]]
          %v311 = vstv %s310
          %v312 = vmul.f32 %v311, %v308
          %v313 = vmul.f32 %v311, %v309
          %v314 = vadd.f32 %v268, %v312
          %v315 = vadd.f32 %v269, %v313
          %s316 = sld [smem:[#allocation2 + $0x25]]
          %v317 = vstv %s316
          %v318 = vmul.f32 %v317, %v308
          %v319 = vmul.f32 %v317, %v309
          %v320 = vadd.f32 %v274, %v318
          %v321 = vadd.f32 %v275, %v319
          %s322 = sld [smem:[#allocation2 + $0x31]]
          %v323 = vstv %s322
          %v324 = vmul.f32 %v323, %v308
          %v325 = vmul.f32 %v323, %v309
          %v326 = vadd.f32 %v280, %v324
          %v327 = vadd.f32 %v281, %v325
          %s328 = sld [smem:[#allocation2 + $0x2]]
          %v329 = vstv %s328
          %v330 = vmul.f32 %v329, %v222
          %v331 = vmul.f32 %v329, %v223
          %s332 = sld [smem:[#allocation2 + $0x5]]
          %v333 = vstv %s332
          %v334 = vmul.f32 %v333, %v216
          %v335 = vmul.f32 %v333, %v217
          %v336 = vadd.f32 %v330, %v334
          %v337 = vadd.f32 %v331, %v335
          %s338 = sld [smem:[#allocation2 + $0x8]]
          %v339 = vstv %s338
          %v340 = vadd.f32 %v336, %v339
          %v341 = vadd.f32 %v337, %v339
          %v342 = vmin.f32 %v340, 0.0
          %v343 = vmin.f32 %v341, 0.0
          %v344 = vmul.f32 %v342, 1.442695
          %v345 = vpow.pop %v344
          %v346 = vmul.f32 %v343, 1.442695
          %v347 = vpow.pop %v346
          %v348 = vsub.f32 %v345, 1.0
          %v349 = vsub.f32 %v347, 1.0
          %v350 = vmul.f32 %v348, 1.6732632
          %v351 = vmul.f32 %v349, 1.6732632
          %vm352 = vcmp.gt.f32.partialorder %v340, 0.0
          %vm353 = vcmp.gt.f32.partialorder %v341, 0.0
          %v354 = vsel %vm352, %v340, %v350
          %v355 = vsel %vm353, %v341, %v351
          %s356 = sld [smem:[#allocation2 + $0x1a]]
          %v357 = vstv %s356
          %v358 = vmul.f32 %v357, %v354
          %v359 = vmul.f32 %v357, %v355
          %v360 = vadd.f32 %v314, %v358
          %v361 = vadd.f32 %v315, %v359
          %s362 = sld [smem:[#allocation2 + $0x26]]
          %v363 = vstv %s362
          %v364 = vmul.f32 %v363, %v354
          %v365 = vmul.f32 %v363, %v355
          %v366 = vadd.f32 %v320, %v364
          %v367 = vadd.f32 %v321, %v365
          %s368 = sld [smem:[#allocation2 + $0x32]]
          %v369 = vstv %s368
          %v370 = vmul.f32 %v369, %v354
          %v371 = vmul.f32 %v369, %v355
          %v372 = vadd.f32 %v326, %v370
          %v373 = vadd.f32 %v327, %v371
          %s374 = sadd.s32 %s211, 32
          %s375 = scalar_lea.vmem %s180, %s374 [#allocation6]
          %v376 = vld [vmem:[%s375] sm:$0xff]
          %v377 = vld [vmem:[%s375 + $0x8] sm:$0xff]
          %378 = vrot.lane.b32.xlu0 %v376, 1
          %v379 = vpop.permute.xlu0 %378
          %380 = vrot.lane.b32.xlu0 %v377, 1
          %v381 = vpop.permute.xlu0 %380
          %v382 = vsel %vm214, 0.0, %v379
          %v383 = vsel %vm214, 0.0, %v381
          %s384 = sld [smem:[#allocation2 + $0xa]]
          %v385 = vstv %s384
          %v386 = vmul.f32 %v385, %v376
          %v387 = vmul.f32 %v385, %v377
          %v388 = vadd.f32 %v360, %v386
          %v389 = vadd.f32 %v361, %v387
          %s390 = sld [smem:[#allocation2 + $0xe]]
          %v391 = vstv %s390
          %v392 = vmul.f32 %v391, %v376
          %v393 = vmul.f32 %v391, %v377
          %v394 = vadd.f32 %v366, %v392
          %v395 = vadd.f32 %v367, %v393
          %s396 = sld [smem:[#allocation2 + $0x12]]
          %v397 = vstv %s396
          %v398 = vmul.f32 %v397, %v376
          %v399 = vmul.f32 %v397, %v377
          %v400 = vadd.f32 %v372, %v398
          %v401 = vadd.f32 %v373, %v399
          %v402 = vmul.f32 %v237, %v382
          %v403 = vmul.f32 %v237, %v383
          %v404 = vmul.f32 %v241, %v376
          %v405 = vmul.f32 %v241, %v377
          %v406 = vadd.f32 %v402, %v404
          %v407 = vadd.f32 %v403, %v405
          %v408 = vadd.f32 %v406, %v247
          %v409 = vadd.f32 %v407, %v247
          %v410 = vmin.f32 %v408, 0.0
          %v411 = vmin.f32 %v409, 0.0
          %v412 = vmul.f32 %v410, 1.442695
          %v413 = vpow.pop %v412
          %v414 = vmul.f32 %v411, 1.442695
          %v415 = vpow.pop %v414
          %v416 = vsub.f32 %v413, 1.0
          %v417 = vsub.f32 %v415, 1.0
          %v418 = vmul.f32 %v416, 1.6732632
          %v419 = vmul.f32 %v417, 1.6732632
          %vm420 = vcmp.gt.f32.partialorder %v408, 0.0
          %vm421 = vcmp.gt.f32.partialorder %v409, 0.0
          %v422 = vsel %vm420, %v408, %v418
          %v423 = vsel %vm421, %v409, %v419
          %s424 = sld [smem:[#allocation2 + $0x1b]]
          %v425 = vstv %s424
          %v426 = vmul.f32 %v425, %v422
          %v427 = vmul.f32 %v425, %v423
          %v428 = vadd.f32 %v388, %v426
          %v429 = vadd.f32 %v389, %v427
          %s430 = sld [smem:[#allocation2 + $0x27]]
          %v431 = vstv %s430
          %v432 = vmul.f32 %v431, %v422
          %v433 = vmul.f32 %v431, %v423
          %v434 = vadd.f32 %v394, %v432
          %v435 = vadd.f32 %v395, %v433
          %s436 = sld [smem:[#allocation2 + $0x33]]
          %v437 = vstv %s436
          %v438 = vmul.f32 %v437, %v422
          %v439 = vmul.f32 %v437, %v423
          %v440 = vadd.f32 %v400, %v438
          %v441 = vadd.f32 %v401, %v439
          %v442 = vmul.f32 %v283, %v382
          %v443 = vmul.f32 %v283, %v383
          %v444 = vmul.f32 %v287, %v376
          %v445 = vmul.f32 %v287, %v377
          %v446 = vadd.f32 %v442, %v444
          %v447 = vadd.f32 %v443, %v445
          %v448 = vadd.f32 %v446, %v293
          %v449 = vadd.f32 %v447, %v293
          %v450 = vmin.f32 %v448, 0.0
          %v451 = vmin.f32 %v449, 0.0
          %v452 = vmul.f32 %v450, 1.442695
          %v453 = vpow.pop %v452
          %v454 = vmul.f32 %v451, 1.442695
          %v455 = vpow.pop %v454
          %v456 = vsub.f32 %v453, 1.0
          %v457 = vsub.f32 %v455, 1.0
          %v458 = vmul.f32 %v456, 1.6732632
          %v459 = vmul.f32 %v457, 1.6732632
          %vm460 = vcmp.gt.f32.partialorder %v448, 0.0
          %vm461 = vcmp.gt.f32.partialorder %v449, 0.0
          %v462 = vsel %vm460, %v448, %v458
          %v463 = vsel %vm461, %v449, %v459
          %s464 = sld [smem:[#allocation2 + $0x1c]]
          %v465 = vstv %s464
          %v466 = vmul.f32 %v465, %v462
          %v467 = vmul.f32 %v465, %v463
          %v468 = vadd.f32 %v428, %v466
          %v469 = vadd.f32 %v429, %v467
          %s470 = sld [smem:[#allocation2 + $0x28]]
          %v471 = vstv %s470
          %v472 = vmul.f32 %v471, %v462
          %v473 = vmul.f32 %v471, %v463
          %v474 = vadd.f32 %v434, %v472
          %v475 = vadd.f32 %v435, %v473
          %s476 = sld [smem:[#allocation2 + $0x34]]
          %v477 = vstv %s476
          %v478 = vmul.f32 %v477, %v462
          %v479 = vmul.f32 %v477, %v463
          %v480 = vadd.f32 %v440, %v478
          %v481 = vadd.f32 %v441, %v479
          %v482 = vmul.f32 %v329, %v382
          %v483 = vmul.f32 %v329, %v383
          %v484 = vmul.f32 %v333, %v376
          %v485 = vmul.f32 %v333, %v377
          %v486 = vadd.f32 %v482, %v484
          %v487 = vadd.f32 %v483, %v485
          %v488 = vadd.f32 %v486, %v339
          %v489 = vadd.f32 %v487, %v339
          %v490 = vmin.f32 %v488, 0.0
          %v491 = vmin.f32 %v489, 0.0
          %v492 = vmul.f32 %v490, 1.442695
          %v493 = vpow.pop %v492
          %v494 = vmul.f32 %v491, 1.442695
          %v495 = vpow.pop %v494
          %v496 = vsub.f32 %v493, 1.0
          %v497 = vsub.f32 %v495, 1.0
          %v498 = vmul.f32 %v496, 1.6732632
          %v499 = vmul.f32 %v497, 1.6732632
          %vm500 = vcmp.gt.f32.partialorder %v488, 0.0
          %vm501 = vcmp.gt.f32.partialorder %v489, 0.0
          %v502 = vsel %vm500, %v488, %v498
          %v503 = vsel %vm501, %v489, %v499
          %s504 = sld [smem:[#allocation2 + $0x1d]]
          %v505 = vstv %s504
          %v506 = vmul.f32 %v505, %v502
          %v507 = vmul.f32 %v505, %v503
          %v508 = vadd.f32 %v468, %v506
          %v509 = vadd.f32 %v469, %v507
          %s510 = sld [smem:[#allocation2 + $0x29]]
          %v511 = vstv %s510
          %v512 = vmul.f32 %v511, %v502
          %v513 = vmul.f32 %v511, %v503
          %v514 = vadd.f32 %v474, %v512
          %v515 = vadd.f32 %v475, %v513
          %s516 = sld [smem:[#allocation2 + $0x35]]
          %v517 = vstv %s516
          %v518 = vmul.f32 %v517, %v502
          %v519 = vmul.f32 %v517, %v503
          %v520 = vadd.f32 %v480, %v518
          %v521 = vadd.f32 %v481, %v519
          %s522 = sadd.s32 %s211, 64
          %s523 = scalar_lea.vmem %s180, %s522 [#allocation6]
          %v524 = vld [vmem:[%s523] sm:$0xff]
          %v525 = vld [vmem:[%s523 + $0x8] sm:$0xff]
          %526 = vrot.lane.b32.xlu0 %v524, 1
          %v527 = vpop.permute.xlu0 %526
          %528 = vrot.lane.b32.xlu0 %v525, 1
          %v529 = vpop.permute.xlu0 %528
          %v530 = vsel %vm214, 0.0, %v527
          %v531 = vsel %vm214, 0.0, %v529
          %s532 = sld [smem:[#allocation2 + $0xb]]
          %v533 = vstv %s532
          %v534 = vmul.f32 %v533, %v524
          %v535 = vmul.f32 %v533, %v525
          %v536 = vadd.f32 %v508, %v534
          %v537 = vadd.f32 %v509, %v535
          %s538 = sld [smem:[#allocation2 + $0xf]]
          %v539 = vstv %s538
          %v540 = vmul.f32 %v539, %v524
          %v541 = vmul.f32 %v539, %v525
          %v542 = vadd.f32 %v514, %v540
          %v543 = vadd.f32 %v515, %v541
          %s544 = sld [smem:[#allocation2 + $0x13]]
          %v545 = vstv %s544
          %v546 = vmul.f32 %v545, %v524
          %v547 = vmul.f32 %v545, %v525
          %v548 = vadd.f32 %v520, %v546
          %v549 = vadd.f32 %v521, %v547
          %v550 = vmul.f32 %v237, %v530
          %v551 = vmul.f32 %v237, %v531
          %v552 = vmul.f32 %v241, %v524
          %v553 = vmul.f32 %v241, %v525
          %v554 = vadd.f32 %v550, %v552
          %v555 = vadd.f32 %v551, %v553
          %v556 = vadd.f32 %v554, %v247
          %v557 = vadd.f32 %v555, %v247
          %v558 = vmin.f32 %v556, 0.0
          %v559 = vmin.f32 %v557, 0.0
          %v560 = vmul.f32 %v558, 1.442695
          %v561 = vpow.pop %v560
          %v562 = vmul.f32 %v559, 1.442695
          %v563 = vpow.pop %v562
          %v564 = vsub.f32 %v561, 1.0
          %v565 = vsub.f32 %v563, 1.0
          %v566 = vmul.f32 %v564, 1.6732632
          %v567 = vmul.f32 %v565, 1.6732632
          %vm568 = vcmp.gt.f32.partialorder %v556, 0.0
          %vm569 = vcmp.gt.f32.partialorder %v557, 0.0
          %v570 = vsel %vm568, %v556, %v566
          %v571 = vsel %vm569, %v557, %v567
          %s572 = sld [smem:[#allocation2 + $0x1e]]
          %v573 = vstv %s572
          %v574 = vmul.f32 %v573, %v570
          %v575 = vmul.f32 %v573, %v571
          %v576 = vadd.f32 %v536, %v574
          %v577 = vadd.f32 %v537, %v575
          %s578 = sld [smem:[#allocation2 + $0x2a]]
          %v579 = vstv %s578
          %v580 = vmul.f32 %v579, %v570
          %v581 = vmul.f32 %v579, %v571
          %v582 = vadd.f32 %v542, %v580
          %v583 = vadd.f32 %v543, %v581
          %s584 = sld [smem:[#allocation2 + $0x36]]
          %v585 = vstv %s584
          %v586 = vmul.f32 %v585, %v570
          %v587 = vmul.f32 %v585, %v571
          %v588 = vadd.f32 %v548, %v586
          %v589 = vadd.f32 %v549, %v587
          %v590 = vmul.f32 %v283, %v530
          %v591 = vmul.f32 %v283, %v531
          %v592 = vmul.f32 %v287, %v524
          %v593 = vmul.f32 %v287, %v525
          %v594 = vadd.f32 %v590, %v592
          %v595 = vadd.f32 %v591, %v593
          %v596 = vadd.f32 %v594, %v293
          %v597 = vadd.f32 %v595, %v293
          %v598 = vmin.f32 %v596, 0.0
          %v599 = vmin.f32 %v597, 0.0
          %v600 = vmul.f32 %v598, 1.442695
          %v601 = vpow.pop %v600
          %v602 = vmul.f32 %v599, 1.442695
          %v603 = vpow.pop %v602
          %v604 = vsub.f32 %v601, 1.0
          %v605 = vsub.f32 %v603, 1.0
          %v606 = vmul.f32 %v604, 1.6732632
          %v607 = vmul.f32 %v605, 1.6732632
          %vm608 = vcmp.gt.f32.partialorder %v596, 0.0
          %vm609 = vcmp.gt.f32.partialorder %v597, 0.0
          %v610 = vsel %vm608, %v596, %v606
          %v611 = vsel %vm609, %v597, %v607
          %s612 = sld [smem:[#allocation2 + $0x1f]]
          %v613 = vstv %s612
          %v614 = vmul.f32 %v613, %v610
          %v615 = vmul.f32 %v613, %v611
          %v616 = vadd.f32 %v576, %v614
          %v617 = vadd.f32 %v577, %v615
          %s618 = sld [smem:[#allocation2 + $0x2b]]
          %v619 = vstv %s618
          %v620 = vmul.f32 %v619, %v610
          %v621 = vmul.f32 %v619, %v611
          %v622 = vadd.f32 %v582, %v620
          %v623 = vadd.f32 %v583, %v621
          %s624 = sld [smem:[#allocation2 + $0x37]]
          %v625 = vstv %s624
          %v626 = vmul.f32 %v625, %v610
          %v627 = vmul.f32 %v625, %v611
          %v628 = vadd.f32 %v588, %v626
          %v629 = vadd.f32 %v589, %v627
          %v630 = vmul.f32 %v329, %v530
          %v631 = vmul.f32 %v329, %v531
          %v632 = vmul.f32 %v333, %v524
          %v633 = vmul.f32 %v333, %v525
          %v634 = vadd.f32 %v630, %v632
          %v635 = vadd.f32 %v631, %v633
          %v636 = vadd.f32 %v634, %v339
          %v637 = vadd.f32 %v635, %v339
          %v638 = vmin.f32 %v636, 0.0
          %v639 = vmin.f32 %v637, 0.0
          %v640 = vmul.f32 %v638, 1.442695
          %v641 = vpow.pop %v640
          %v642 = vmul.f32 %v639, 1.442695
          %v643 = vpow.pop %v642
          %v644 = vsub.f32 %v641, 1.0
          %v645 = vsub.f32 %v643, 1.0
          %v646 = vmul.f32 %v644, 1.6732632
          %v647 = vmul.f32 %v645, 1.6732632
          %vm648 = vcmp.gt.f32.partialorder %v636, 0.0
          %vm649 = vcmp.gt.f32.partialorder %v637, 0.0
          %v650 = vsel %vm648, %v636, %v646
          %v651 = vsel %vm649, %v637, %v647
          %s652 = sld [smem:[#allocation2 + $0x20]]
          %v653 = vstv %s652
          %v654 = vmul.f32 %v653, %v650
          %v655 = vmul.f32 %v653, %v651
          %v656 = vadd.f32 %v616, %v654
          %v657 = vadd.f32 %v617, %v655
          %s658 = sld [smem:[#allocation2 + $0x2c]]
          %v659 = vstv %s658
          %v660 = vmul.f32 %v659, %v650
          %v661 = vmul.f32 %v659, %v651
          %v662 = vadd.f32 %v622, %v660
          %v663 = vadd.f32 %v623, %v661
          %s664 = sld [smem:[#allocation2 + $0x38]]
          %v665 = vstv %s664
          %v666 = vmul.f32 %v665, %v650
          %v667 = vmul.f32 %v665, %v651
          %v668 = vadd.f32 %v628, %v666
          %v669 = vadd.f32 %v629, %v667
          %s670 = sadd.s32 %s211, 96
          %s671 = scalar_lea.vmem %s180, %s670 [#allocation6]
          %v672 = vld [vmem:[%s671] sm:$0xff]
          %v673 = vld [vmem:[%s671 + $0x8] sm:$0xff]
          %674 = vrot.lane.b32.xlu0 %v672, 1
          %v675 = vpop.permute.xlu0 %674
          %676 = vrot.lane.b32.xlu0 %v673, 1
          %v677 = vpop.permute.xlu0 %676
          %v678 = vsel %vm214, 0.0, %v675
          %v679 = vsel %vm214, 0.0, %v677
          %s680 = sld [smem:[#allocation2 + $0xc]]
          %v681 = vstv %s680
          %v682 = vmul.f32 %v681, %v672
          %v683 = vmul.f32 %v681, %v673
          %v684 = vadd.f32 %v656, %v682
          %v685 = vadd.f32 %v657, %v683
          %s686 = sld [smem:[#allocation2 + $0x10]]
          %v687 = vstv %s686
          %v688 = vmul.f32 %v687, %v672
          %v689 = vmul.f32 %v687, %v673
          %v690 = vadd.f32 %v662, %v688
          %v691 = vadd.f32 %v663, %v689
          %s692 = sld [smem:[#allocation2 + $0x14]]
          %v693 = vstv %s692
          %v694 = vmul.f32 %v693, %v672
          %v695 = vmul.f32 %v693, %v673
          %v696 = vadd.f32 %v668, %v694
          %v697 = vadd.f32 %v669, %v695
          %v698 = vmul.f32 %v237, %v678
          %v699 = vmul.f32 %v237, %v679
          %v700 = vmul.f32 %v241, %v672
          %v701 = vmul.f32 %v241, %v673
          %v702 = vadd.f32 %v698, %v700
          %v703 = vadd.f32 %v699, %v701
          %v704 = vadd.f32 %v702, %v247
          %v705 = vadd.f32 %v703, %v247
          %v706 = vmin.f32 %v704, 0.0
          %v707 = vmin.f32 %v705, 0.0
          %v708 = vmul.f32 %v706, 1.442695
          %v709 = vpow.pop %v708
          %v710 = vmul.f32 %v707, 1.442695
          %v711 = vpow.pop %v710
          %v712 = vsub.f32 %v709, 1.0
          %v713 = vsub.f32 %v711, 1.0
          %v714 = vmul.f32 %v712, 1.6732632
          %v715 = vmul.f32 %v713, 1.6732632
          %vm716 = vcmp.gt.f32.partialorder %v704, 0.0
          %vm717 = vcmp.gt.f32.partialorder %v705, 0.0
          %v718 = vsel %vm716, %v704, %v714
          %v719 = vsel %vm717, %v705, %v715
          %s720 = sld [smem:[#allocation2 + $0x21]]
          %v721 = vstv %s720
          %v722 = vmul.f32 %v721, %v718
          %v723 = vmul.f32 %v721, %v719
          %v724 = vadd.f32 %v684, %v722
          %v725 = vadd.f32 %v685, %v723
          %s726 = sld [smem:[#allocation2 + $0x2d]]
          %v727 = vstv %s726
          %v728 = vmul.f32 %v727, %v718
          %v729 = vmul.f32 %v727, %v719
          %v730 = vadd.f32 %v690, %v728
          %v731 = vadd.f32 %v691, %v729
          %s732 = sld [smem:[#allocation2 + $0x39]]
          %v733 = vstv %s732
          %v734 = vmul.f32 %v733, %v718
          %v735 = vmul.f32 %v733, %v719
          %v736 = vadd.f32 %v696, %v734
          %v737 = vadd.f32 %v697, %v735
          %v738 = vmul.f32 %v283, %v678
          %v739 = vmul.f32 %v283, %v679
          %v740 = vmul.f32 %v287, %v672
          %v741 = vmul.f32 %v287, %v673
          %v742 = vadd.f32 %v738, %v740
          %v743 = vadd.f32 %v739, %v741
          %v744 = vadd.f32 %v742, %v293
          %v745 = vadd.f32 %v743, %v293
          %v746 = vmin.f32 %v744, 0.0
          %v747 = vmin.f32 %v745, 0.0
          %v748 = vmul.f32 %v746, 1.442695
          %v749 = vpow.pop %v748
          %v750 = vmul.f32 %v747, 1.442695
          %v751 = vpow.pop %v750
          %v752 = vsub.f32 %v749, 1.0
          %v753 = vsub.f32 %v751, 1.0
          %v754 = vmul.f32 %v752, 1.6732632
          %v755 = vmul.f32 %v753, 1.6732632
          %vm756 = vcmp.gt.f32.partialorder %v744, 0.0
          %vm757 = vcmp.gt.f32.partialorder %v745, 0.0
          %v758 = vsel %vm756, %v744, %v754
          %v759 = vsel %vm757, %v745, %v755
          %s760 = sld [smem:[#allocation2 + $0x22]]
          %v761 = vstv %s760
          %v762 = vmul.f32 %v761, %v758
          %v763 = vmul.f32 %v761, %v759
          %v764 = vadd.f32 %v724, %v762
          %v765 = vadd.f32 %v725, %v763
          %s766 = sld [smem:[#allocation2 + $0x2e]]
          %v767 = vstv %s766
          %v768 = vmul.f32 %v767, %v758
          %v769 = vmul.f32 %v767, %v759
          %v770 = vadd.f32 %v730, %v768
          %v771 = vadd.f32 %v731, %v769
          %s772 = sld [smem:[#allocation2 + $0x3a]]
          %v773 = vstv %s772
          %v774 = vmul.f32 %v773, %v758
          %v775 = vmul.f32 %v773, %v759
          %v776 = vadd.f32 %v736, %v774
          %v777 = vadd.f32 %v737, %v775
          %v778 = vmul.f32 %v329, %v678
          %v779 = vmul.f32 %v329, %v679
          %v780 = vmul.f32 %v333, %v672
          %v781 = vmul.f32 %v333, %v673
          %v782 = vadd.f32 %v778, %v780
          %v783 = vadd.f32 %v779, %v781
          %v784 = vadd.f32 %v782, %v339
          %v785 = vadd.f32 %v783, %v339
          %v786 = vmin.f32 %v784, 0.0
          %v787 = vmin.f32 %v785, 0.0
          %v788 = vmul.f32 %v786, 1.442695
          %v789 = vpow.pop %v788
          %v790 = vmul.f32 %v787, 1.442695
          %v791 = vpow.pop %v790
          %v792 = vsub.f32 %v789, 1.0
          %v793 = vsub.f32 %v791, 1.0
          %v794 = vmul.f32 %v792, 1.6732632
          %v795 = vmul.f32 %v793, 1.6732632
          %vm796 = vcmp.gt.f32.partialorder %v784, 0.0
          %vm797 = vcmp.gt.f32.partialorder %v785, 0.0
          %v798 = vsel %vm796, %v784, %v794
          %v799 = vsel %vm797, %v785, %v795
          %s800 = sld [smem:[#allocation2 + $0x23]]
          %v801 = vstv %s800
          %v802 = vmul.f32 %v801, %v798
          %v803 = vmul.f32 %v801, %v799
          %v804 = vadd.f32 %v764, %v802
          %v805 = vadd.f32 %v765, %v803
          %s806 = sld [smem:[#allocation2 + $0x2f]]
          %v807 = vstv %s806
          %v808 = vmul.f32 %v807, %v798
          %v809 = vmul.f32 %v807, %v799
          %v810 = vadd.f32 %v770, %v808
          %v811 = vadd.f32 %v771, %v809
          %s812 = sld [smem:[#allocation2 + $0x3b]]
          %v813 = vstv %s812
          %v814 = vmul.f32 %v813, %v798
          %v815 = vmul.f32 %v813, %v799
          %v816 = vadd.f32 %v776, %v814
          %v817 = vadd.f32 %v777, %v815
          %s818 = sld [smem:[#allocation2 + $0x15]]
          %v819 = vstv %s818
          %v820 = vadd.f32 %v804, %v819
          %v821 = vadd.f32 %v805, %v819
          %s822 = sld [smem:[#allocation2 + $0x16]]
          %v823 = vstv %s822
          %v824 = vadd.f32 %v810, %v823
          %v825 = vadd.f32 %v811, %v823
          %s826 = sld [smem:[#allocation2 + $0x17]]
          %v827 = vstv %s826
          %v828 = vadd.f32 %v816, %v827
          %v829 = vadd.f32 %v817, %v827
          %vm830 = vcmp.lt.s32.totalorder %v213, 2
          %831 = vrot.lane.b32.xlu0 %v820, 2
          %v832 = vpop.permute.xlu0 %831
          %833 = vrot.lane.b32.xlu0 %v821, 2
          %v834 = vpop.permute.xlu0 %833
          %v835 = vsel %vm830, 0.0, %v832
          %v836 = vsel %vm830, 0.0, %v834
          %837 = vrot.lane.b32.xlu0 %v824, 2
          %v838 = vpop.permute.xlu0 %837
          %839 = vrot.lane.b32.xlu0 %v825, 2
          %v840 = vpop.permute.xlu0 %839
          %v841 = vsel %vm830, 0.0, %v838
          %v842 = vsel %vm830, 0.0, %v840
          %843 = vrot.lane.b32.xlu0 %v828, 2
          %v844 = vpop.permute.xlu0 %843
          %845 = vrot.lane.b32.xlu0 %v829, 2
          %v846 = vpop.permute.xlu0 %845
          %v847 = vsel %vm830, 0.0, %v844
          %v848 = vsel %vm830, 0.0, %v846
          %s849 = sld [smem:[#allocation2 + $0x84]]
          %v850 = vstv %s849
          %v851 = vmul.f32 %v850, %v820
          %v852 = vmul.f32 %v850, %v821
          %s853 = sld [smem:[#allocation2 + $0x85]]
          %v854 = vstv %s853
          %v855 = vmul.f32 %v854, %v824
          %v856 = vmul.f32 %v854, %v825
          %v857 = vadd.f32 %v851, %v855
          %v858 = vadd.f32 %v852, %v856
          %s859 = sld [smem:[#allocation2 + $0x86]]
          %v860 = vstv %s859
          %v861 = vmul.f32 %v860, %v828
          %v862 = vmul.f32 %v860, %v829
          %v863 = vadd.f32 %v857, %v861
          %v864 = vadd.f32 %v858, %v862
          %s865 = sld [smem:[#allocation2 + $0x3c]]
          %v866 = vstv %s865
          %v867 = vmul.f32 %v866, %v835
          %v868 = vmul.f32 %v866, %v836
          %v869 = vadd.f32 %v863, %v867
          %v870 = vadd.f32 %v864, %v868
          %s871 = sld [smem:[#allocation2 + $0x3d]]
          %v872 = vstv %s871
          %v873 = vmul.f32 %v872, %v841
          %v874 = vmul.f32 %v872, %v842
          %v875 = vadd.f32 %v869, %v873
          %v876 = vadd.f32 %v870, %v874
          %s877 = sld [smem:[#allocation2 + $0x3e]]
          %v878 = vstv %s877
          %v879 = vmul.f32 %v878, %v847
          %v880 = vmul.f32 %v878, %v848
          %v881 = vadd.f32 %v875, %v879
          %v882 = vadd.f32 %v876, %v880
          %s883 = sld [smem:[#allocation2 + $0xcc]]
          %v884 = vstv %s883
          %v885 = vadd.f32 %v881, %v884
          %v886 = vadd.f32 %v882, %v884
          %v887 = vmin.f32 %v885, 0.0
          %v888 = vmin.f32 %v886, 0.0
          %v889 = vmul.f32 %v887, 1.442695
          %v890 = vpow.pop %v889
          %v891 = vmul.f32 %v888, 1.442695
          %v892 = vpow.pop %v891
          %v893 = vsub.f32 %v890, 1.0
          %v894 = vsub.f32 %v892, 1.0
          %v895 = vmul.f32 %v893, 1.7580993
          %v896 = vmul.f32 %v894, 1.7580993
          %vm897 = vcmp.gt.f32.partialorder %v885, 0.0
          %vm898 = vcmp.gt.f32.partialorder %v886, 0.0
          %v899 = vmul.f32 %v885, 1.050701
          %v900 = vmul.f32 %v886, 1.050701
          %v901 = vsel %vm897, %v899, %v895
          %v902 = vsel %vm898, %v900, %v896
          %v903 = vadd.f32 %v820, %v901
          %v904 = vadd.f32 %v821, %v902
          %s905 = sld [smem:[#allocation2 + $0x87]]
          %v906 = vstv %s905
          %v907 = vmul.f32 %v906, %v820
          %v908 = vmul.f32 %v906, %v821
          %s909 = sld [smem:[#allocation2 + $0x88]]
          %v910 = vstv %s909
          %v911 = vmul.f32 %v910, %v824
          %v912 = vmul.f32 %v910, %v825
          %v913 = vadd.f32 %v907, %v911
          %v914 = vadd.f32 %v908, %v912
          %s915 = sld [smem:[#allocation2 + $0x89]]
          %v916 = vstv %s915
          %v917 = vmul.f32 %v916, %v828
          %v918 = vmul.f32 %v916, %v829
          %v919 = vadd.f32 %v913, %v917
          %v920 = vadd.f32 %v914, %v918
          %s921 = sld [smem:[#allocation2 + $0x3f]]
          %v922 = vstv %s921
          %v923 = vmul.f32 %v922, %v835
          %v924 = vmul.f32 %v922, %v836
          %v925 = vadd.f32 %v919, %v923
          %v926 = vadd.f32 %v920, %v924
          %s927 = sld [smem:[#allocation2 + $0x40]]
          %v928 = vstv %s927
          %v929 = vmul.f32 %v928, %v841
          %v930 = vmul.f32 %v928, %v842
          %v931 = vadd.f32 %v925, %v929
          %v932 = vadd.f32 %v926, %v930
          %s933 = sld [smem:[#allocation2 + $0x41]]
          %v934 = vstv %s933
          %v935 = vmul.f32 %v934, %v847
          %v936 = vmul.f32 %v934, %v848
          %v937 = vadd.f32 %v931, %v935
          %v938 = vadd.f32 %v932, %v936
          %s939 = sld [smem:[#allocation2 + $0xcd]]
          %v940 = vstv %s939
          %v941 = vadd.f32 %v937, %v940
          %v942 = vadd.f32 %v938, %v940
          %v943 = vmin.f32 %v941, 0.0
          %v944 = vmin.f32 %v942, 0.0
          %v945 = vmul.f32 %v943, 1.442695
          %v946 = vpow.pop %v945
          %v947 = vmul.f32 %v944, 1.442695
          %v948 = vpow.pop %v947
          %v949 = vsub.f32 %v946, 1.0
          %v950 = vsub.f32 %v948, 1.0
          %v951 = vmul.f32 %v949, 1.7580993
          %v952 = vmul.f32 %v950, 1.7580993
          %vm953 = vcmp.gt.f32.partialorder %v941, 0.0
          %vm954 = vcmp.gt.f32.partialorder %v942, 0.0
          %v955 = vmul.f32 %v941, 1.050701
          %v956 = vmul.f32 %v942, 1.050701
          %v957 = vsel %vm953, %v955, %v951
          %v958 = vsel %vm954, %v956, %v952
          %v959 = vadd.f32 %v824, %v957
          %v960 = vadd.f32 %v825, %v958
          %s961 = sld [smem:[#allocation2 + $0x8a]]
          %v962 = vstv %s961
          %v963 = vmul.f32 %v962, %v820
          %v964 = vmul.f32 %v962, %v821
          %s965 = sld [smem:[#allocation2 + $0x8b]]
          %v966 = vstv %s965
          %v967 = vmul.f32 %v966, %v824
          %v968 = vmul.f32 %v966, %v825
          %v969 = vadd.f32 %v963, %v967
          %v970 = vadd.f32 %v964, %v968
          %s971 = sld [smem:[#allocation2 + $0x8c]]
          %v972 = vstv %s971
          %v973 = vmul.f32 %v972, %v828
          %v974 = vmul.f32 %v972, %v829
          %v975 = vadd.f32 %v969, %v973
          %v976 = vadd.f32 %v970, %v974
          %s977 = sld [smem:[#allocation2 + $0x42]]
          %v978 = vstv %s977
          %v979 = vmul.f32 %v978, %v835
          %v980 = vmul.f32 %v978, %v836
          %v981 = vadd.f32 %v975, %v979
          %v982 = vadd.f32 %v976, %v980
          %s983 = sld [smem:[#allocation2 + $0x43]]
          %v984 = vstv %s983
          %v985 = vmul.f32 %v984, %v841
          %v986 = vmul.f32 %v984, %v842
          %v987 = vadd.f32 %v981, %v985
          %v988 = vadd.f32 %v982, %v986
          %s989 = sld [smem:[#allocation2 + $0x44]]
          %v990 = vstv %s989
          %v991 = vmul.f32 %v990, %v847
          %v992 = vmul.f32 %v990, %v848
          %v993 = vadd.f32 %v987, %v991
          %v994 = vadd.f32 %v988, %v992
          %s995 = sld [smem:[#allocation2 + $0xce]]
          %v996 = vstv %s995
          %v997 = vadd.f32 %v993, %v996
          %v998 = vadd.f32 %v994, %v996
          %v999 = vmin.f32 %v997, 0.0
          %v1000 = vmin.f32 %v998, 0.0
          %v1001 = vmul.f32 %v999, 1.442695
          %v1002 = vpow.pop %v1001
          %v1003 = vmul.f32 %v1000, 1.442695
          %v1004 = vpow.pop %v1003
          %v1005 = vsub.f32 %v1002, 1.0
          %v1006 = vsub.f32 %v1004, 1.0
          %v1007 = vmul.f32 %v1005, 1.7580993
          %v1008 = vmul.f32 %v1006, 1.7580993
          %vm1009 = vcmp.gt.f32.partialorder %v997, 0.0
          %vm1010 = vcmp.gt.f32.partialorder %v998, 0.0
          %v1011 = vmul.f32 %v997, 1.050701
          %v1012 = vmul.f32 %v998, 1.050701
          %v1013 = vsel %vm1009, %v1011, %v1007
          %v1014 = vsel %vm1010, %v1012, %v1008
          %v1015 = vadd.f32 %v828, %v1013
          %v1016 = vadd.f32 %v829, %v1014
          %vm1017 = vcmp.lt.s32.totalorder %v213, 4
          %1018 = vrot.lane.b32.xlu0 %v903, 4
          %v1019 = vpop.permute.xlu0 %1018
          %1020 = vrot.lane.b32.xlu0 %v904, 4
          %v1021 = vpop.permute.xlu0 %1020
          %v1022 = vsel %vm1017, 0.0, %v1019
          %v1023 = vsel %vm1017, 0.0, %v1021
          %1024 = vrot.lane.b32.xlu0 %v959, 4
          %v1025 = vpop.permute.xlu0 %1024
          %1026 = vrot.lane.b32.xlu0 %v960, 4
          %v1027 = vpop.permute.xlu0 %1026
          %v1028 = vsel %vm1017, 0.0, %v1025
          %v1029 = vsel %vm1017, 0.0, %v1027
          %1030 = vrot.lane.b32.xlu0 %v1015, 4
          %v1031 = vpop.permute.xlu0 %1030
          %1032 = vrot.lane.b32.xlu0 %v1016, 4
          %v1033 = vpop.permute.xlu0 %1032
          %v1034 = vsel %vm1017, 0.0, %v1031
          %v1035 = vsel %vm1017, 0.0, %v1033
          %s1036 = sld [smem:[#allocation2 + $0x8d]]
          %v1037 = vstv %s1036
          %v1038 = vmul.f32 %v1037, %v903
          %v1039 = vmul.f32 %v1037, %v904
          %s1040 = sld [smem:[#allocation2 + $0x8e]]
          %v1041 = vstv %s1040
          %v1042 = vmul.f32 %v1041, %v959
          %v1043 = vmul.f32 %v1041, %v960
          %v1044 = vadd.f32 %v1038, %v1042
          %v1045 = vadd.f32 %v1039, %v1043
          %s1046 = sld [smem:[#allocation2 + $0x8f]]
          %v1047 = vstv %s1046
          %v1048 = vmul.f32 %v1047, %v1015
          %v1049 = vmul.f32 %v1047, %v1016
          %v1050 = vadd.f32 %v1044, %v1048
          %v1051 = vadd.f32 %v1045, %v1049
          %s1052 = sld [smem:[#allocation2 + $0x45]]
          %v1053 = vstv %s1052
          %v1054 = vmul.f32 %v1053, %v1022
          %v1055 = vmul.f32 %v1053, %v1023
          %v1056 = vadd.f32 %v1050, %v1054
          %v1057 = vadd.f32 %v1051, %v1055
          %s1058 = sld [smem:[#allocation2 + $0x46]]
          %v1059 = vstv %s1058
          %v1060 = vmul.f32 %v1059, %v1028
          %v1061 = vmul.f32 %v1059, %v1029
          %v1062 = vadd.f32 %v1056, %v1060
          %v1063 = vadd.f32 %v1057, %v1061
          %s1064 = sld [smem:[#allocation2 + $0x47]]
          %v1065 = vstv %s1064
          %v1066 = vmul.f32 %v1065, %v1034
          %v1067 = vmul.f32 %v1065, %v1035
          %v1068 = vadd.f32 %v1062, %v1066
          %v1069 = vadd.f32 %v1063, %v1067
          %s1070 = sld [smem:[#allocation2 + $0xcf]]
          %v1071 = vstv %s1070
          %v1072 = vadd.f32 %v1068, %v1071
          %v1073 = vadd.f32 %v1069, %v1071
          %v1074 = vmin.f32 %v1072, 0.0
          %v1075 = vmin.f32 %v1073, 0.0
          %v1076 = vmul.f32 %v1074, 1.442695
          %v1077 = vpow.pop %v1076
          %v1078 = vmul.f32 %v1075, 1.442695
          %v1079 = vpow.pop %v1078
          %v1080 = vsub.f32 %v1077, 1.0
          %v1081 = vsub.f32 %v1079, 1.0
          %v1082 = vmul.f32 %v1080, 1.7580993
          %v1083 = vmul.f32 %v1081, 1.7580993
          %vm1084 = vcmp.gt.f32.partialorder %v1072, 0.0
          %vm1085 = vcmp.gt.f32.partialorder %v1073, 0.0
          %v1086 = vmul.f32 %v1072, 1.050701
          %v1087 = vmul.f32 %v1073, 1.050701
          %v1088 = vsel %vm1084, %v1086, %v1082
          %v1089 = vsel %vm1085, %v1087, %v1083
          %v1090 = vadd.f32 %v903, %v1088
          %v1091 = vadd.f32 %v904, %v1089
          %s1092 = sld [smem:[#allocation2 + $0x90]]
          %v1093 = vstv %s1092
          %v1094 = vmul.f32 %v1093, %v903
          %v1095 = vmul.f32 %v1093, %v904
          %s1096 = sld [smem:[#allocation2 + $0x91]]
          %v1097 = vstv %s1096
          %v1098 = vmul.f32 %v1097, %v959
          %v1099 = vmul.f32 %v1097, %v960
          %v1100 = vadd.f32 %v1094, %v1098
          %v1101 = vadd.f32 %v1095, %v1099
          %s1102 = sld [smem:[#allocation2 + $0x92]]
          %v1103 = vstv %s1102
          %v1104 = vmul.f32 %v1103, %v1015
          %v1105 = vmul.f32 %v1103, %v1016
          %v1106 = vadd.f32 %v1100, %v1104
          %v1107 = vadd.f32 %v1101, %v1105
          %s1108 = sld [smem:[#allocation2 + $0x48]]
          %v1109 = vstv %s1108
          %v1110 = vmul.f32 %v1109, %v1022
          %v1111 = vmul.f32 %v1109, %v1023
          %v1112 = vadd.f32 %v1106, %v1110
          %v1113 = vadd.f32 %v1107, %v1111
          %s1114 = sld [smem:[#allocation2 + $0x49]]
          %v1115 = vstv %s1114
          %v1116 = vmul.f32 %v1115, %v1028
          %v1117 = vmul.f32 %v1115, %v1029
          %v1118 = vadd.f32 %v1112, %v1116
          %v1119 = vadd.f32 %v1113, %v1117
          %s1120 = sld [smem:[#allocation2 + $0x4a]]
          %v1121 = vstv %s1120
          %v1122 = vmul.f32 %v1121, %v1034
          %v1123 = vmul.f32 %v1121, %v1035
          %v1124 = vadd.f32 %v1118, %v1122
          %v1125 = vadd.f32 %v1119, %v1123
          %s1126 = sld [smem:[#allocation2 + $0xd0]]
          %v1127 = vstv %s1126
          %v1128 = vadd.f32 %v1124, %v1127
          %v1129 = vadd.f32 %v1125, %v1127
          %v1130 = vmin.f32 %v1128, 0.0
          %v1131 = vmin.f32 %v1129, 0.0
          %v1132 = vmul.f32 %v1130, 1.442695
          %v1133 = vpow.pop %v1132
          %v1134 = vmul.f32 %v1131, 1.442695
          %v1135 = vpow.pop %v1134
          %v1136 = vsub.f32 %v1133, 1.0
          %v1137 = vsub.f32 %v1135, 1.0
          %v1138 = vmul.f32 %v1136, 1.7580993
          %v1139 = vmul.f32 %v1137, 1.7580993
          %vm1140 = vcmp.gt.f32.partialorder %v1128, 0.0
          %vm1141 = vcmp.gt.f32.partialorder %v1129, 0.0
          %v1142 = vmul.f32 %v1128, 1.050701
          %v1143 = vmul.f32 %v1129, 1.050701
          %v1144 = vsel %vm1140, %v1142, %v1138
          %v1145 = vsel %vm1141, %v1143, %v1139
          %v1146 = vadd.f32 %v959, %v1144
          %v1147 = vadd.f32 %v960, %v1145
          %s1148 = sld [smem:[#allocation2 + $0x93]]
          %v1149 = vstv %s1148
          %v1150 = vmul.f32 %v1149, %v903
          %v1151 = vmul.f32 %v1149, %v904
          %s1152 = sld [smem:[#allocation2 + $0x94]]
          %v1153 = vstv %s1152
          %v1154 = vmul.f32 %v1153, %v959
          %v1155 = vmul.f32 %v1153, %v960
          %v1156 = vadd.f32 %v1150, %v1154
          %v1157 = vadd.f32 %v1151, %v1155
          %s1158 = sld [smem:[#allocation2 + $0x95]]
          %v1159 = vstv %s1158
          %v1160 = vmul.f32 %v1159, %v1015
          %v1161 = vmul.f32 %v1159, %v1016
          %v1162 = vadd.f32 %v1156, %v1160
          %v1163 = vadd.f32 %v1157, %v1161
          %s1164 = sld [smem:[#allocation2 + $0x4b]]
          %v1165 = vstv %s1164
          %v1166 = vmul.f32 %v1165, %v1022
          %v1167 = vmul.f32 %v1165, %v1023
          %v1168 = vadd.f32 %v1162, %v1166
          %v1169 = vadd.f32 %v1163, %v1167
          %s1170 = sld [smem:[#allocation2 + $0x4c]]
          %v1171 = vstv %s1170
          %v1172 = vmul.f32 %v1171, %v1028
          %v1173 = vmul.f32 %v1171, %v1029
          %v1174 = vadd.f32 %v1168, %v1172
          %v1175 = vadd.f32 %v1169, %v1173
          %s1176 = sld [smem:[#allocation2 + $0x4d]]
          %v1177 = vstv %s1176
          %v1178 = vmul.f32 %v1177, %v1034
          %v1179 = vmul.f32 %v1177, %v1035
          %v1180 = vadd.f32 %v1174, %v1178
          %v1181 = vadd.f32 %v1175, %v1179
          %s1182 = sld [smem:[#allocation2 + $0xd1]]
          %v1183 = vstv %s1182
          %v1184 = vadd.f32 %v1180, %v1183
          %v1185 = vadd.f32 %v1181, %v1183
          %v1186 = vmin.f32 %v1184, 0.0
          %v1187 = vmin.f32 %v1185, 0.0
          %v1188 = vmul.f32 %v1186, 1.442695
          %v1189 = vpow.pop %v1188
          %v1190 = vmul.f32 %v1187, 1.442695
          %v1191 = vpow.pop %v1190
          %v1192 = vsub.f32 %v1189, 1.0
          %v1193 = vsub.f32 %v1191, 1.0
          %v1194 = vmul.f32 %v1192, 1.7580993
          %v1195 = vmul.f32 %v1193, 1.7580993
          %vm1196 = vcmp.gt.f32.partialorder %v1184, 0.0
          %vm1197 = vcmp.gt.f32.partialorder %v1185, 0.0
          %v1198 = vmul.f32 %v1184, 1.050701
          %v1199 = vmul.f32 %v1185, 1.050701
          %v1200 = vsel %vm1196, %v1198, %v1194
          %v1201 = vsel %vm1197, %v1199, %v1195
          %v1202 = vadd.f32 %v1015, %v1200
          %v1203 = vadd.f32 %v1016, %v1201
          %vm1204 = vcmp.lt.s32.totalorder %v213, 8
          %1205 = vrot.lane.b32.xlu0 %v1090, 8
          %v1206 = vpop.permute.xlu0 %1205
          %1207 = vrot.lane.b32.xlu0 %v1091, 8
          %v1208 = vpop.permute.xlu0 %1207
          %v1209 = vsel %vm1204, 0.0, %v1206
          %v1210 = vsel %vm1204, 0.0, %v1208
          %1211 = vrot.lane.b32.xlu0 %v1146, 8
          %v1212 = vpop.permute.xlu0 %1211
          %1213 = vrot.lane.b32.xlu0 %v1147, 8
          %v1214 = vpop.permute.xlu0 %1213
          %v1215 = vsel %vm1204, 0.0, %v1212
          %v1216 = vsel %vm1204, 0.0, %v1214
          %1217 = vrot.lane.b32.xlu0 %v1202, 8
          %v1218 = vpop.permute.xlu0 %1217
          %1219 = vrot.lane.b32.xlu0 %v1203, 8
          %v1220 = vpop.permute.xlu0 %1219
          %v1221 = vsel %vm1204, 0.0, %v1218
          %v1222 = vsel %vm1204, 0.0, %v1220
          %s1223 = sld [smem:[#allocation2 + $0x96]]
          %v1224 = vstv %s1223
          %v1225 = vmul.f32 %v1224, %v1090
          %v1226 = vmul.f32 %v1224, %v1091
          %s1227 = sld [smem:[#allocation2 + $0x97]]
          %v1228 = vstv %s1227
          %v1229 = vmul.f32 %v1228, %v1146
          %v1230 = vmul.f32 %v1228, %v1147
          %v1231 = vadd.f32 %v1225, %v1229
          %v1232 = vadd.f32 %v1226, %v1230
          %s1233 = sld [smem:[#allocation2 + $0x98]]
          %v1234 = vstv %s1233
          %v1235 = vmul.f32 %v1234, %v1202
          %v1236 = vmul.f32 %v1234, %v1203
          %v1237 = vadd.f32 %v1231, %v1235
          %v1238 = vadd.f32 %v1232, %v1236
          %s1239 = sld [smem:[#allocation2 + $0x4e]]
          %v1240 = vstv %s1239
          %v1241 = vmul.f32 %v1240, %v1209
          %v1242 = vmul.f32 %v1240, %v1210
          %v1243 = vadd.f32 %v1237, %v1241
          %v1244 = vadd.f32 %v1238, %v1242
          %s1245 = sld [smem:[#allocation2 + $0x4f]]
          %v1246 = vstv %s1245
          %v1247 = vmul.f32 %v1246, %v1215
          %v1248 = vmul.f32 %v1246, %v1216
          %v1249 = vadd.f32 %v1243, %v1247
          %v1250 = vadd.f32 %v1244, %v1248
          %s1251 = sld [smem:[#allocation2 + $0x50]]
          %v1252 = vstv %s1251
          %v1253 = vmul.f32 %v1252, %v1221
          %v1254 = vmul.f32 %v1252, %v1222
          %v1255 = vadd.f32 %v1249, %v1253
          %v1256 = vadd.f32 %v1250, %v1254
          %s1257 = sld [smem:[#allocation2 + $0xd2]]
          %v1258 = vstv %s1257
          %v1259 = vadd.f32 %v1255, %v1258
          %v1260 = vadd.f32 %v1256, %v1258
          %v1261 = vmin.f32 %v1259, 0.0
          %v1262 = vmin.f32 %v1260, 0.0
          %v1263 = vmul.f32 %v1261, 1.442695
          %v1264 = vpow.pop %v1263
          %v1265 = vmul.f32 %v1262, 1.442695
          %v1266 = vpow.pop %v1265
          %v1267 = vsub.f32 %v1264, 1.0
          %v1268 = vsub.f32 %v1266, 1.0
          %v1269 = vmul.f32 %v1267, 1.7580993
          %v1270 = vmul.f32 %v1268, 1.7580993
          %vm1271 = vcmp.gt.f32.partialorder %v1259, 0.0
          %vm1272 = vcmp.gt.f32.partialorder %v1260, 0.0
          %v1273 = vmul.f32 %v1259, 1.050701
          %v1274 = vmul.f32 %v1260, 1.050701
          %v1275 = vsel %vm1271, %v1273, %v1269
          %v1276 = vsel %vm1272, %v1274, %v1270
          %v1277 = vadd.f32 %v1090, %v1275
          %v1278 = vadd.f32 %v1091, %v1276
          %s1279 = sld [smem:[#allocation2 + $0x99]]
          %v1280 = vstv %s1279
          %v1281 = vmul.f32 %v1280, %v1090
          %v1282 = vmul.f32 %v1280, %v1091
          %s1283 = sld [smem:[#allocation2 + $0x9a]]
          %v1284 = vstv %s1283
          %v1285 = vmul.f32 %v1284, %v1146
          %v1286 = vmul.f32 %v1284, %v1147
          %v1287 = vadd.f32 %v1281, %v1285
          %v1288 = vadd.f32 %v1282, %v1286
          %s1289 = sld [smem:[#allocation2 + $0x9b]]
          %v1290 = vstv %s1289
          %v1291 = vmul.f32 %v1290, %v1202
          %v1292 = vmul.f32 %v1290, %v1203
          %v1293 = vadd.f32 %v1287, %v1291
          %v1294 = vadd.f32 %v1288, %v1292
          %s1295 = sld [smem:[#allocation2 + $0x51]]
          %v1296 = vstv %s1295
          %v1297 = vmul.f32 %v1296, %v1209
          %v1298 = vmul.f32 %v1296, %v1210
          %v1299 = vadd.f32 %v1293, %v1297
          %v1300 = vadd.f32 %v1294, %v1298
          %s1301 = sld [smem:[#allocation2 + $0x52]]
          %v1302 = vstv %s1301
          %v1303 = vmul.f32 %v1302, %v1215
          %v1304 = vmul.f32 %v1302, %v1216
          %v1305 = vadd.f32 %v1299, %v1303
          %v1306 = vadd.f32 %v1300, %v1304
          %s1307 = sld [smem:[#allocation2 + $0x53]]
          %v1308 = vstv %s1307
          %v1309 = vmul.f32 %v1308, %v1221
          %v1310 = vmul.f32 %v1308, %v1222
          %v1311 = vadd.f32 %v1305, %v1309
          %v1312 = vadd.f32 %v1306, %v1310
          %s1313 = sld [smem:[#allocation2 + $0xd3]]
          %v1314 = vstv %s1313
          %v1315 = vadd.f32 %v1311, %v1314
          %v1316 = vadd.f32 %v1312, %v1314
          %v1317 = vmin.f32 %v1315, 0.0
          %v1318 = vmin.f32 %v1316, 0.0
          %v1319 = vmul.f32 %v1317, 1.442695
          %v1320 = vpow.pop %v1319
          %v1321 = vmul.f32 %v1318, 1.442695
          %v1322 = vpow.pop %v1321
          %v1323 = vsub.f32 %v1320, 1.0
          %v1324 = vsub.f32 %v1322, 1.0
          %v1325 = vmul.f32 %v1323, 1.7580993
          %v1326 = vmul.f32 %v1324, 1.7580993
          %vm1327 = vcmp.gt.f32.partialorder %v1315, 0.0
          %vm1328 = vcmp.gt.f32.partialorder %v1316, 0.0
          %v1329 = vmul.f32 %v1315, 1.050701
          %v1330 = vmul.f32 %v1316, 1.050701
          %v1331 = vsel %vm1327, %v1329, %v1325
          %v1332 = vsel %vm1328, %v1330, %v1326
          %v1333 = vadd.f32 %v1146, %v1331
          %v1334 = vadd.f32 %v1147, %v1332
          %s1335 = sld [smem:[#allocation2 + $0x9c]]
          %v1336 = vstv %s1335
          %v1337 = vmul.f32 %v1336, %v1090
          %v1338 = vmul.f32 %v1336, %v1091
          %s1339 = sld [smem:[#allocation2 + $0x9d]]
          %v1340 = vstv %s1339
          %v1341 = vmul.f32 %v1340, %v1146
          %v1342 = vmul.f32 %v1340, %v1147
          %v1343 = vadd.f32 %v1337, %v1341
          %v1344 = vadd.f32 %v1338, %v1342
          %s1345 = sld [smem:[#allocation2 + $0x9e]]
          %v1346 = vstv %s1345
          %v1347 = vmul.f32 %v1346, %v1202
          %v1348 = vmul.f32 %v1346, %v1203
          %v1349 = vadd.f32 %v1343, %v1347
          %v1350 = vadd.f32 %v1344, %v1348
          %s1351 = sld [smem:[#allocation2 + $0x54]]
          %v1352 = vstv %s1351
          %v1353 = vmul.f32 %v1352, %v1209
          %v1354 = vmul.f32 %v1352, %v1210
          %v1355 = vadd.f32 %v1349, %v1353
          %v1356 = vadd.f32 %v1350, %v1354
          %s1357 = sld [smem:[#allocation2 + $0x55]]
          %v1358 = vstv %s1357
          %v1359 = vmul.f32 %v1358, %v1215
          %v1360 = vmul.f32 %v1358, %v1216
          %v1361 = vadd.f32 %v1355, %v1359
          %v1362 = vadd.f32 %v1356, %v1360
          %s1363 = sld [smem:[#allocation2 + $0x56]]
          %v1364 = vstv %s1363
          %v1365 = vmul.f32 %v1364, %v1221
          %v1366 = vmul.f32 %v1364, %v1222
          %v1367 = vadd.f32 %v1361, %v1365
          %v1368 = vadd.f32 %v1362, %v1366
          %s1369 = sld [smem:[#allocation2 + $0xd4]]
          %v1370 = vstv %s1369
          %v1371 = vadd.f32 %v1367, %v1370
          %v1372 = vadd.f32 %v1368, %v1370
          %v1373 = vmin.f32 %v1371, 0.0
          %v1374 = vmin.f32 %v1372, 0.0
          %v1375 = vmul.f32 %v1373, 1.442695
          %v1376 = vpow.pop %v1375
          %v1377 = vmul.f32 %v1374, 1.442695
          %v1378 = vpow.pop %v1377
          %v1379 = vsub.f32 %v1376, 1.0
          %v1380 = vsub.f32 %v1378, 1.0
          %v1381 = vmul.f32 %v1379, 1.7580993
          %v1382 = vmul.f32 %v1380, 1.7580993
          %vm1383 = vcmp.gt.f32.partialorder %v1371, 0.0
          %vm1384 = vcmp.gt.f32.partialorder %v1372, 0.0
          %v1385 = vmul.f32 %v1371, 1.050701
          %v1386 = vmul.f32 %v1372, 1.050701
          %v1387 = vsel %vm1383, %v1385, %v1381
          %v1388 = vsel %vm1384, %v1386, %v1382
          %v1389 = vadd.f32 %v1202, %v1387
          %v1390 = vadd.f32 %v1203, %v1388
          %vm1391 = vcmp.lt.s32.totalorder %v213, 16
          %1392 = vrot.lane.b32.xlu0 %v1277, 16
          %v1393 = vpop.permute.xlu0 %1392
          %1394 = vrot.lane.b32.xlu0 %v1278, 16
          %v1395 = vpop.permute.xlu0 %1394
          %v1396 = vsel %vm1391, 0.0, %v1393
          %v1397 = vsel %vm1391, 0.0, %v1395
          %1398 = vrot.lane.b32.xlu0 %v1333, 16
          %v1399 = vpop.permute.xlu0 %1398
          %1400 = vrot.lane.b32.xlu0 %v1334, 16
          %v1401 = vpop.permute.xlu0 %1400
          %v1402 = vsel %vm1391, 0.0, %v1399
          %v1403 = vsel %vm1391, 0.0, %v1401
          %1404 = vrot.lane.b32.xlu0 %v1389, 16
          %v1405 = vpop.permute.xlu0 %1404
          %1406 = vrot.lane.b32.xlu0 %v1390, 16
          %v1407 = vpop.permute.xlu0 %1406
          %v1408 = vsel %vm1391, 0.0, %v1405
          %v1409 = vsel %vm1391, 0.0, %v1407
          %s1410 = sld [smem:[#allocation2 + $0x9f]]
          %v1411 = vstv %s1410
          %v1412 = vmul.f32 %v1411, %v1277
          %v1413 = vmul.f32 %v1411, %v1278
          %s1414 = sld [smem:[#allocation2 + $0xa0]]
          %v1415 = vstv %s1414
          %v1416 = vmul.f32 %v1415, %v1333
          %v1417 = vmul.f32 %v1415, %v1334
          %v1418 = vadd.f32 %v1412, %v1416
          %v1419 = vadd.f32 %v1413, %v1417
          %s1420 = sld [smem:[#allocation2 + $0xa1]]
          %v1421 = vstv %s1420
          %v1422 = vmul.f32 %v1421, %v1389
          %v1423 = vmul.f32 %v1421, %v1390
          %v1424 = vadd.f32 %v1418, %v1422
          %v1425 = vadd.f32 %v1419, %v1423
          %s1426 = sld [smem:[#allocation2 + $0x57]]
          %v1427 = vstv %s1426
          %v1428 = vmul.f32 %v1427, %v1396
          %v1429 = vmul.f32 %v1427, %v1397
          %v1430 = vadd.f32 %v1424, %v1428
          %v1431 = vadd.f32 %v1425, %v1429
          %s1432 = sld [smem:[#allocation2 + $0x58]]
          %v1433 = vstv %s1432
          %v1434 = vmul.f32 %v1433, %v1402
          %v1435 = vmul.f32 %v1433, %v1403
          %v1436 = vadd.f32 %v1430, %v1434
          %v1437 = vadd.f32 %v1431, %v1435
          %s1438 = sld [smem:[#allocation2 + $0x59]]
          %v1439 = vstv %s1438
          %v1440 = vmul.f32 %v1439, %v1408
          %v1441 = vmul.f32 %v1439, %v1409
          %v1442 = vadd.f32 %v1436, %v1440
          %v1443 = vadd.f32 %v1437, %v1441
          %s1444 = sld [smem:[#allocation2 + $0xd5]]
          %v1445 = vstv %s1444
          %v1446 = vadd.f32 %v1442, %v1445
          %v1447 = vadd.f32 %v1443, %v1445
          %v1448 = vmin.f32 %v1446, 0.0
          %v1449 = vmin.f32 %v1447, 0.0
          %v1450 = vmul.f32 %v1448, 1.442695
          %v1451 = vpow.pop %v1450
          %v1452 = vmul.f32 %v1449, 1.442695
          %v1453 = vpow.pop %v1452
          %v1454 = vsub.f32 %v1451, 1.0
          %v1455 = vsub.f32 %v1453, 1.0
          %v1456 = vmul.f32 %v1454, 1.7580993
          %v1457 = vmul.f32 %v1455, 1.7580993
          %vm1458 = vcmp.gt.f32.partialorder %v1446, 0.0
          %vm1459 = vcmp.gt.f32.partialorder %v1447, 0.0
          %v1460 = vmul.f32 %v1446, 1.050701
          %v1461 = vmul.f32 %v1447, 1.050701
          %v1462 = vsel %vm1458, %v1460, %v1456
          %v1463 = vsel %vm1459, %v1461, %v1457
          %v1464 = vadd.f32 %v1277, %v1462
          %v1465 = vadd.f32 %v1278, %v1463
          %s1466 = sld [smem:[#allocation2 + $0xa2]]
          %v1467 = vstv %s1466
          %v1468 = vmul.f32 %v1467, %v1277
          %v1469 = vmul.f32 %v1467, %v1278
          %s1470 = sld [smem:[#allocation2 + $0xa3]]
          %v1471 = vstv %s1470
          %v1472 = vmul.f32 %v1471, %v1333
          %v1473 = vmul.f32 %v1471, %v1334
          %v1474 = vadd.f32 %v1468, %v1472
          %v1475 = vadd.f32 %v1469, %v1473
          %s1476 = sld [smem:[#allocation2 + $0xa4]]
          %v1477 = vstv %s1476
          %v1478 = vmul.f32 %v1477, %v1389
          %v1479 = vmul.f32 %v1477, %v1390
          %v1480 = vadd.f32 %v1474, %v1478
          %v1481 = vadd.f32 %v1475, %v1479
          %s1482 = sld [smem:[#allocation2 + $0x5a]]
          %v1483 = vstv %s1482
          %v1484 = vmul.f32 %v1483, %v1396
          %v1485 = vmul.f32 %v1483, %v1397
          %v1486 = vadd.f32 %v1480, %v1484
          %v1487 = vadd.f32 %v1481, %v1485
          %s1488 = sld [smem:[#allocation2 + $0x5b]]
          %v1489 = vstv %s1488
          %v1490 = vmul.f32 %v1489, %v1402
          %v1491 = vmul.f32 %v1489, %v1403
          %v1492 = vadd.f32 %v1486, %v1490
          %v1493 = vadd.f32 %v1487, %v1491
          %s1494 = sld [smem:[#allocation2 + $0x5c]]
          %v1495 = vstv %s1494
          %v1496 = vmul.f32 %v1495, %v1408
          %v1497 = vmul.f32 %v1495, %v1409
          %v1498 = vadd.f32 %v1492, %v1496
          %v1499 = vadd.f32 %v1493, %v1497
          %s1500 = sld [smem:[#allocation2 + $0xd6]]
          %v1501 = vstv %s1500
          %v1502 = vadd.f32 %v1498, %v1501
          %v1503 = vadd.f32 %v1499, %v1501
          %v1504 = vmin.f32 %v1502, 0.0
          %v1505 = vmin.f32 %v1503, 0.0
          %v1506 = vmul.f32 %v1504, 1.442695
          %v1507 = vpow.pop %v1506
          %v1508 = vmul.f32 %v1505, 1.442695
          %v1509 = vpow.pop %v1508
          %v1510 = vsub.f32 %v1507, 1.0
          %v1511 = vsub.f32 %v1509, 1.0
          %v1512 = vmul.f32 %v1510, 1.7580993
          %v1513 = vmul.f32 %v1511, 1.7580993
          %vm1514 = vcmp.gt.f32.partialorder %v1502, 0.0
          %vm1515 = vcmp.gt.f32.partialorder %v1503, 0.0
          %v1516 = vmul.f32 %v1502, 1.050701
          %v1517 = vmul.f32 %v1503, 1.050701
          %v1518 = vsel %vm1514, %v1516, %v1512
          %v1519 = vsel %vm1515, %v1517, %v1513
          %v1520 = vadd.f32 %v1333, %v1518
          %v1521 = vadd.f32 %v1334, %v1519
          %s1522 = sld [smem:[#allocation2 + $0xa5]]
          %v1523 = vstv %s1522
          %v1524 = vmul.f32 %v1523, %v1277
          %v1525 = vmul.f32 %v1523, %v1278
          %s1526 = sld [smem:[#allocation2 + $0xa6]]
          %v1527 = vstv %s1526
          %v1528 = vmul.f32 %v1527, %v1333
          %v1529 = vmul.f32 %v1527, %v1334
          %v1530 = vadd.f32 %v1524, %v1528
          %v1531 = vadd.f32 %v1525, %v1529
          %s1532 = sld [smem:[#allocation2 + $0xa7]]
          %v1533 = vstv %s1532
          %v1534 = vmul.f32 %v1533, %v1389
          %v1535 = vmul.f32 %v1533, %v1390
          %v1536 = vadd.f32 %v1530, %v1534
          %v1537 = vadd.f32 %v1531, %v1535
          %s1538 = sld [smem:[#allocation2 + $0x5d]]
          %v1539 = vstv %s1538
          %v1540 = vmul.f32 %v1539, %v1396
          %v1541 = vmul.f32 %v1539, %v1397
          %v1542 = vadd.f32 %v1536, %v1540
          %v1543 = vadd.f32 %v1537, %v1541
          %s1544 = sld [smem:[#allocation2 + $0x5e]]
          %v1545 = vstv %s1544
          %v1546 = vmul.f32 %v1545, %v1402
          %v1547 = vmul.f32 %v1545, %v1403
          %v1548 = vadd.f32 %v1542, %v1546
          %v1549 = vadd.f32 %v1543, %v1547
          %s1550 = sld [smem:[#allocation2 + $0x5f]]
          %v1551 = vstv %s1550
          %v1552 = vmul.f32 %v1551, %v1408
          %v1553 = vmul.f32 %v1551, %v1409
          %v1554 = vadd.f32 %v1548, %v1552
          %v1555 = vadd.f32 %v1549, %v1553
          %s1556 = sld [smem:[#allocation2 + $0xd7]]
          %v1557 = vstv %s1556
          %v1558 = vadd.f32 %v1554, %v1557
          %v1559 = vadd.f32 %v1555, %v1557
          %v1560 = vmin.f32 %v1558, 0.0
          %v1561 = vmin.f32 %v1559, 0.0
          %v1562 = vmul.f32 %v1560, 1.442695
          %v1563 = vpow.pop %v1562
          %v1564 = vmul.f32 %v1561, 1.442695
          %v1565 = vpow.pop %v1564
          %v1566 = vsub.f32 %v1563, 1.0
          %v1567 = vsub.f32 %v1565, 1.0
          %v1568 = vmul.f32 %v1566, 1.7580993
          %v1569 = vmul.f32 %v1567, 1.7580993
          %vm1570 = vcmp.gt.f32.partialorder %v1558, 0.0
          %vm1571 = vcmp.gt.f32.partialorder %v1559, 0.0
          %v1572 = vmul.f32 %v1558, 1.050701
          %v1573 = vmul.f32 %v1559, 1.050701
          %v1574 = vsel %vm1570, %v1572, %v1568
          %v1575 = vsel %vm1571, %v1573, %v1569
          %v1576 = vadd.f32 %v1389, %v1574
          %v1577 = vadd.f32 %v1390, %v1575
          %vm1578 = vcmp.lt.s32.totalorder %v213, 32
          %1579 = vrot.lane.b32.xlu0 %v1464, 32
          %v1580 = vpop.permute.xlu0 %1579
          %1581 = vrot.lane.b32.xlu0 %v1465, 32
          %v1582 = vpop.permute.xlu0 %1581
          %v1583 = vsel %vm1578, 0.0, %v1580
          %v1584 = vsel %vm1578, 0.0, %v1582
          %1585 = vrot.lane.b32.xlu0 %v1520, 32
          %v1586 = vpop.permute.xlu0 %1585
          %1587 = vrot.lane.b32.xlu0 %v1521, 32
          %v1588 = vpop.permute.xlu0 %1587
          %v1589 = vsel %vm1578, 0.0, %v1586
          %v1590 = vsel %vm1578, 0.0, %v1588
          %1591 = vrot.lane.b32.xlu0 %v1576, 32
          %v1592 = vpop.permute.xlu0 %1591
          %1593 = vrot.lane.b32.xlu0 %v1577, 32
          %v1594 = vpop.permute.xlu0 %1593
          %v1595 = vsel %vm1578, 0.0, %v1592
          %v1596 = vsel %vm1578, 0.0, %v1594
          %s1597 = sld [smem:[#allocation2 + $0xa8]]
          %v1598 = vstv %s1597
          %v1599 = vmul.f32 %v1598, %v1464
          %v1600 = vmul.f32 %v1598, %v1465
          %s1601 = sld [smem:[#allocation2 + $0xa9]]
          %v1602 = vstv %s1601
          %v1603 = vmul.f32 %v1602, %v1520
          %v1604 = vmul.f32 %v1602, %v1521
          %v1605 = vadd.f32 %v1599, %v1603
          %v1606 = vadd.f32 %v1600, %v1604
          %s1607 = sld [smem:[#allocation2 + $0xaa]]
          %v1608 = vstv %s1607
          %v1609 = vmul.f32 %v1608, %v1576
          %v1610 = vmul.f32 %v1608, %v1577
          %v1611 = vadd.f32 %v1605, %v1609
          %v1612 = vadd.f32 %v1606, %v1610
          %s1613 = sld [smem:[#allocation2 + $0x60]]
          %v1614 = vstv %s1613
          %v1615 = vmul.f32 %v1614, %v1583
          %v1616 = vmul.f32 %v1614, %v1584
          %v1617 = vadd.f32 %v1611, %v1615
          %v1618 = vadd.f32 %v1612, %v1616
          %s1619 = sld [smem:[#allocation2 + $0x61]]
          %v1620 = vstv %s1619
          %v1621 = vmul.f32 %v1620, %v1589
          %v1622 = vmul.f32 %v1620, %v1590
          %v1623 = vadd.f32 %v1617, %v1621
          %v1624 = vadd.f32 %v1618, %v1622
          %s1625 = sld [smem:[#allocation2 + $0x62]]
          %v1626 = vstv %s1625
          %v1627 = vmul.f32 %v1626, %v1595
          %v1628 = vmul.f32 %v1626, %v1596
          %v1629 = vadd.f32 %v1623, %v1627
          %v1630 = vadd.f32 %v1624, %v1628
          %s1631 = sld [smem:[#allocation2 + $0xd8]]
          %v1632 = vstv %s1631
          %v1633 = vadd.f32 %v1629, %v1632
          %v1634 = vadd.f32 %v1630, %v1632
          %v1635 = vmin.f32 %v1633, 0.0
          %v1636 = vmin.f32 %v1634, 0.0
          %v1637 = vmul.f32 %v1635, 1.442695
          %v1638 = vpow.pop %v1637
          %v1639 = vmul.f32 %v1636, 1.442695
          %v1640 = vpow.pop %v1639
          %v1641 = vsub.f32 %v1638, 1.0
          %v1642 = vsub.f32 %v1640, 1.0
          %v1643 = vmul.f32 %v1641, 1.7580993
          %v1644 = vmul.f32 %v1642, 1.7580993
          %vm1645 = vcmp.gt.f32.partialorder %v1633, 0.0
          %vm1646 = vcmp.gt.f32.partialorder %v1634, 0.0
          %v1647 = vmul.f32 %v1633, 1.050701
          %v1648 = vmul.f32 %v1634, 1.050701
          %v1649 = vsel %vm1645, %v1647, %v1643
          %v1650 = vsel %vm1646, %v1648, %v1644
          %v1651 = vadd.f32 %v1464, %v1649
          %v1652 = vadd.f32 %v1465, %v1650
          %s1653 = sld [smem:[#allocation2 + $0xab]]
          %v1654 = vstv %s1653
          %v1655 = vmul.f32 %v1654, %v1464
          %v1656 = vmul.f32 %v1654, %v1465
          %s1657 = sld [smem:[#allocation2 + $0xac]]
          %v1658 = vstv %s1657
          %v1659 = vmul.f32 %v1658, %v1520
          %v1660 = vmul.f32 %v1658, %v1521
          %v1661 = vadd.f32 %v1655, %v1659
          %v1662 = vadd.f32 %v1656, %v1660
          %s1663 = sld [smem:[#allocation2 + $0xad]]
          %v1664 = vstv %s1663
          %v1665 = vmul.f32 %v1664, %v1576
          %v1666 = vmul.f32 %v1664, %v1577
          %v1667 = vadd.f32 %v1661, %v1665
          %v1668 = vadd.f32 %v1662, %v1666
          %s1669 = sld [smem:[#allocation2 + $0x63]]
          %v1670 = vstv %s1669
          %v1671 = vmul.f32 %v1670, %v1583
          %v1672 = vmul.f32 %v1670, %v1584
          %v1673 = vadd.f32 %v1667, %v1671
          %v1674 = vadd.f32 %v1668, %v1672
          %s1675 = sld [smem:[#allocation2 + $0x64]]
          %v1676 = vstv %s1675
          %v1677 = vmul.f32 %v1676, %v1589
          %v1678 = vmul.f32 %v1676, %v1590
          %v1679 = vadd.f32 %v1673, %v1677
          %v1680 = vadd.f32 %v1674, %v1678
          %s1681 = sld [smem:[#allocation2 + $0x65]]
          %v1682 = vstv %s1681
          %v1683 = vmul.f32 %v1682, %v1595
          %v1684 = vmul.f32 %v1682, %v1596
          %v1685 = vadd.f32 %v1679, %v1683
          %v1686 = vadd.f32 %v1680, %v1684
          %s1687 = sld [smem:[#allocation2 + $0xd9]]
          %v1688 = vstv %s1687
          %v1689 = vadd.f32 %v1685, %v1688
          %v1690 = vadd.f32 %v1686, %v1688
          %v1691 = vmin.f32 %v1689, 0.0
          %v1692 = vmin.f32 %v1690, 0.0
          %v1693 = vmul.f32 %v1691, 1.442695
          %v1694 = vpow.pop %v1693
          %v1695 = vmul.f32 %v1692, 1.442695
          %v1696 = vpow.pop %v1695
          %v1697 = vsub.f32 %v1694, 1.0
          %v1698 = vsub.f32 %v1696, 1.0
          %v1699 = vmul.f32 %v1697, 1.7580993
          %v1700 = vmul.f32 %v1698, 1.7580993
          %vm1701 = vcmp.gt.f32.partialorder %v1689, 0.0
          %vm1702 = vcmp.gt.f32.partialorder %v1690, 0.0
          %v1703 = vmul.f32 %v1689, 1.050701
          %v1704 = vmul.f32 %v1690, 1.050701
          %v1705 = vsel %vm1701, %v1703, %v1699
          %v1706 = vsel %vm1702, %v1704, %v1700
          %v1707 = vadd.f32 %v1520, %v1705
          %v1708 = vadd.f32 %v1521, %v1706
          %s1709 = sld [smem:[#allocation2 + $0xae]]
          %v1710 = vstv %s1709
          %v1711 = vmul.f32 %v1710, %v1464
          %v1712 = vmul.f32 %v1710, %v1465
          %s1713 = sld [smem:[#allocation2 + $0xaf]]
          %v1714 = vstv %s1713
          %v1715 = vmul.f32 %v1714, %v1520
          %v1716 = vmul.f32 %v1714, %v1521
          %v1717 = vadd.f32 %v1711, %v1715
          %v1718 = vadd.f32 %v1712, %v1716
          %s1719 = sld [smem:[#allocation2 + $0xb0]]
          %v1720 = vstv %s1719
          %v1721 = vmul.f32 %v1720, %v1576
          %v1722 = vmul.f32 %v1720, %v1577
          %v1723 = vadd.f32 %v1717, %v1721
          %v1724 = vadd.f32 %v1718, %v1722
          %s1725 = sld [smem:[#allocation2 + $0x66]]
          %v1726 = vstv %s1725
          %v1727 = vmul.f32 %v1726, %v1583
          %v1728 = vmul.f32 %v1726, %v1584
          %v1729 = vadd.f32 %v1723, %v1727
          %v1730 = vadd.f32 %v1724, %v1728
          %s1731 = sld [smem:[#allocation2 + $0x67]]
          %v1732 = vstv %s1731
          %v1733 = vmul.f32 %v1732, %v1589
          %v1734 = vmul.f32 %v1732, %v1590
          %v1735 = vadd.f32 %v1729, %v1733
          %v1736 = vadd.f32 %v1730, %v1734
          %s1737 = sld [smem:[#allocation2 + $0x68]]
          %v1738 = vstv %s1737
          %v1739 = vmul.f32 %v1738, %v1595
          %v1740 = vmul.f32 %v1738, %v1596
          %v1741 = vadd.f32 %v1735, %v1739
          %v1742 = vadd.f32 %v1736, %v1740
          %s1743 = sld [smem:[#allocation2 + $0xda]]
          %v1744 = vstv %s1743
          %v1745 = vadd.f32 %v1741, %v1744
          %v1746 = vadd.f32 %v1742, %v1744
          %v1747 = vmin.f32 %v1745, 0.0
          %v1748 = vmin.f32 %v1746, 0.0
          %v1749 = vmul.f32 %v1747, 1.442695
          %v1750 = vpow.pop %v1749
          %v1751 = vmul.f32 %v1748, 1.442695
          %v1752 = vpow.pop %v1751
          %v1753 = vsub.f32 %v1750, 1.0
          %v1754 = vsub.f32 %v1752, 1.0
          %v1755 = vmul.f32 %v1753, 1.7580993
          %v1756 = vmul.f32 %v1754, 1.7580993
          %vm1757 = vcmp.gt.f32.partialorder %v1745, 0.0
          %vm1758 = vcmp.gt.f32.partialorder %v1746, 0.0
          %v1759 = vmul.f32 %v1745, 1.050701
          %v1760 = vmul.f32 %v1746, 1.050701
          %v1761 = vsel %vm1757, %v1759, %v1755
          %v1762 = vsel %vm1758, %v1760, %v1756
          %v1763 = vadd.f32 %v1576, %v1761
          %v1764 = vadd.f32 %v1577, %v1762
          %vm1765 = vcmp.lt.s32.totalorder %v213, 64
          %1766 = vrot.lane.b32.xlu0 %v1651, 64
          %v1767 = vpop.permute.xlu0 %1766
          %1768 = vrot.lane.b32.xlu0 %v1652, 64
          %v1769 = vpop.permute.xlu0 %1768
          %v1770 = vsel %vm1765, 0.0, %v1767
          %v1771 = vsel %vm1765, 0.0, %v1769
          %1772 = vrot.lane.b32.xlu0 %v1707, 64
          %v1773 = vpop.permute.xlu0 %1772
          %1774 = vrot.lane.b32.xlu0 %v1708, 64
          %v1775 = vpop.permute.xlu0 %1774
          %v1776 = vsel %vm1765, 0.0, %v1773
          %v1777 = vsel %vm1765, 0.0, %v1775
          %1778 = vrot.lane.b32.xlu0 %v1763, 64
          %v1779 = vpop.permute.xlu0 %1778
          %1780 = vrot.lane.b32.xlu0 %v1764, 64
          %v1781 = vpop.permute.xlu0 %1780
          %v1782 = vsel %vm1765, 0.0, %v1779
          %v1783 = vsel %vm1765, 0.0, %v1781
          %s1784 = sld [smem:[#allocation2 + $0xb1]]
          %v1785 = vstv %s1784
          %v1786 = vmul.f32 %v1785, %v1651
          %v1787 = vmul.f32 %v1785, %v1652
          %s1788 = sld [smem:[#allocation2 + $0xb2]]
          %v1789 = vstv %s1788
          %v1790 = vmul.f32 %v1789, %v1707
          %v1791 = vmul.f32 %v1789, %v1708
          %v1792 = vadd.f32 %v1786, %v1790
          %v1793 = vadd.f32 %v1787, %v1791
          %s1794 = sld [smem:[#allocation2 + $0xb3]]
          %v1795 = vstv %s1794
          %v1796 = vmul.f32 %v1795, %v1763
          %v1797 = vmul.f32 %v1795, %v1764
          %v1798 = vadd.f32 %v1792, %v1796
          %v1799 = vadd.f32 %v1793, %v1797
          %s1800 = sld [smem:[#allocation2 + $0x69]]
          %v1801 = vstv %s1800
          %v1802 = vmul.f32 %v1801, %v1770
          %v1803 = vmul.f32 %v1801, %v1771
          %v1804 = vadd.f32 %v1798, %v1802
          %v1805 = vadd.f32 %v1799, %v1803
          %s1806 = sld [smem:[#allocation2 + $0x6a]]
          %v1807 = vstv %s1806
          %v1808 = vmul.f32 %v1807, %v1776
          %v1809 = vmul.f32 %v1807, %v1777
          %v1810 = vadd.f32 %v1804, %v1808
          %v1811 = vadd.f32 %v1805, %v1809
          %s1812 = sld [smem:[#allocation2 + $0x6b]]
          %v1813 = vstv %s1812
          %v1814 = vmul.f32 %v1813, %v1782
          %v1815 = vmul.f32 %v1813, %v1783
          %v1816 = vadd.f32 %v1810, %v1814
          %v1817 = vadd.f32 %v1811, %v1815
          %s1818 = sld [smem:[#allocation2 + $0xdb]]
          %v1819 = vstv %s1818
          %v1820 = vadd.f32 %v1816, %v1819
          %v1821 = vadd.f32 %v1817, %v1819
          %v1822 = vmin.f32 %v1820, 0.0
          %v1823 = vmin.f32 %v1821, 0.0
          %v1824 = vmul.f32 %v1822, 1.442695
          %v1825 = vpow.pop %v1824
          %v1826 = vmul.f32 %v1823, 1.442695
          %v1827 = vpow.pop %v1826
          %v1828 = vsub.f32 %v1825, 1.0
          %v1829 = vsub.f32 %v1827, 1.0
          %v1830 = vmul.f32 %v1828, 1.7580993
          %v1831 = vmul.f32 %v1829, 1.7580993
          %vm1832 = vcmp.gt.f32.partialorder %v1820, 0.0
          %vm1833 = vcmp.gt.f32.partialorder %v1821, 0.0
          %v1834 = vmul.f32 %v1820, 1.050701
          %v1835 = vmul.f32 %v1821, 1.050701
          %v1836 = vsel %vm1832, %v1834, %v1830
          %v1837 = vsel %vm1833, %v1835, %v1831
          %v1838 = vadd.f32 %v1651, %v1836
          %v1839 = vadd.f32 %v1652, %v1837
          %s1840 = sld [smem:[#allocation2 + $0xb4]]
          %v1841 = vstv %s1840
          %v1842 = vmul.f32 %v1841, %v1651
          %v1843 = vmul.f32 %v1841, %v1652
          %s1844 = sld [smem:[#allocation2 + $0xb5]]
          %v1845 = vstv %s1844
          %v1846 = vmul.f32 %v1845, %v1707
          %v1847 = vmul.f32 %v1845, %v1708
          %v1848 = vadd.f32 %v1842, %v1846
          %v1849 = vadd.f32 %v1843, %v1847
          %s1850 = sld [smem:[#allocation2 + $0xb6]]
          %v1851 = vstv %s1850
          %v1852 = vmul.f32 %v1851, %v1763
          %v1853 = vmul.f32 %v1851, %v1764
          %v1854 = vadd.f32 %v1848, %v1852
          %v1855 = vadd.f32 %v1849, %v1853
          %s1856 = sld [smem:[#allocation2 + $0x6c]]
          %v1857 = vstv %s1856
          %v1858 = vmul.f32 %v1857, %v1770
          %v1859 = vmul.f32 %v1857, %v1771
          %v1860 = vadd.f32 %v1854, %v1858
          %v1861 = vadd.f32 %v1855, %v1859
          %s1862 = sld [smem:[#allocation2 + $0x6d]]
          %v1863 = vstv %s1862
          %v1864 = vmul.f32 %v1863, %v1776
          %v1865 = vmul.f32 %v1863, %v1777
          %v1866 = vadd.f32 %v1860, %v1864
          %v1867 = vadd.f32 %v1861, %v1865
          %s1868 = sld [smem:[#allocation2 + $0x6e]]
          %v1869 = vstv %s1868
          %v1870 = vmul.f32 %v1869, %v1782
          %v1871 = vmul.f32 %v1869, %v1783
          %v1872 = vadd.f32 %v1866, %v1870
          %v1873 = vadd.f32 %v1867, %v1871
          %s1874 = sld [smem:[#allocation2 + $0xdc]]
          %v1875 = vstv %s1874
          %v1876 = vadd.f32 %v1872, %v1875
          %v1877 = vadd.f32 %v1873, %v1875
          %v1878 = vmin.f32 %v1876, 0.0
          %v1879 = vmin.f32 %v1877, 0.0
          %v1880 = vmul.f32 %v1878, 1.442695
          %v1881 = vpow.pop %v1880
          %v1882 = vmul.f32 %v1879, 1.442695
          %v1883 = vpow.pop %v1882
          %v1884 = vsub.f32 %v1881, 1.0
          %v1885 = vsub.f32 %v1883, 1.0
          %v1886 = vmul.f32 %v1884, 1.7580993
          %v1887 = vmul.f32 %v1885, 1.7580993
          %vm1888 = vcmp.gt.f32.partialorder %v1876, 0.0
          %vm1889 = vcmp.gt.f32.partialorder %v1877, 0.0
          %v1890 = vmul.f32 %v1876, 1.050701
          %v1891 = vmul.f32 %v1877, 1.050701
          %v1892 = vsel %vm1888, %v1890, %v1886
          %v1893 = vsel %vm1889, %v1891, %v1887
          %v1894 = vadd.f32 %v1707, %v1892
          %v1895 = vadd.f32 %v1708, %v1893
          %s1896 = sld [smem:[#allocation2 + $0xb7]]
          %v1897 = vstv %s1896
          %v1898 = vmul.f32 %v1897, %v1651
          %v1899 = vmul.f32 %v1897, %v1652
          %s1900 = sld [smem:[#allocation2 + $0xb8]]
          %v1901 = vstv %s1900
          %v1902 = vmul.f32 %v1901, %v1707
          %v1903 = vmul.f32 %v1901, %v1708
          %v1904 = vadd.f32 %v1898, %v1902
          %v1905 = vadd.f32 %v1899, %v1903
          %s1906 = sld [smem:[#allocation2 + $0xb9]]
          %v1907 = vstv %s1906
          %v1908 = vmul.f32 %v1907, %v1763
          %v1909 = vmul.f32 %v1907, %v1764
          %v1910 = vadd.f32 %v1904, %v1908
          %v1911 = vadd.f32 %v1905, %v1909
          %s1912 = sld [smem:[#allocation2 + $0x6f]]
          %v1913 = vstv %s1912
          %v1914 = vmul.f32 %v1913, %v1770
          %v1915 = vmul.f32 %v1913, %v1771
          %v1916 = vadd.f32 %v1910, %v1914
          %v1917 = vadd.f32 %v1911, %v1915
          %s1918 = sld [smem:[#allocation2 + $0x70]]
          %v1919 = vstv %s1918
          %v1920 = vmul.f32 %v1919, %v1776
          %v1921 = vmul.f32 %v1919, %v1777
          %v1922 = vadd.f32 %v1916, %v1920
          %v1923 = vadd.f32 %v1917, %v1921
          %s1924 = sld [smem:[#allocation2 + $0x71]]
          %v1925 = vstv %s1924
          %v1926 = vmul.f32 %v1925, %v1782
          %v1927 = vmul.f32 %v1925, %v1783
          %v1928 = vadd.f32 %v1922, %v1926
          %v1929 = vadd.f32 %v1923, %v1927
          %s1930 = sld [smem:[#allocation2 + $0xdd]]
          %v1931 = vstv %s1930
          %v1932 = vadd.f32 %v1928, %v1931
          %v1933 = vadd.f32 %v1929, %v1931
          %v1934 = vmin.f32 %v1932, 0.0
          %v1935 = vmin.f32 %v1933, 0.0
          %v1936 = vmul.f32 %v1934, 1.442695
          %v1937 = vpow.pop %v1936
          %v1938 = vmul.f32 %v1935, 1.442695
          %v1939 = vpow.pop %v1938
          %v1940 = vsub.f32 %v1937, 1.0
          %v1941 = vsub.f32 %v1939, 1.0
          %v1942 = vmul.f32 %v1940, 1.7580993
          %v1943 = vmul.f32 %v1941, 1.7580993
          %vm1944 = vcmp.gt.f32.partialorder %v1932, 0.0
          %vm1945 = vcmp.gt.f32.partialorder %v1933, 0.0
          %v1946 = vmul.f32 %v1932, 1.050701
          %v1947 = vmul.f32 %v1933, 1.050701
          %v1948 = vsel %vm1944, %v1946, %v1942
          %v1949 = vsel %vm1945, %v1947, %v1943
          %v1950 = vadd.f32 %v1763, %v1948
          %v1951 = vadd.f32 %v1764, %v1949
          %s1952 = sld [smem:[#allocation2 + $0xba]]
          %v1953 = vstv %s1952
          %v1954 = vmul.f32 %v1953, %v1838
          %v1955 = vmul.f32 %v1953, %v1839
          %s1956 = sld [smem:[#allocation2 + $0xbb]]
          %v1957 = vstv %s1956
          %v1958 = vmul.f32 %v1957, %v1894
          %v1959 = vmul.f32 %v1957, %v1895
          %v1960 = vadd.f32 %v1954, %v1958
          %v1961 = vadd.f32 %v1955, %v1959
          %s1962 = sld [smem:[#allocation2 + $0xbc]]
          %v1963 = vstv %s1962
          %v1964 = vmul.f32 %v1963, %v1950
          %v1965 = vmul.f32 %v1963, %v1951
          %v1966 = vadd.f32 %v1960, %v1964
          %v1967 = vadd.f32 %v1961, %v1965
          %s1968 = sld [smem:[#allocation2 + $0xde]]
          %v1969 = vstv %s1968
          %v1970 = vadd.f32 %v1966, %v1969
          %v1971 = vadd.f32 %v1967, %v1969
          %v1972 = vmin.f32 %v1970, 0.0
          %v1973 = vmin.f32 %v1971, 0.0
          %v1974 = vmul.f32 %v1972, 1.442695
          %v1975 = vpow.pop %v1974
          %v1976 = vmul.f32 %v1973, 1.442695
          %v1977 = vpow.pop %v1976
          %v1978 = vsub.f32 %v1975, 1.0
          %v1979 = vsub.f32 %v1977, 1.0
          %v1980 = vmul.f32 %v1978, 1.7580993
          %v1981 = vmul.f32 %v1979, 1.7580993
          %vm1982 = vcmp.gt.f32.partialorder %v1970, 0.0
          %vm1983 = vcmp.gt.f32.partialorder %v1971, 0.0
          %v1984 = vmul.f32 %v1970, 1.050701
          %v1985 = vmul.f32 %v1971, 1.050701
          %v1986 = vsel %vm1982, %v1984, %v1980
          %v1987 = vsel %vm1983, %v1985, %v1981
          %v1988 = vadd.f32 %v1838, %v1986
          %v1989 = vadd.f32 %v1839, %v1987
          %s1990 = sld [smem:[#allocation2 + $0xbd]]
          %v1991 = vstv %s1990
          %v1992 = vmul.f32 %v1991, %v1838
          %v1993 = vmul.f32 %v1991, %v1839
          %s1994 = sld [smem:[#allocation2 + $0xbe]]
          %v1995 = vstv %s1994
          %v1996 = vmul.f32 %v1995, %v1894
          %v1997 = vmul.f32 %v1995, %v1895
          %v1998 = vadd.f32 %v1992, %v1996
          %v1999 = vadd.f32 %v1993, %v1997
          %s2000 = sld [smem:[#allocation2 + $0xbf]]
          %v2001 = vstv %s2000
          %v2002 = vmul.f32 %v2001, %v1950
          %v2003 = vmul.f32 %v2001, %v1951
          %v2004 = vadd.f32 %v1998, %v2002
          %v2005 = vadd.f32 %v1999, %v2003
          %s2006 = sld [smem:[#allocation2 + $0xdf]]
          %v2007 = vstv %s2006
          %v2008 = vadd.f32 %v2004, %v2007
          %v2009 = vadd.f32 %v2005, %v2007
          %v2010 = vmin.f32 %v2008, 0.0
          %v2011 = vmin.f32 %v2009, 0.0
          %v2012 = vmul.f32 %v2010, 1.442695
          %v2013 = vpow.pop %v2012
          %v2014 = vmul.f32 %v2011, 1.442695
          %v2015 = vpow.pop %v2014
          %v2016 = vsub.f32 %v2013, 1.0
          %v2017 = vsub.f32 %v2015, 1.0
          %v2018 = vmul.f32 %v2016, 1.7580993
          %v2019 = vmul.f32 %v2017, 1.7580993
          %vm2020 = vcmp.gt.f32.partialorder %v2008, 0.0
          %vm2021 = vcmp.gt.f32.partialorder %v2009, 0.0
          %v2022 = vmul.f32 %v2008, 1.050701
          %v2023 = vmul.f32 %v2009, 1.050701
          %v2024 = vsel %vm2020, %v2022, %v2018
          %v2025 = vsel %vm2021, %v2023, %v2019
          %v2026 = vadd.f32 %v1894, %v2024
          %v2027 = vadd.f32 %v1895, %v2025
          %s2028 = sld [smem:[#allocation2 + $0xc0]]
          %v2029 = vstv %s2028
          %v2030 = vmul.f32 %v2029, %v1838
          %v2031 = vmul.f32 %v2029, %v1839
          %s2032 = sld [smem:[#allocation2 + $0xc1]]
          %v2033 = vstv %s2032
          %v2034 = vmul.f32 %v2033, %v1894
          %v2035 = vmul.f32 %v2033, %v1895
          %v2036 = vadd.f32 %v2030, %v2034
          %v2037 = vadd.f32 %v2031, %v2035
          %s2038 = sld [smem:[#allocation2 + $0xc2]]
          %v2039 = vstv %s2038
          %v2040 = vmul.f32 %v2039, %v1950
          %v2041 = vmul.f32 %v2039, %v1951
          %v2042 = vadd.f32 %v2036, %v2040
          %v2043 = vadd.f32 %v2037, %v2041
          %s2044 = sld [smem:[#allocation2 + $0xe0]]
          %v2045 = vstv %s2044
          %v2046 = vadd.f32 %v2042, %v2045
          %v2047 = vadd.f32 %v2043, %v2045
          %v2048 = vmin.f32 %v2046, 0.0
          %v2049 = vmin.f32 %v2047, 0.0
          %v2050 = vmul.f32 %v2048, 1.442695
          %v2051 = vpow.pop %v2050
          %v2052 = vmul.f32 %v2049, 1.442695
          %v2053 = vpow.pop %v2052
          %v2054 = vsub.f32 %v2051, 1.0
          %v2055 = vsub.f32 %v2053, 1.0
          %v2056 = vmul.f32 %v2054, 1.7580993
          %v2057 = vmul.f32 %v2055, 1.7580993
          %vm2058 = vcmp.gt.f32.partialorder %v2046, 0.0
          %vm2059 = vcmp.gt.f32.partialorder %v2047, 0.0
          %v2060 = vmul.f32 %v2046, 1.050701
          %v2061 = vmul.f32 %v2047, 1.050701
          %v2062 = vsel %vm2058, %v2060, %v2056
          %v2063 = vsel %vm2059, %v2061, %v2057
          %v2064 = vadd.f32 %v1950, %v2062
          %v2065 = vadd.f32 %v1951, %v2063
          %s2066 = sld [smem:[#allocation2 + $0xc3]]
          %v2067 = vstv %s2066
          %v2068 = vmul.f32 %v2067, %v1988
          %v2069 = vmul.f32 %v2067, %v1989
          %s2070 = sld [smem:[#allocation2 + $0xc4]]
          %v2071 = vstv %s2070
          %v2072 = vmul.f32 %v2071, %v2026
          %v2073 = vmul.f32 %v2071, %v2027
          %v2074 = vadd.f32 %v2068, %v2072
          %v2075 = vadd.f32 %v2069, %v2073
          %s2076 = sld [smem:[#allocation2 + $0xc5]]
          %v2077 = vstv %s2076
          %v2078 = vmul.f32 %v2077, %v2064
          %v2079 = vmul.f32 %v2077, %v2065
          %v2080 = vadd.f32 %v2074, %v2078
          %v2081 = vadd.f32 %v2075, %v2079
          %s2082 = sld [smem:[#allocation2 + $0xe1]]
          %v2083 = vstv %s2082
          %v2084 = vadd.f32 %v2080, %v2083
          %v2085 = vadd.f32 %v2081, %v2083
          %v2086 = vmin.f32 %v2084, 0.0
          %v2087 = vmin.f32 %v2085, 0.0
          %v2088 = vmul.f32 %v2086, 1.442695
          %v2089 = vpow.pop %v2088
          %v2090 = vmul.f32 %v2087, 1.442695
          %v2091 = vpow.pop %v2090
          %v2092 = vsub.f32 %v2089, 1.0
          %v2093 = vsub.f32 %v2091, 1.0
          %v2094 = vmul.f32 %v2092, 1.7580993
          %v2095 = vmul.f32 %v2093, 1.7580993
          %vm2096 = vcmp.gt.f32.partialorder %v2084, 0.0
          %vm2097 = vcmp.gt.f32.partialorder %v2085, 0.0
          %v2098 = vmul.f32 %v2084, 1.050701
          %v2099 = vmul.f32 %v2085, 1.050701
          %v2100 = vsel %vm2096, %v2098, %v2094
          %v2101 = vsel %vm2097, %v2099, %v2095
          %v2102 = vadd.f32 %v1988, %v2100
          %v2103 = vadd.f32 %v1989, %v2101
          %s2104 = sld [smem:[#allocation2 + $0xc6]]
          %v2105 = vstv %s2104
          %v2106 = vmul.f32 %v2105, %v1988
          %v2107 = vmul.f32 %v2105, %v1989
          %s2108 = sld [smem:[#allocation2 + $0xc7]]
          %v2109 = vstv %s2108
          %v2110 = vmul.f32 %v2109, %v2026
          %v2111 = vmul.f32 %v2109, %v2027
          %v2112 = vadd.f32 %v2106, %v2110
          %v2113 = vadd.f32 %v2107, %v2111
          %s2114 = sld [smem:[#allocation2 + $0xc8]]
          %v2115 = vstv %s2114
          %v2116 = vmul.f32 %v2115, %v2064
          %v2117 = vmul.f32 %v2115, %v2065
          %v2118 = vadd.f32 %v2112, %v2116
          %v2119 = vadd.f32 %v2113, %v2117
          %s2120 = sld [smem:[#allocation2 + $0xe2]]
          %v2121 = vstv %s2120
          %v2122 = vadd.f32 %v2118, %v2121
          %v2123 = vadd.f32 %v2119, %v2121
          %v2124 = vmin.f32 %v2122, 0.0
          %v2125 = vmin.f32 %v2123, 0.0
          %v2126 = vmul.f32 %v2124, 1.442695
          %v2127 = vpow.pop %v2126
          %v2128 = vmul.f32 %v2125, 1.442695
          %v2129 = vpow.pop %v2128
          %v2130 = vsub.f32 %v2127, 1.0
          %v2131 = vsub.f32 %v2129, 1.0
          %v2132 = vmul.f32 %v2130, 1.7580993
          %v2133 = vmul.f32 %v2131, 1.7580993
          %vm2134 = vcmp.gt.f32.partialorder %v2122, 0.0
          %vm2135 = vcmp.gt.f32.partialorder %v2123, 0.0
          %v2136 = vmul.f32 %v2122, 1.050701
          %v2137 = vmul.f32 %v2123, 1.050701
          %v2138 = vsel %vm2134, %v2136, %v2132
          %v2139 = vsel %vm2135, %v2137, %v2133
          %v2140 = vadd.f32 %v2026, %v2138
          %v2141 = vadd.f32 %v2027, %v2139
          %s2142 = sld [smem:[#allocation2 + $0xc9]]
          %v2143 = vstv %s2142
          %v2144 = vmul.f32 %v2143, %v1988
          %v2145 = vmul.f32 %v2143, %v1989
          %s2146 = sld [smem:[#allocation2 + $0xca]]
          %v2147 = vstv %s2146
          %v2148 = vmul.f32 %v2147, %v2026
          %v2149 = vmul.f32 %v2147, %v2027
          %v2150 = vadd.f32 %v2144, %v2148
          %v2151 = vadd.f32 %v2145, %v2149
          %s2152 = sld [smem:[#allocation2 + $0xcb]]
          %v2153 = vstv %s2152
          %v2154 = vmul.f32 %v2153, %v2064
          %v2155 = vmul.f32 %v2153, %v2065
          %v2156 = vadd.f32 %v2150, %v2154
          %v2157 = vadd.f32 %v2151, %v2155
          %s2158 = sld [smem:[#allocation2 + $0xe3]]
          %v2159 = vstv %s2158
          %v2160 = vadd.f32 %v2156, %v2159
          %v2161 = vadd.f32 %v2157, %v2159
          %v2162 = vmin.f32 %v2160, 0.0
          %v2163 = vmin.f32 %v2161, 0.0
          %v2164 = vmul.f32 %v2162, 1.442695
          %v2165 = vpow.pop %v2164
          %v2166 = vmul.f32 %v2163, 1.442695
          %v2167 = vpow.pop %v2166
          %v2168 = vsub.f32 %v2165, 1.0
          %v2169 = vsub.f32 %v2167, 1.0
          %v2170 = vmul.f32 %v2168, 1.7580993
          %v2171 = vmul.f32 %v2169, 1.7580993
          %vm2172 = vcmp.gt.f32.partialorder %v2160, 0.0
          %vm2173 = vcmp.gt.f32.partialorder %v2161, 0.0
          %v2174 = vmul.f32 %v2160, 1.050701
          %v2175 = vmul.f32 %v2161, 1.050701
          %v2176 = vsel %vm2172, %v2174, %v2170
          %v2177 = vsel %vm2173, %v2175, %v2171
          %v2178 = vadd.f32 %v2064, %v2176
          %v2179 = vadd.f32 %v2065, %v2177
          %s2180 = sld [smem:[#allocation2 + $0xe4]]
          %v2181 = vstv %s2180
          %v2182 = vmul.f32 %v2181, %v2102
          %v2183 = vmul.f32 %v2181, %v2103
          %s2184 = sld [smem:[#allocation2 + $0xe5]]
          %v2185 = vstv %s2184
          %v2186 = vmul.f32 %v2185, %v2140
          %v2187 = vmul.f32 %v2185, %v2141
          %v2188 = vadd.f32 %v2182, %v2186
          %v2189 = vadd.f32 %v2183, %v2187
          %s2190 = sld [smem:[#allocation2 + $0xe6]]
          %v2191 = vstv %s2190
          %v2192 = vmul.f32 %v2191, %v2178
          %v2193 = vmul.f32 %v2191, %v2179
          %v2194 = vadd.f32 %v2188, %v2192
          %v2195 = vadd.f32 %v2189, %v2193
          %s2196 = sld [smem:[#allocation2 + $0xe7]]
          %v2197 = vstv %s2196
          %v2198 = vadd.f32 %v2194, %v2197
          %v2199 = vadd.f32 %v2195, %v2197
          %s2200 = scalar_lea.vmem %s202, %s211 [#allocation7]
          %2201 = vst [vmem:[%s2200] sm:$0xff] %v2198
          %2202 = vst [vmem:[%s2200 + $0x8] sm:$0xff] %v2199
        $region41: #{tpu_custom_call.1} parent=27 // loop_footer
          %s210 = sadd.s32 1, %s206
        $region42: #{tpu_custom_call.1} parent=27 // loop_footer_branch
          %205 = sbr.rel target = $region38
        $region43: #{tpu_custom_call.1} parent=27 // loop_exit
          _
        %s2203 = sand.u32 %s75, 1
        %s2204 = scalar_lea.sflag [#allocation4], %s2203
        %s2205 = sand.u32 %s75, 1
        %s2206 = smul.addr %s2205, 32
        %s2207 = scalar_lea.vmem [#allocation7], %s2206
        // Predicated region
        $region44: #{tpu_custom_call.1} parent=27 // pred_check
          %p2208 = pneg %p85
        $region45: #{tpu_custom_call.1} parent=27 // pred_check_branch
          %2210 = sbr.rel (%p2208) target = $region47
        $region46: #{tpu_custom_call.1} parent=27 // pred_region
          %s2211 = smul.u32 4, %s20
          %2213 = vsyncadd %s2204, 0
          %s2214 = smul.addr %s2211, 8
          %s2215 = scalar_lea.hbm %s2, %s2214
          %s2216 = sshll.u32 %s2207, 4
          %s2217 = int_to_ptr.vmem [resolvable:$true] %s2216
          %s2218 = sshll.u32 %s2215, 4
          %s2219 = int_to_ptr.hbm [resolvable:$true] %s2218
          %2224 = dma.vmem_to_hbm [thread:$0]  %s2217, 512, %s2219, %s2204, 128, 128, 8
        $region47: #{tpu_custom_call.1} parent=27 // pred_fallthru
          _
      $region28: #{tpu_custom_call.1} parent=5 // pred_fallthru
        _
      %p2225 = scmp.le.s32.totalorder 2, %s15
      // Predicated region
      $region48: #{tpu_custom_call.1} parent=5 // pred_check
        %p2226 = pneg %p2225
      $region49: #{tpu_custom_call.1} parent=5 // pred_check_branch
        %2228 = sbr.rel (%p2226) target = $region51
      $region50: #{tpu_custom_call.1} parent=5 // pred_region
        %s2229 = ssub.s32 %s15, 2
        // Predicated region
        $region52: #{tpu_custom_call.1} parent=50 // pred_check
          %p2230 = pneg %p91
        $region53: #{tpu_custom_call.1} parent=50 // pred_check_branch
          %2232 = sbr.rel (%p2230) target = $region55
        $region54: #{tpu_custom_call.1} parent=50 // pred_region
          %s2233 = sand.u32 %s76, 1
          %s2234 = scalar_lea.sflag [#allocation4], %s2233
          %s2235 = sand.u32 %s76, 1
          %s2236 = smul.addr %s2235, 32
          %s2237 = scalar_lea.vmem [#allocation7], %s2236
          %2239 = dma.done %s2234, 512
        $region55: #{tpu_custom_call.1} parent=50 // pred_fallthru
          _
      $region51: #{tpu_custom_call.1} parent=5 // pred_fallthru
        _
    $region6: #{tpu_custom_call.1} parent=1 // loop_footer
      %s19 = sadd.s32 1, %s15
    $region7: #{tpu_custom_call.1} parent=1 // loop_footer_branch
      %14 = sbr.rel target = $region3
    $region8: #{tpu_custom_call.1} parent=1 // loop_exit
      _
    %2240 = vsyncpa [#allocation3], 1
    %s2241 = scalar_lea.sflag [#allocation3], 1
    %2242 = vsyncpa %s2241, 1
    %2243 = vsyncpa [#allocation4], 1
    %s2244 = scalar_lea.sflag [#allocation4], 1
    %2245 = vsyncpa %s2244, 1
    %2246 = vsyncpa [#allocation5], 1
    %s2247 = scalar_lea.sflag [#allocation5], 1
    %2248 = vsyncpa %s2247, 1

</llo_original>
